<compile_context>
chip_gen: v6e
topology: v6e:2x2x1
jax: 0.10.0
libtpu: 0.0.40
codegen_flags: <defaults>
</compile_context>

<pallas_src>
import jax
import jax.numpy as jnp
import numpy as np
from jax.experimental import pallas as pl
from jax.experimental.pallas import tpu as pltpu

BN_EPS = 1e-5
K_NEIGHBORS = 9          # Grapher default kernel_size
LANE = 128


def _round_up(v, m):
    return ((v + m - 1) // m) * m


def grapher_kernel(x_ref, w1_ref, c1_ref, w2a_ref, w2b_ref, b2_ref, w3_ref, c3_ref, o_ref):
    # x_ref : (1, N, CP)   original input tokens, channels zero-padded to CP (multiple of 128)
    # w1/c1 : fc1 1x1 conv with eval-BN folded in        (CP, CP), (1, CP)
    # w2a/b : BasicConv grouped 1x1 conv, split into the fc1-feature part and the
    #         max-relative part (interleave folded into the weights)   (CP, C2P) each
    # b2    : BasicConv bias                              (1, C2P)
    # w3/c3 : fc2 1x1 conv with eval-BN folded in         (C2P, CP), (1, CP)
    # o_ref : (1, N, CP)
    x = x_ref[0]                                           # (N, CP)
    n = x.shape[0]

    # ---- fc1: 1x1 conv + BatchNorm (eval), folded ----
    y1 = jnp.dot(x, w1_ref[...], preferred_element_type=jnp.float32) + c1_ref[...]

    # ---- DenseDilatedKnnGraph: L2 normalize over channels, pairwise sq. distances ----
    ssq = jnp.sum(y1 * y1, axis=-1, keepdims=True)
    g = y1 * jax.lax.rsqrt(jnp.maximum(ssq, 1e-24))        # == y1 / max(||y1||, 1e-12)
    inner = jax.lax.dot_general(g, g, (((1,), (1,)), ((), ())),
                                preferred_element_type=jnp.float32)      # (N, N) = g @ g.T
    rowsq = jnp.sum(g * g, axis=-1, keepdims=True)          # (N, 1)
    ii = jax.lax.broadcasted_iota(jnp.int32, (n, n), 0)
    jj = jax.lax.broadcasted_iota(jnp.int32, (n, n), 1)
    colsq = jnp.sum(jnp.where(ii == jj, inner, 0.0), axis=0, keepdims=True)  # diag(inner) as (1, N)
    dist = rowsq + colsq - 2.0 * inner                      # (N, N)

    # ---- MRConv: max over the K nearest neighbors of (y1_j - y1_i) ----
    # K rounds: select the current nearest per row, gather its features with a one-hot
    # MXU matmul, keep a running max.  max_j (y1_j - y1_i) == (max_j y1_j) - y1_i.
    # (Exact distance ties are averaged -- a measure-zero deviation from torch.topk.)
    work = dist
    runmax = jnp.full_like(y1, -1e30)
    for _ in range(K_NEIGHBORS):
        rowmin = jnp.min(work, axis=-1, keepdims=True)      # (N, 1)
        hit = work <= rowmin
        sel = hit.astype(jnp.float32)
        sel = sel / jnp.maximum(jnp.sum(sel, axis=-1, keepdims=True), 1.0)
        gathered = jnp.dot(sel, y1, preferred_element_type=jnp.float32)   # (N, CP) on MXU
        runmax = jnp.maximum(runmax, gathered)
        work = jnp.where(hit, 1e30, work)                   # remove selected entries
    xj = runmax - y1

    # ---- BasicConv: grouped (groups=4) 1x1 conv folded to dense + bias + ReLU ----
    h = (jnp.dot(y1, w2a_ref[...], preferred_element_type=jnp.float32)
         + jnp.dot(xj, w2b_ref[...], preferred_element_type=jnp.float32)
         + b2_ref[...])
    h = jnp.maximum(h, 0.0)

    # ---- fc2: 1x1 conv + BatchNorm (eval), folded; then residual (DropPath == identity) ----
    z = jnp.dot(h, w3_ref[...], preferred_element_type=jnp.float32) + c3_ref[...]
    o_ref[0] = (z + x).astype(o_ref.dtype)


def grapher_forward(x, params):
    """x: (B, C, *spatial)  (NCHW for Conv2d or NCDHW for Conv3d -- all convs are 1x1)."""
    B, C = x.shape[0], x.shape[1]
    spatial = x.shape[2:]
    N = int(np.prod(spatial))
    C2 = 2 * C
    CP = _round_up(C, LANE)        # lane-dense channel padding
    C2P = _round_up(C2, LANE)

    f32 = jnp.float32

    # ---- fold conv bias + eval BatchNorm into the 1x1 weights (wrapper side, tiny) ----
    s1 = params["bn1_gamma"] / jnp.sqrt(params["bn1_var"] + BN_EPS)
    w1 = params["fc1_w"].T * s1[None, :]                              # (C_in, C_out)
    c1 = (params["fc1_b"] - params["bn1_mean"]) * s1 + params["bn1_beta"]

    # grouped (groups=4) 1x1 conv -> dense matrix in the interleaved [x, xj] channel basis,
    # then split into the x-part / xj-part so the kernel never materializes the interleave.
    gs = C2 // 4
    wg = params["gconv_w"]                                            # (2C, 2C//4) = (out, in/grp)
    wd = jnp.zeros((C2, C2), f32)                                     # (in_interleaved, out)
    for gidx in range(4):
        wd = wd.at[gidx * gs:(gidx + 1) * gs, gidx * gs:(gidx + 1) * gs].set(
            wg[gidx * gs:(gidx + 1) * gs, :].T)
    w2a = wd[0::2, :]            # even interleaved inputs -> fc1 features
    w2b = wd[1::2, :]            # odd  interleaved inputs -> max-relative features
    b2 = params["gconv_b"]

    s2 = params["bn2_gamma"] / jnp.sqrt(params["bn2_var"] + BN_EPS)
    w3 = params["fc2_w"].T * s2[None, :]
    c3 = (params["fc2_b"] - params["bn2_mean"]) * s2 + params["bn2_beta"]

    def pad2(a, r, c):
        return jnp.zeros((r, c), f32).at[:a.shape[0], :a.shape[1]].set(a.astype(f32))

    def pad_row(v, c):
        return jnp.zeros((1, c), f32).at[0, :v.shape[0]].set(v.astype(f32))

    # ---- lane-dense token-major layout: (B, N, CP) ----
    x_tok = jnp.transpose(x.reshape(B, C, N), (0, 2, 1)).astype(f32)
    x_pad = jnp.pad(x_tok, ((0, 0), (0, 0), (0, CP - C)))

    w1_p, c1_p = pad2(w1, CP, CP), pad_row(c1, CP)
    w2a_p, w2b_p, b2_p = pad2(w2a, CP, C2P), pad2(w2b, CP, C2P), pad_row(b2, C2P)
    w3_p, c3_p = pad2(w3, C2P, CP), pad_row(c3, CP)

    flops = 2 * B * N * (CP * CP + N * CP * (1 + K_NEIGHBORS) + 2 * CP * C2P + C2P * CP)
    bytes_accessed = 4 * (2 * B * N * CP + CP * CP + 2 * CP * C2P + C2P * CP + 2 * CP + C2P)
    cost = pl.CostEstimate(flops=flops, transcendentals=B * N, bytes_accessed=bytes_accessed)

    def full_spec(shape):
        return pl.BlockSpec(shape, lambda b: (0, 0))

    out = pl.pallas_call(
        grapher_kernel,
        out_shape=jax.ShapeDtypeStruct((B, N, CP), f32),
        grid=(B,),
        in_specs=[
            pl.BlockSpec((1, N, CP), lambda b: (b, 0, 0)),
            full_spec((CP, CP)), full_spec((1, CP)),
            full_spec((CP, C2P)), full_spec((CP, C2P)), full_spec((1, C2P)),
            full_spec((C2P, CP)), full_spec((1, CP)),
        ],
        out_specs=pl.BlockSpec((1, N, CP), lambda b: (b, 0, 0)),
        compiler_params=pltpu.CompilerParams(
            dimension_semantics=("parallel",),
            vmem_limit_bytes=32 * 1024 * 1024),
        cost_estimate=cost,
    )(x_pad, w1_p, c1_p, w2a_p, w2b_p, b2_p, w3_p, c3_p)

    out = out[:, :, :C]                                          # drop channel padding
    return jnp.transpose(out, (0, 2, 1)).reshape(x.shape)


def grapher_reference(x, params):
    """Plain-JAX mirror of the PyTorch Grapher eval forward (1x1 convs == channel matmuls)."""
    B, C = x.shape[0], x.shape[1]
    N = int(np.prod(x.shape[2:]))
    x_f = x.reshape(B, C, N).astype(jnp.float32)

    # fc1 = Conv1x1 + BatchNorm (eval)
    y = jnp.einsum("oc,bcn->bon", params["fc1_w"], x_f) + params["fc1_b"][None, :, None]
    y = ((y - params["bn1_mean"][None, :, None])
         / jnp.sqrt(params["bn1_var"][None, :, None] + BN_EPS)
         * params["bn1_gamma"][None, :, None] + params["bn1_beta"][None, :, None])

    # DenseDilatedKnnGraph
    g = y / jnp.maximum(jnp.sqrt(jnp.sum(y * y, axis=1, keepdims=True)), 1e-12)
    gt = jnp.transpose(g, (0, 2, 1))                             # (B, N, C)
    inner = jnp.einsum("bic,bjc->bij", gt, gt)
    sq = jnp.sum(gt * gt, axis=-1, keepdims=True)
    dist = sq - 2.0 * inner + jnp.transpose(sq, (0, 2, 1))
    _, nn_idx = jax.lax.top_k(-dist, K_NEIGHBORS)                # (B, N, k)

    # MRConv: max-relative feature + interleaved channel concat
    feat = jnp.transpose(y, (0, 2, 1))                           # (B, N, C)
    x_j = jax.vmap(lambda f, idx: f[idx])(feat, nn_idx)          # (B, N, k, C)
    xjmax = jnp.max(x_j - feat[:, :, None, :], axis=2)           # (B, N, C)
    cat = jnp.stack([feat, xjmax], axis=-1).reshape(B, N, 2 * C)

    # BasicConv: grouped 1x1 conv (groups=4) + bias + ReLU
    gs = (2 * C) // 4
    wg = params["gconv_w"].reshape(4, gs, gs)                    # (group, out_local, in_local)
    h = jnp.einsum("bngi,goi->bngo", cat.reshape(B, N, 4, gs), wg).reshape(B, N, 2 * C)
    h = jnp.maximum(h + params["gconv_b"][None, None, :], 0.0)

    # fc2 = Conv1x1 + BatchNorm (eval)
    z = jnp.einsum("bni,oi->bno", h, params["fc2_w"]) + params["fc2_b"][None, None, :]
    z = ((z - params["bn2_mean"]) / jnp.sqrt(params["bn2_var"] + BN_EPS)
         * params["bn2_gamma"] + params["bn2_beta"])

    return jnp.transpose(z, (0, 2, 1)).reshape(x.shape) + x


if __name__ == "__main__":
    # Small deterministic setup matching the module defaults (conv_op=nn.Conv3d):
    # batch=2, channels=16, spatial 4x4x4 -> N=64 tokens, k=9 neighbors.
    B, C = 2, 16
    D = H = W = 4
    key = jax.random.PRNGKey(0)
    ks = jax.random.split(key, 12)

    x = jax.random.normal(ks[0], (B, C, D, H, W), dtype=jnp.float32)

    params = {
        "fc1_w": 0.2 * jax.random.normal(ks[1], (C, C), jnp.float32),
        "fc1_b": 0.1 * jax.random.normal(ks[2], (C,), jnp.float32),
        "bn1_gamma": 1.0 + 0.1 * jax.random.normal(ks[3], (C,), jnp.float32),
        "bn1_beta": 0.1 * jax.random.normal(ks[4], (C,), jnp.float32),
        "bn1_mean": 0.1 * jax.random.normal(ks[5], (C,), jnp.float32),
        "bn1_var": jnp.abs(1.0 + 0.1 * jax.random.normal(ks[6], (C,), jnp.float32)),
        "gconv_w": 0.2 * jax.random.normal(ks[7], (2 * C, (2 * C) // 4), jnp.float32),
        "gconv_b": 0.1 * jax.random.normal(ks[8], (2 * C,), jnp.float32),
        "fc2_w": 0.2 * jax.random.normal(ks[9], (C, 2 * C), jnp.float32),
        "fc2_b": 0.1 * jax.random.normal(ks[10], (C,), jnp.float32),
        "bn2_gamma": 1.0 + 0.1 * jax.random.normal(ks[11], (C,), jnp.float32),
        "bn2_beta": jnp.zeros((C,), jnp.float32),
        "bn2_mean": jnp.zeros((C,), jnp.float32),
        "bn2_var": jnp.ones((C,), jnp.float32),
    }

    out = jax.block_until_ready(jax.jit(grapher_forward)(x, params))
    ref = jax.block_until_ready(jax.jit(grapher_reference)(x, params))

    np.testing.assert_allclose(np.asarray(out), np.asarray(ref), rtol=1e-3, atol=1e-3)
    print("KERNEL_OK")
</pallas_src>

<mosaic_0001>
module attributes {stable_mosaic.version = 11 : i64} {
  func.func @grapher_kernel(%arg0: i32, %arg1: memref<1x64x128xf32, #tpu.memory_space<vmem>>, %arg2: memref<128x128xf32, #tpu.memory_space<vmem>>, %arg3: memref<1x128xf32, #tpu.memory_space<vmem>>, %arg4: memref<128x128xf32, #tpu.memory_space<vmem>>, %arg5: memref<128x128xf32, #tpu.memory_space<vmem>>, %arg6: memref<1x128xf32, #tpu.memory_space<vmem>>, %arg7: memref<128x128xf32, #tpu.memory_space<vmem>>, %arg8: memref<1x128xf32, #tpu.memory_space<vmem>>, %arg9: memref<1x64x128xf32, #tpu.memory_space<vmem>>) attributes {dimension_semantics = [#tpu.dimension_semantics<parallel>], iteration_bounds = array<i64: 2>, scalar_prefetch = 0 : i64, scratch_operands = 0 : i64, tpu.core_type = #tpu.core_type<tc>, window_params = [{transform_indices = @transform_0, window_bounds = array<i64: 1, 64, 128>}, {pipeline_mode = #tpu.pipeline_mode<synchronous>, transform_indices = @transform_1, window_bounds = array<i64: 128, 128>}, {pipeline_mode = #tpu.pipeline_mode<synchronous>, transform_indices = @transform_2, window_bounds = array<i64: 1, 128>}, {pipeline_mode = #tpu.pipeline_mode<synchronous>, transform_indices = @transform_3, window_bounds = array<i64: 128, 128>}, {pipeline_mode = #tpu.pipeline_mode<synchronous>, transform_indices = @transform_4, window_bounds = array<i64: 128, 128>}, {pipeline_mode = #tpu.pipeline_mode<synchronous>, transform_indices = @transform_5, window_bounds = array<i64: 1, 128>}, {pipeline_mode = #tpu.pipeline_mode<synchronous>, transform_indices = @transform_6, window_bounds = array<i64: 128, 128>}, {pipeline_mode = #tpu.pipeline_mode<synchronous>, transform_indices = @transform_7, window_bounds = array<i64: 1, 128>}, {transform_indices = @transform_8, window_bounds = array<i64: 1, 64, 128>}]} {
    %c0 = arith.constant 0 : index
    %c0_0 = arith.constant 0 : index
    %c0_1 = arith.constant 0 : index
    %0 = vector.load %arg1[%c0, %c0_0, %c0_1] : memref<1x64x128xf32, #tpu.memory_space<vmem>>, vector<1x64x128xf32>
    %1 = vector.shape_cast %0 : vector<1x64x128xf32> to vector<64x128xf32>
    %c0_2 = arith.constant 0 : index
    %c0_3 = arith.constant 0 : index
    %2 = vector.load %arg2[%c0_2, %c0_3] : memref<128x128xf32, #tpu.memory_space<vmem>>, vector<128x128xf32>
    %cst = arith.constant dense<0.000000e+00> : vector<64x128xf32>
    %3 = tpu.matmul %1, %2, %cst {dimension_numbers = #tpu.dot_dimension_numbers<[1], [0], [0], [1], [0, 0, 1, 1], [], []>} : vector<64x128xf32>, vector<128x128xf32>, vector<64x128xf32> -> vector<64x128xf32>
    %c0_4 = arith.constant 0 : index
    %c0_5 = arith.constant 0 : index
    %4 = vector.load %arg3[%c0_4, %c0_5] : memref<1x128xf32, #tpu.memory_space<vmem>>, vector<1x128xf32>
    %5 = vector.broadcast %4 : vector<1x128xf32> to vector<64x128xf32>
    %6 = arith.addf %3, %5 : vector<64x128xf32>
    %7 = arith.mulf %6, %6 : vector<64x128xf32>
    %cst_6 = arith.constant dense<0.000000e+00> : vector<64xf32>
    %8 = vector.multi_reduction <add>, %7, %cst_6 [1] : vector<64x128xf32> to vector<64xf32>
    %9 = vector.shape_cast %8 : vector<64xf32> to vector<64x1xf32>
    %cst_7 = arith.constant 1.000000e-24 : f32
    %10 = vector.broadcast %cst_7 : f32 to vector<64x1xf32>
    %11 = arith.maximumf %9, %10 : vector<64x1xf32>
    %12 = math.rsqrt %11 : vector<64x1xf32>
    %13 = vector.broadcast %12 : vector<64x1xf32> to vector<64x128xf32>
    %14 = arith.mulf %6, %13 : vector<64x128xf32>
    %cst_8 = arith.constant dense<0.000000e+00> : vector<64x64xf32>
    %15 = tpu.matmul %14, %14, %cst_8 {dimension_numbers = #tpu.dot_dimension_numbers<[1], [1], [0], [0], [0, 0, 1, 0], [], []>} : vector<64x128xf32>, vector<64x128xf32>, vector<64x64xf32> -> vector<64x64xf32>
    %16 = arith.mulf %14, %14 : vector<64x128xf32>
    %cst_9 = arith.constant dense<0.000000e+00> : vector<64xf32>
    %17 = vector.multi_reduction <add>, %16, %cst_9 [1] : vector<64x128xf32> to vector<64xf32>
    %18 = vector.shape_cast %17 : vector<64xf32> to vector<64x1xf32>
    %19 = tpu.iota {dimensions = array<i32: 0>} : vector<64x64xi32>
    %20 = tpu.iota {dimensions = array<i32: 1>} : vector<64x64xi32>
    %21 = arith.cmpi eq, %19, %20 : vector<64x64xi32>
    %cst_10 = arith.constant 0.000000e+00 : f32
    %22 = vector.broadcast %cst_10 : f32 to vector<64x64xf32>
    %23 = arith.select %21, %15, %22 : vector<64x64xi1>, vector<64x64xf32>
    %cst_11 = arith.constant dense<0.000000e+00> : vector<64xf32>
    %24 = vector.multi_reduction <add>, %23, %cst_11 [0] : vector<64x64xf32> to vector<64xf32>
    %25 = vector.shape_cast %24 : vector<64xf32> to vector<1x64xf32>
    %26 = vector.broadcast %18 : vector<64x1xf32> to vector<64x64xf32>
    %27 = vector.broadcast %25 : vector<1x64xf32> to vector<64x64xf32>
    %28 = arith.addf %26, %27 : vector<64x64xf32>
    %cst_12 = arith.constant 2.000000e+00 : f32
    %29 = vector.broadcast %cst_12 : f32 to vector<64x64xf32>
    %30 = arith.mulf %29, %15 : vector<64x64xf32>
    %31 = arith.subf %28, %30 : vector<64x64xf32>
    %cst_13 = arith.constant -1.000000e+30 : f32
    %32 = vector.broadcast %cst_13 : f32 to vector<64x128xf32>
    %cst_14 = arith.constant dense<0x7F800000> : vector<64xf32>
    %33 = vector.multi_reduction <minimumf>, %31, %cst_14 [1] : vector<64x64xf32> to vector<64xf32>
    %34 = vector.shape_cast %33 : vector<64xf32> to vector<64x1xf32>
    %35 = vector.broadcast %34 : vector<64x1xf32> to vector<64x64xf32>
    %36 = arith.cmpf ole, %31, %35 : vector<64x64xf32>
    %37 = arith.extui %36 : vector<64x64xi1> to vector<64x64xi32>
    %38 = arith.sitofp %37 : vector<64x64xi32> to vector<64x64xf32>
    %cst_15 = arith.constant dense<0.000000e+00> : vector<64xf32>
    %39 = vector.multi_reduction <add>, %38, %cst_15 [1] : vector<64x64xf32> to vector<64xf32>
    %40 = vector.shape_cast %39 : vector<64xf32> to vector<64x1xf32>
    %cst_16 = arith.constant 1.000000e+00 : f32
    %41 = vector.broadcast %cst_16 : f32 to vector<64x1xf32>
    %42 = arith.maximumf %40, %41 : vector<64x1xf32>
    %43 = vector.broadcast %42 : vector<64x1xf32> to vector<64x64xf32>
    %44 = arith.divf %38, %43 : vector<64x64xf32>
    %cst_17 = arith.constant dense<0.000000e+00> : vector<64x128xf32>
    %45 = tpu.matmul %44, %6, %cst_17 {dimension_numbers = #tpu.dot_dimension_numbers<[1], [0], [0], [1], [0, 0, 1, 1], [], []>} : vector<64x64xf32>, vector<64x128xf32>, vector<64x128xf32> -> vector<64x128xf32>
    %46 = arith.maximumf %32, %45 : vector<64x128xf32>
    %cst_18 = arith.constant 1.000000e+30 : f32
    %47 = vector.broadcast %cst_18 : f32 to vector<64x64xf32>
    %48 = arith.select %36, %47, %31 : vector<64x64xi1>, vector<64x64xf32>
    %cst_19 = arith.constant dense<0x7F800000> : vector<64xf32>
    %49 = vector.multi_reduction <minimumf>, %48, %cst_19 [1] : vector<64x64xf32> to vector<64xf32>
    %50 = vector.shape_cast %49 : vector<64xf32> to vector<64x1xf32>
    %51 = vector.broadcast %50 : vector<64x1xf32> to vector<64x64xf32>
    %52 = arith.cmpf ole, %48, %51 : vector<64x64xf32>
    %53 = arith.extui %52 : vector<64x64xi1> to vector<64x64xi32>
    %54 = arith.sitofp %53 : vector<64x64xi32> to vector<64x64xf32>
    %cst_20 = arith.constant dense<0.000000e+00> : vector<64xf32>
    %55 = vector.multi_reduction <add>, %54, %cst_20 [1] : vector<64x64xf32> to vector<64xf32>
    %56 = vector.shape_cast %55 : vector<64xf32> to vector<64x1xf32>
    %cst_21 = arith.constant 1.000000e+00 : f32
    %57 = vector.broadcast %cst_21 : f32 to vector<64x1xf32>
    %58 = arith.maximumf %56, %57 : vector<64x1xf32>
    %59 = vector.broadcast %58 : vector<64x1xf32> to vector<64x64xf32>
    %60 = arith.divf %54, %59 : vector<64x64xf32>
    %cst_22 = arith.constant dense<0.000000e+00> : vector<64x128xf32>
    %61 = tpu.matmul %60, %6, %cst_22 {dimension_numbers = #tpu.dot_dimension_numbers<[1], [0], [0], [1], [0, 0, 1, 1], [], []>} : vector<64x64xf32>, vector<64x128xf32>, vector<64x128xf32> -> vector<64x128xf32>
    %62 = arith.maximumf %46, %61 : vector<64x128xf32>
    %cst_23 = arith.constant 1.000000e+30 : f32
    %63 = vector.broadcast %cst_23 : f32 to vector<64x64xf32>
    %64 = arith.select %52, %63, %48 : vector<64x64xi1>, vector<64x64xf32>
    %cst_24 = arith.constant dense<0x7F800000> : vector<64xf32>
    %65 = vector.multi_reduction <minimumf>, %64, %cst_24 [1] : vector<64x64xf32> to vector<64xf32>
    %66 = vector.shape_cast %65 : vector<64xf32> to vector<64x1xf32>
    %67 = vector.broadcast %66 : vector<64x1xf32> to vector<64x64xf32>
    %68 = arith.cmpf ole, %64, %67 : vector<64x64xf32>
    %69 = arith.extui %68 : vector<64x64xi1> to vector<64x64xi32>
    %70 = arith.sitofp %69 : vector<64x64xi32> to vector<64x64xf32>
    %cst_25 = arith.constant dense<0.000000e+00> : vector<64xf32>
    %71 = vector.multi_reduction <add>, %70, %cst_25 [1] : vector<64x64xf32> to vector<64xf32>
    %72 = vector.shape_cast %71 : vector<64xf32> to vector<64x1xf32>
    %cst_26 = arith.constant 1.000000e+00 : f32
    %73 = vector.broadcast %cst_26 : f32 to vector<64x1xf32>
    %74 = arith.maximumf %72, %73 : vector<64x1xf32>
    %75 = vector.broadcast %74 : vector<64x1xf32> to vector<64x64xf32>
    %76 = arith.divf %70, %75 : vector<64x64xf32>
    %cst_27 = arith.constant dense<0.000000e+00> : vector<64x128xf32>
    %77 = tpu.matmul %76, %6, %cst_27 {dimension_numbers = #tpu.dot_dimension_numbers<[1], [0], [0], [1], [0, 0, 1, 1], [], []>} : vector<64x64xf32>, vector<64x128xf32>, vector<64x128xf32> -> vector<64x128xf32>
    %78 = arith.maximumf %62, %77 : vector<64x128xf32>
    %cst_28 = arith.constant 1.000000e+30 : f32
    %79 = vector.broadcast %cst_28 : f32 to vector<64x64xf32>
    %80 = arith.select %68, %79, %64 : vector<64x64xi1>, vector<64x64xf32>
    %cst_29 = arith.constant dense<0x7F800000> : vector<64xf32>
    %81 = vector.multi_reduction <minimumf>, %80, %cst_29 [1] : vector<64x64xf32> to vector<64xf32>
    %82 = vector.shape_cast %81 : vector<64xf32> to vector<64x1xf32>
    %83 = vector.broadcast %82 : vector<64x1xf32> to vector<64x64xf32>
    %84 = arith.cmpf ole, %80, %83 : vector<64x64xf32>
    %85 = arith.extui %84 : vector<64x64xi1> to vector<64x64xi32>
    %86 = arith.sitofp %85 : vector<64x64xi32> to vector<64x64xf32>
    %cst_30 = arith.constant dense<0.000000e+00> : vector<64xf32>
    %87 = vector.multi_reduction <add>, %86, %cst_30 [1] : vector<64x64xf32> to vector<64xf32>
    %88 = vector.shape_cast %87 : vector<64xf32> to vector<64x1xf32>
    %cst_31 = arith.constant 1.000000e+00 : f32
    %89 = vector.broadcast %cst_31 : f32 to vector<64x1xf32>
    %90 = arith.maximumf %88, %89 : vector<64x1xf32>
    %91 = vector.broadcast %90 : vector<64x1xf32> to vector<64x64xf32>
    %92 = arith.divf %86, %91 : vector<64x64xf32>
    %cst_32 = arith.constant dense<0.000000e+00> : vector<64x128xf32>
    %93 = tpu.matmul %92, %6, %cst_32 {dimension_numbers = #tpu.dot_dimension_numbers<[1], [0], [0], [1], [0, 0, 1, 1], [], []>} : vector<64x64xf32>, vector<64x128xf32>, vector<64x128xf32> -> vector<64x128xf32>
    %94 = arith.maximumf %78, %93 : vector<64x128xf32>
    %cst_33 = arith.constant 1.000000e+30 : f32
    %95 = vector.broadcast %cst_33 : f32 to vector<64x64xf32>
    %96 = arith.select %84, %95, %80 : vector<64x64xi1>, vector<64x64xf32>
    %cst_34 = arith.constant dense<0x7F800000> : vector<64xf32>
    %97 = vector.multi_reduction <minimumf>, %96, %cst_34 [1] : vector<64x64xf32> to vector<64xf32>
    %98 = vector.shape_cast %97 : vector<64xf32> to vector<64x1xf32>
    %99 = vector.broadcast %98 : vector<64x1xf32> to vector<64x64xf32>
    %100 = arith.cmpf ole, %96, %99 : vector<64x64xf32>
    %101 = arith.extui %100 : vector<64x64xi1> to vector<64x64xi32>
    %102 = arith.sitofp %101 : vector<64x64xi32> to vector<64x64xf32>
    %cst_35 = arith.constant dense<0.000000e+00> : vector<64xf32>
    %103 = vector.multi_reduction <add>, %102, %cst_35 [1] : vector<64x64xf32> to vector<64xf32>
    %104 = vector.shape_cast %103 : vector<64xf32> to vector<64x1xf32>
    %cst_36 = arith.constant 1.000000e+00 : f32
    %105 = vector.broadcast %cst_36 : f32 to vector<64x1xf32>
    %106 = arith.maximumf %104, %105 : vector<64x1xf32>
    %107 = vector.broadcast %106 : vector<64x1xf32> to vector<64x64xf32>
    %108 = arith.divf %102, %107 : vector<64x64xf32>
    %cst_37 = arith.constant dense<0.000000e+00> : vector<64x128xf32>
    %109 = tpu.matmul %108, %6, %cst_37 {dimension_numbers = #tpu.dot_dimension_numbers<[1], [0], [0], [1], [0, 0, 1, 1], [], []>} : vector<64x64xf32>, vector<64x128xf32>, vector<64x128xf32> -> vector<64x128xf32>
    %110 = arith.maximumf %94, %109 : vector<64x128xf32>
    %cst_38 = arith.constant 1.000000e+30 : f32
    %111 = vector.broadcast %cst_38 : f32 to vector<64x64xf32>
    %112 = arith.select %100, %111, %96 : vector<64x64xi1>, vector<64x64xf32>
    %cst_39 = arith.constant dense<0x7F800000> : vector<64xf32>
    %113 = vector.multi_reduction <minimumf>, %112, %cst_39 [1] : vector<64x64xf32> to vector<64xf32>
    %114 = vector.shape_cast %113 : vector<64xf32> to vector<64x1xf32>
    %115 = vector.broadcast %114 : vector<64x1xf32> to vector<64x64xf32>
    %116 = arith.cmpf ole, %112, %115 : vector<64x64xf32>
    %117 = arith.extui %116 : vector<64x64xi1> to vector<64x64xi32>
    %118 = arith.sitofp %117 : vector<64x64xi32> to vector<64x64xf32>
    %cst_40 = arith.constant dense<0.000000e+00> : vector<64xf32>
    %119 = vector.multi_reduction <add>, %118, %cst_40 [1] : vector<64x64xf32> to vector<64xf32>
    %120 = vector.shape_cast %119 : vector<64xf32> to vector<64x1xf32>
    %cst_41 = arith.constant 1.000000e+00 : f32
    %121 = vector.broadcast %cst_41 : f32 to vector<64x1xf32>
    %122 = arith.maximumf %120, %121 : vector<64x1xf32>
    %123 = vector.broadcast %122 : vector<64x1xf32> to vector<64x64xf32>
    %124 = arith.divf %118, %123 : vector<64x64xf32>
    %cst_42 = arith.constant dense<0.000000e+00> : vector<64x128xf32>
    %125 = tpu.matmul %124, %6, %cst_42 {dimension_numbers = #tpu.dot_dimension_numbers<[1], [0], [0], [1], [0, 0, 1, 1], [], []>} : vector<64x64xf32>, vector<64x128xf32>, vector<64x128xf32> -> vector<64x128xf32>
    %126 = arith.maximumf %110, %125 : vector<64x128xf32>
    %cst_43 = arith.constant 1.000000e+30 : f32
    %127 = vector.broadcast %cst_43 : f32 to vector<64x64xf32>
    %128 = arith.select %116, %127, %112 : vector<64x64xi1>, vector<64x64xf32>
    %cst_44 = arith.constant dense<0x7F800000> : vector<64xf32>
    %129 = vector.multi_reduction <minimumf>, %128, %cst_44 [1] : vector<64x64xf32> to vector<64xf32>
    %130 = vector.shape_cast %129 : vector<64xf32> to vector<64x1xf32>
    %131 = vector.broadcast %130 : vector<64x1xf32> to vector<64x64xf32>
    %132 = arith.cmpf ole, %128, %131 : vector<64x64xf32>
    %133 = arith.extui %132 : vector<64x64xi1> to vector<64x64xi32>
    %134 = arith.sitofp %133 : vector<64x64xi32> to vector<64x64xf32>
    %cst_45 = arith.constant dense<0.000000e+00> : vector<64xf32>
    %135 = vector.multi_reduction <add>, %134, %cst_45 [1] : vector<64x64xf32> to vector<64xf32>
    %136 = vector.shape_cast %135 : vector<64xf32> to vector<64x1xf32>
    %cst_46 = arith.constant 1.000000e+00 : f32
    %137 = vector.broadcast %cst_46 : f32 to vector<64x1xf32>
    %138 = arith.maximumf %136, %137 : vector<64x1xf32>
    %139 = vector.broadcast %138 : vector<64x1xf32> to vector<64x64xf32>
    %140 = arith.divf %134, %139 : vector<64x64xf32>
    %cst_47 = arith.constant dense<0.000000e+00> : vector<64x128xf32>
    %141 = tpu.matmul %140, %6, %cst_47 {dimension_numbers = #tpu.dot_dimension_numbers<[1], [0], [0], [1], [0, 0, 1, 1], [], []>} : vector<64x64xf32>, vector<64x128xf32>, vector<64x128xf32> -> vector<64x128xf32>
    %142 = arith.maximumf %126, %141 : vector<64x128xf32>
    %cst_48 = arith.constant 1.000000e+30 : f32
    %143 = vector.broadcast %cst_48 : f32 to vector<64x64xf32>
    %144 = arith.select %132, %143, %128 : vector<64x64xi1>, vector<64x64xf32>
    %cst_49 = arith.constant dense<0x7F800000> : vector<64xf32>
    %145 = vector.multi_reduction <minimumf>, %144, %cst_49 [1] : vector<64x64xf32> to vector<64xf32>
    %146 = vector.shape_cast %145 : vector<64xf32> to vector<64x1xf32>
    %147 = vector.broadcast %146 : vector<64x1xf32> to vector<64x64xf32>
    %148 = arith.cmpf ole, %144, %147 : vector<64x64xf32>
    %149 = arith.extui %148 : vector<64x64xi1> to vector<64x64xi32>
    %150 = arith.sitofp %149 : vector<64x64xi32> to vector<64x64xf32>
    %cst_50 = arith.constant dense<0.000000e+00> : vector<64xf32>
    %151 = vector.multi_reduction <add>, %150, %cst_50 [1] : vector<64x64xf32> to vector<64xf32>
    %152 = vector.shape_cast %151 : vector<64xf32> to vector<64x1xf32>
    %cst_51 = arith.constant 1.000000e+00 : f32
    %153 = vector.broadcast %cst_51 : f32 to vector<64x1xf32>
    %154 = arith.maximumf %152, %153 : vector<64x1xf32>
    %155 = vector.broadcast %154 : vector<64x1xf32> to vector<64x64xf32>
    %156 = arith.divf %150, %155 : vector<64x64xf32>
    %cst_52 = arith.constant dense<0.000000e+00> : vector<64x128xf32>
    %157 = tpu.matmul %156, %6, %cst_52 {dimension_numbers = #tpu.dot_dimension_numbers<[1], [0], [0], [1], [0, 0, 1, 1], [], []>} : vector<64x64xf32>, vector<64x128xf32>, vector<64x128xf32> -> vector<64x128xf32>
    %158 = arith.maximumf %142, %157 : vector<64x128xf32>
    %cst_53 = arith.constant 1.000000e+30 : f32
    %159 = vector.broadcast %cst_53 : f32 to vector<64x64xf32>
    %160 = arith.select %148, %159, %144 : vector<64x64xi1>, vector<64x64xf32>
    %cst_54 = arith.constant dense<0x7F800000> : vector<64xf32>
    %161 = vector.multi_reduction <minimumf>, %160, %cst_54 [1] : vector<64x64xf32> to vector<64xf32>
    %162 = vector.shape_cast %161 : vector<64xf32> to vector<64x1xf32>
    %163 = vector.broadcast %162 : vector<64x1xf32> to vector<64x64xf32>
    %164 = arith.cmpf ole, %160, %163 : vector<64x64xf32>
    %165 = arith.extui %164 : vector<64x64xi1> to vector<64x64xi32>
    %166 = arith.sitofp %165 : vector<64x64xi32> to vector<64x64xf32>
    %cst_55 = arith.constant dense<0.000000e+00> : vector<64xf32>
    %167 = vector.multi_reduction <add>, %166, %cst_55 [1] : vector<64x64xf32> to vector<64xf32>
    %168 = vector.shape_cast %167 : vector<64xf32> to vector<64x1xf32>
    %cst_56 = arith.constant 1.000000e+00 : f32
    %169 = vector.broadcast %cst_56 : f32 to vector<64x1xf32>
    %170 = arith.maximumf %168, %169 : vector<64x1xf32>
    %171 = vector.broadcast %170 : vector<64x1xf32> to vector<64x64xf32>
    %172 = arith.divf %166, %171 : vector<64x64xf32>
    %cst_57 = arith.constant dense<0.000000e+00> : vector<64x128xf32>
    %173 = tpu.matmul %172, %6, %cst_57 {dimension_numbers = #tpu.dot_dimension_numbers<[1], [0], [0], [1], [0, 0, 1, 1], [], []>} : vector<64x64xf32>, vector<64x128xf32>, vector<64x128xf32> -> vector<64x128xf32>
    %174 = arith.maximumf %158, %173 : vector<64x128xf32>
    %175 = arith.subf %174, %6 : vector<64x128xf32>
    %c0_58 = arith.constant 0 : index
    %c0_59 = arith.constant 0 : index
    %176 = vector.load %arg4[%c0_58, %c0_59] : memref<128x128xf32, #tpu.memory_space<vmem>>, vector<128x128xf32>
    %cst_60 = arith.constant dense<0.000000e+00> : vector<64x128xf32>
    %177 = tpu.matmul %6, %176, %cst_60 {dimension_numbers = #tpu.dot_dimension_numbers<[1], [0], [0], [1], [0, 0, 1, 1], [], []>} : vector<64x128xf32>, vector<128x128xf32>, vector<64x128xf32> -> vector<64x128xf32>
    %c0_61 = arith.constant 0 : index
    %c0_62 = arith.constant 0 : index
    %178 = vector.load %arg5[%c0_61, %c0_62] : memref<128x128xf32, #tpu.memory_space<vmem>>, vector<128x128xf32>
    %cst_63 = arith.constant dense<0.000000e+00> : vector<64x128xf32>
    %179 = tpu.matmul %175, %178, %cst_63 {dimension_numbers = #tpu.dot_dimension_numbers<[1], [0], [0], [1], [0, 0, 1, 1], [], []>} : vector<64x128xf32>, vector<128x128xf32>, vector<64x128xf32> -> vector<64x128xf32>
    %180 = arith.addf %177, %179 : vector<64x128xf32>
    %c0_64 = arith.constant 0 : index
    %c0_65 = arith.constant 0 : index
    %181 = vector.load %arg6[%c0_64, %c0_65] : memref<1x128xf32, #tpu.memory_space<vmem>>, vector<1x128xf32>
    %182 = vector.broadcast %181 : vector<1x128xf32> to vector<64x128xf32>
    %183 = arith.addf %180, %182 : vector<64x128xf32>
    %cst_66 = arith.constant 0.000000e+00 : f32
    %184 = vector.broadcast %cst_66 : f32 to vector<64x128xf32>
    %185 = arith.maximumf %183, %184 : vector<64x128xf32>
    %c0_67 = arith.constant 0 : index
    %c0_68 = arith.constant 0 : index
    %186 = vector.load %arg7[%c0_67, %c0_68] : memref<128x128xf32, #tpu.memory_space<vmem>>, vector<128x128xf32>
    %cst_69 = arith.constant dense<0.000000e+00> : vector<64x128xf32>
    %187 = tpu.matmul %185, %186, %cst_69 {dimension_numbers = #tpu.dot_dimension_numbers<[1], [0], [0], [1], [0, 0, 1, 1], [], []>} : vector<64x128xf32>, vector<128x128xf32>, vector<64x128xf32> -> vector<64x128xf32>
    %c0_70 = arith.constant 0 : index
    %c0_71 = arith.constant 0 : index
    %188 = vector.load %arg8[%c0_70, %c0_71] : memref<1x128xf32, #tpu.memory_space<vmem>>, vector<1x128xf32>
    %189 = vector.broadcast %188 : vector<1x128xf32> to vector<64x128xf32>
    %190 = arith.addf %187, %189 : vector<64x128xf32>
    %191 = arith.addf %190, %1 : vector<64x128xf32>
    %c0_72 = arith.constant 0 : index
    %c0_73 = arith.constant 0 : index
    %c0_74 = arith.constant 0 : index
    %192 = vector.load %arg9[%c0_72, %c0_73, %c0_74] : memref<1x64x128xf32, #tpu.memory_space<vmem>>, vector<1x64x128xf32>
    %193 = vector.shape_cast %192 : vector<1x64x128xf32> to vector<64x128xf32>
    %194 = vector.shape_cast %191 : vector<64x128xf32> to vector<1x64x128xf32>
    tpu.vector_store %arg9[%c0_72, %c0_73, %c0_74], %194 {strides = array<i32>} : memref<1x64x128xf32, #tpu.memory_space<vmem>>, vector<1x64x128xf32>,
    return
  }
  func.func @transform_0(%arg0: i32) -> (i32, i32, i32) {
    %c0_i32 = arith.constant 0 : i32
    %c0_i32_0 = arith.constant 0 : i32
    %c0_i32_1 = arith.constant 0 : i32
    return %arg0, %c0_i32, %c0_i32_0 : i32, i32, i32
  }
  func.func @transform_1(%arg0: i32) -> (i32, i32) {
    %c0_i32 = arith.constant 0 : i32
    %c0_i32_0 = arith.constant 0 : i32
    %c0_i32_1 = arith.constant 0 : i32
    return %c0_i32, %c0_i32_0 : i32, i32
  }
  func.func @transform_2(%arg0: i32) -> (i32, i32) {
    %c0_i32 = arith.constant 0 : i32
    %c0_i32_0 = arith.constant 0 : i32
    %c0_i32_1 = arith.constant 0 : i32
    return %c0_i32, %c0_i32_0 : i32, i32
  }
  func.func @transform_3(%arg0: i32) -> (i32, i32) {
    %c0_i32 = arith.constant 0 : i32
    %c0_i32_0 = arith.constant 0 : i32
    %c0_i32_1 = arith.constant 0 : i32
    return %c0_i32, %c0_i32_0 : i32, i32
  }
  func.func @transform_4(%arg0: i32) -> (i32, i32) {
    %c0_i32 = arith.constant 0 : i32
    %c0_i32_0 = arith.constant 0 : i32
    %c0_i32_1 = arith.constant 0 : i32
    return %c0_i32, %c0_i32_0 : i32, i32
  }
  func.func @transform_5(%arg0: i32) -> (i32, i32) {
    %c0_i32 = arith.constant 0 : i32
    %c0_i32_0 = arith.constant 0 : i32
    %c0_i32_1 = arith.constant 0 : i32
    return %c0_i32, %c0_i32_0 : i32, i32
  }
  func.func @transform_6(%arg0: i32) -> (i32, i32) {
    %c0_i32 = arith.constant 0 : i32
    %c0_i32_0 = arith.constant 0 : i32
    %c0_i32_1 = arith.constant 0 : i32
    return %c0_i32, %c0_i32_0 : i32, i32
  }
  func.func @transform_7(%arg0: i32) -> (i32, i32) {
    %c0_i32 = arith.constant 0 : i32
    %c0_i32_0 = arith.constant 0 : i32
    %c0_i32_1 = arith.constant 0 : i32
    return %c0_i32, %c0_i32_0 : i32, i32
  }
  func.func @transform_8(%arg0: i32) -> (i32, i32, i32) {
    %c0_i32 = arith.constant 0 : i32
    %c0_i32_0 = arith.constant 0 : i32
    %c0_i32_1 = arith.constant 0 : i32
    return %arg0, %c0_i32, %c0_i32_0 : i32, i32, i32
  }
}

</mosaic_0001>

<llo_original>
// kernel: grapher_forward.1
$region0: #{grapher_forward.1}
  #allocation0 [shape = 'u32[]', space=smem, size = 0x4, offset = 0x4, fixed_abs, tag = 'smem constant byte address 0x4 - core index']
  #allocation1 [shape = 'u32[144,128]{1,0:T(1,128)}', space=vmem, size = 0x12000, scoped, tag = 'internal scratch']
  %s0 = inlined_call_operand.vmem [shape: f32[2,64,128], index: 0, kind: input, shape index: {}]
  %s1 = inlined_call_operand.vmem [shape: f32[128,128], index: 1, kind: input, shape index: {}]
  %s2 = inlined_call_operand.vmem [shape: f32[1,128], index: 2, kind: input, shape index: {}]
  %s3 = inlined_call_operand.vmem [shape: f32[128,128], index: 3, kind: input, shape index: {}]
  %s4 = inlined_call_operand.vmem [shape: f32[128,128], index: 4, kind: input, shape index: {}]
  %s5 = inlined_call_operand.vmem [shape: f32[1,128], index: 5, kind: input, shape index: {}]
  %s6 = inlined_call_operand.vmem [shape: f32[128,128], index: 6, kind: input, shape index: {}]
  %s7 = inlined_call_operand.vmem [shape: f32[1,128], index: 7, kind: input, shape index: {}]
  %s8 = inlined_call_operand.hbm [shape: f32[2,64,128], index: 8, kind: output, shape index: {}]
  %s9 = sld [smem:[#allocation0]]
  $region65: #{grapher_forward.1} parent=0
    _
  %s11 = ssub.s32 1, %s9
  %s12 = scalar_select 0, %s11, %s9
  $region1: #{grapher_forward.1} parent=0
    #allocation2 [shape = 'u8[65536]{0}', space=vmem, size = 0x10000, scoped, tag = 'output window, operand 0']
    #allocation3 [shape = 's32[2]{0}', space=sflag, size = 0x8, scoped, tag = 'scoped memory for grapher_forward.1']
    %13 = vsyncpa [#allocation3], 0
    %s14 = scalar_lea.sflag [#allocation3], 1
    %15 = vsyncpa %s14, 0
    loop: start=0, step=1, limit=4
    $region2: #{grapher_forward.1} parent=1 // loop_pre_header
      _
    $region3: #{grapher_forward.1} parent=1 // loop_header
      %s17 = sphi 0, %s21
      %p18 = scmp.ge.s32.totalorder %s17, 4
      %s27 = sphi 0, %s29
      %s30 = sphi 0, %s27
      %s31 = sphi 0, %s30
      %s47 = sphi 0, %s31
      %s51 = sphi 0, %s51
      %s53 = sphi 0, %s51
      %s54 = sphi 0, %s53
      %s68 = sphi 0, %s54
      %s72 = sphi 0, %s72
      %s74 = sphi 0, %s72
      %s75 = sphi 0, %s74
      %s89 = sphi 0, %s75
      %s93 = sphi 0, %s93
      %s95 = sphi 0, %s93
      %s96 = sphi 0, %s95
      %s110 = sphi 0, %s96
      %s114 = sphi 0, %s114
      %s116 = sphi 0, %s114
      %s117 = sphi 0, %s116
      %s131 = sphi 0, %s117
      %s135 = sphi 0, %s135
      %s137 = sphi 0, %s135
      %s138 = sphi 0, %s137
      %s152 = sphi 0, %s138
      %s156 = sphi 0, %s156
      %s158 = sphi 0, %s156
      %s159 = sphi 0, %s158
      %s173 = sphi 0, %s159
      %s177 = sphi 0, %s177
      %s179 = sphi 0, %s177
      %s180 = sphi 0, %s179
      %s194 = sphi 0, %s180
      %s200 = sphi 0, %s202
      %s203 = sphi 0, %s200
      %s204 = sphi 0, %s203
      %s220 = sphi 0, %s204
    $region4: #{grapher_forward.1} parent=1 // loop_header_branch
      %20 = sbr.rel (%p18) target = $region8
    $region5: #{grapher_forward.1} parent=1 // loop_body
      %s22 = ssub.s32 %s17, 1
      %s23 = ssub.s32 %s17, 2
      %s24 = sadd.s32 %s17, 1
      %s25 = ssub.s32 %s17, %s24
      %p26 = scmp.eq.s32.totalorder %s25, 0
      %s28 = sadd.s32 %s27, 1
      %s29 = scalar_select %p26, %s27, %s28
      %p32 = pneg %p26
      %p33 = scmp.eq.s32.totalorder %s17, 1
      %p34 = por %p32, %p33
      %p35 = scmp.ne.s32.totalorder %s27, %s30
      %p36 = scmp.eq.s32.totalorder %s17, 0
      %p37 = por %p35, %p36
      %p38 = scmp.ne.s32.totalorder %s27, %s30
      %p39 = scmp.eq.s32.totalorder %s22, 1
      %p40 = por %p38, %p39
      %p41 = scmp.ne.s32.totalorder %s30, %s31
      %p42 = scmp.eq.s32.totalorder %s22, 0
      %p43 = por %p41, %p42
      %p44 = scmp.ne.s32.totalorder %s30, %s31
      %p45 = scmp.eq.s32.totalorder %s23, 1
      %p46 = por %p44, %p45
      %p48 = scmp.ne.s32.totalorder %s31, %s47
      %p49 = scmp.eq.s32.totalorder %s23, 0
      %p50 = por %p48, %p49
      %s52 = sadd.s32 %s51, 1
      %p55 = scmp.eq.s32.totalorder %s17, 1
      %p56 = scmp.ne.s32.totalorder %s51, %s53
      %p57 = scmp.eq.s32.totalorder %s17, 0
      %p58 = por %p56, %p57
      %p59 = scmp.ne.s32.totalorder %s51, %s53
      %p60 = scmp.eq.s32.totalorder %s22, 1
      %p61 = por %p59, %p60
      %p62 = scmp.ne.s32.totalorder %s53, %s54
      %p63 = scmp.eq.s32.totalorder %s22, 0
      %p64 = por %p62, %p63
      %p65 = scmp.ne.s32.totalorder %s53, %s54
      %p66 = scmp.eq.s32.totalorder %s23, 1
      %p67 = por %p65, %p66
      %p69 = scmp.ne.s32.totalorder %s54, %s68
      %p70 = scmp.eq.s32.totalorder %s23, 0
      %p71 = por %p69, %p70
      %s73 = sadd.s32 %s72, 1
      %p76 = scmp.eq.s32.totalorder %s17, 1
      %p77 = scmp.ne.s32.totalorder %s72, %s74
      %p78 = scmp.eq.s32.totalorder %s17, 0
      %p79 = por %p77, %p78
      %p80 = scmp.ne.s32.totalorder %s72, %s74
      %p81 = scmp.eq.s32.totalorder %s22, 1
      %p82 = por %p80, %p81
      %p83 = scmp.ne.s32.totalorder %s74, %s75
      %p84 = scmp.eq.s32.totalorder %s22, 0
      %p85 = por %p83, %p84
      %p86 = scmp.ne.s32.totalorder %s74, %s75
      %p87 = scmp.eq.s32.totalorder %s23, 1
      %p88 = por %p86, %p87
      %p90 = scmp.ne.s32.totalorder %s75, %s89
      %p91 = scmp.eq.s32.totalorder %s23, 0
      %p92 = por %p90, %p91
      %s94 = sadd.s32 %s93, 1
      %p97 = scmp.eq.s32.totalorder %s17, 1
      %p98 = scmp.ne.s32.totalorder %s93, %s95
      %p99 = scmp.eq.s32.totalorder %s17, 0
      %p100 = por %p98, %p99
      %p101 = scmp.ne.s32.totalorder %s93, %s95
      %p102 = scmp.eq.s32.totalorder %s22, 1
      %p103 = por %p101, %p102
      %p104 = scmp.ne.s32.totalorder %s95, %s96
      %p105 = scmp.eq.s32.totalorder %s22, 0
      %p106 = por %p104, %p105
      %p107 = scmp.ne.s32.totalorder %s95, %s96
      %p108 = scmp.eq.s32.totalorder %s23, 1
      %p109 = por %p107, %p108
      %p111 = scmp.ne.s32.totalorder %s96, %s110
      %p112 = scmp.eq.s32.totalorder %s23, 0
      %p113 = por %p111, %p112
      %s115 = sadd.s32 %s114, 1
      %p118 = scmp.eq.s32.totalorder %s17, 1
      %p119 = scmp.ne.s32.totalorder %s114, %s116
      %p120 = scmp.eq.s32.totalorder %s17, 0
      %p121 = por %p119, %p120
      %p122 = scmp.ne.s32.totalorder %s114, %s116
      %p123 = scmp.eq.s32.totalorder %s22, 1
      %p124 = por %p122, %p123
      %p125 = scmp.ne.s32.totalorder %s116, %s117
      %p126 = scmp.eq.s32.totalorder %s22, 0
      %p127 = por %p125, %p126
      %p128 = scmp.ne.s32.totalorder %s116, %s117
      %p129 = scmp.eq.s32.totalorder %s23, 1
      %p130 = por %p128, %p129
      %p132 = scmp.ne.s32.totalorder %s117, %s131
      %p133 = scmp.eq.s32.totalorder %s23, 0
      %p134 = por %p132, %p133
      %s136 = sadd.s32 %s135, 1
      %p139 = scmp.eq.s32.totalorder %s17, 1
      %p140 = scmp.ne.s32.totalorder %s135, %s137
      %p141 = scmp.eq.s32.totalorder %s17, 0
      %p142 = por %p140, %p141
      %p143 = scmp.ne.s32.totalorder %s135, %s137
      %p144 = scmp.eq.s32.totalorder %s22, 1
      %p145 = por %p143, %p144
      %p146 = scmp.ne.s32.totalorder %s137, %s138
      %p147 = scmp.eq.s32.totalorder %s22, 0
      %p148 = por %p146, %p147
      %p149 = scmp.ne.s32.totalorder %s137, %s138
      %p150 = scmp.eq.s32.totalorder %s23, 1
      %p151 = por %p149, %p150
      %p153 = scmp.ne.s32.totalorder %s138, %s152
      %p154 = scmp.eq.s32.totalorder %s23, 0
      %p155 = por %p153, %p154
      %s157 = sadd.s32 %s156, 1
      %p160 = scmp.eq.s32.totalorder %s17, 1
      %p161 = scmp.ne.s32.totalorder %s156, %s158
      %p162 = scmp.eq.s32.totalorder %s17, 0
      %p163 = por %p161, %p162
      %p164 = scmp.ne.s32.totalorder %s156, %s158
      %p165 = scmp.eq.s32.totalorder %s22, 1
      %p166 = por %p164, %p165
      %p167 = scmp.ne.s32.totalorder %s158, %s159
      %p168 = scmp.eq.s32.totalorder %s22, 0
      %p169 = por %p167, %p168
      %p170 = scmp.ne.s32.totalorder %s158, %s159
      %p171 = scmp.eq.s32.totalorder %s23, 1
      %p172 = por %p170, %p171
      %p174 = scmp.ne.s32.totalorder %s159, %s173
      %p175 = scmp.eq.s32.totalorder %s23, 0
      %p176 = por %p174, %p175
      %s178 = sadd.s32 %s177, 1
      %p181 = scmp.eq.s32.totalorder %s17, 1
      %p182 = scmp.ne.s32.totalorder %s177, %s179
      %p183 = scmp.eq.s32.totalorder %s17, 0
      %p184 = por %p182, %p183
      %p185 = scmp.ne.s32.totalorder %s177, %s179
      %p186 = scmp.eq.s32.totalorder %s22, 1
      %p187 = por %p185, %p186
      %p188 = scmp.ne.s32.totalorder %s179, %s180
      %p189 = scmp.eq.s32.totalorder %s22, 0
      %p190 = por %p188, %p189
      %p191 = scmp.ne.s32.totalorder %s179, %s180
      %p192 = scmp.eq.s32.totalorder %s23, 1
      %p193 = por %p191, %p192
      %p195 = scmp.ne.s32.totalorder %s180, %s194
      %p196 = scmp.eq.s32.totalorder %s23, 0
      %p197 = por %p195, %p196
      %s198 = ssub.s32 %s17, %s24
      %p199 = scmp.eq.s32.totalorder %s198, 0
      %s201 = sadd.s32 %s200, 1
      %s202 = scalar_select %p199, %s200, %s201
      %p205 = pneg %p199
      %p206 = scmp.eq.s32.totalorder %s17, 1
      %p207 = por %p205, %p206
      %p208 = scmp.ne.s32.totalorder %s200, %s203
      %p209 = scmp.eq.s32.totalorder %s17, 0
      %p210 = por %p208, %p209
      %p211 = scmp.ne.s32.totalorder %s200, %s203
      %p212 = scmp.eq.s32.totalorder %s22, 1
      %p213 = por %p211, %p212
      %p214 = scmp.ne.s32.totalorder %s203, %s204
      %p215 = scmp.eq.s32.totalorder %s22, 0
      %p216 = por %p214, %p215
      %p217 = scmp.ne.s32.totalorder %s203, %s204
      %p218 = scmp.eq.s32.totalorder %s23, 1
      %p219 = por %p217, %p218
      %p221 = scmp.ne.s32.totalorder %s204, %s220
      %p222 = scmp.eq.s32.totalorder %s23, 0
      %p223 = por %p221, %p222
      %p224 = scmp.le.s32.totalorder 1, %s17
      %p225 = scmp.lt.s32.totalorder %s17, 3
      %p226 = pnand %p224, %p225
      %p227 = pneg %p226
      // Predicated region
      $region9: #{grapher_forward.1} parent=5 // pred_check
        _
      $region10: #{grapher_forward.1} parent=5 // pred_check_branch
        %229 = sbr.rel (%p226) target = $region12
      $region11: #{grapher_forward.1} parent=5 // pred_region
        %s230 = ssub.s32 %s17, 1
        // Predicated region
        $region13: #{grapher_forward.1} parent=11 // pred_check
          %p231 = pneg %p64
        $region14: #{grapher_forward.1} parent=11 // pred_check_branch
          %233 = sbr.rel (%p231) target = $region16
        $region15: #{grapher_forward.1} parent=11 // pred_region
          _
        $region16: #{grapher_forward.1} parent=11 // pred_fallthru
          _
        // Predicated region
        $region17: #{grapher_forward.1} parent=11 // pred_check
          %p234 = pneg %p85
        $region18: #{grapher_forward.1} parent=11 // pred_check_branch
          %236 = sbr.rel (%p234) target = $region20
        $region19: #{grapher_forward.1} parent=11 // pred_region
          _
        $region20: #{grapher_forward.1} parent=11 // pred_fallthru
          _
        // Predicated region
        $region21: #{grapher_forward.1} parent=11 // pred_check
          %p237 = pneg %p106
        $region22: #{grapher_forward.1} parent=11 // pred_check_branch
          %239 = sbr.rel (%p237) target = $region24
        $region23: #{grapher_forward.1} parent=11 // pred_region
          _
        $region24: #{grapher_forward.1} parent=11 // pred_fallthru
          _
        // Predicated region
        $region25: #{grapher_forward.1} parent=11 // pred_check
          %p240 = pneg %p127
        $region26: #{grapher_forward.1} parent=11 // pred_check_branch
          %242 = sbr.rel (%p240) target = $region28
        $region27: #{grapher_forward.1} parent=11 // pred_region
          _
        $region28: #{grapher_forward.1} parent=11 // pred_fallthru
          _
        // Predicated region
        $region29: #{grapher_forward.1} parent=11 // pred_check
          %p243 = pneg %p148
        $region30: #{grapher_forward.1} parent=11 // pred_check_branch
          %245 = sbr.rel (%p243) target = $region32
        $region31: #{grapher_forward.1} parent=11 // pred_region
          _
        $region32: #{grapher_forward.1} parent=11 // pred_fallthru
          _
        // Predicated region
        $region33: #{grapher_forward.1} parent=11 // pred_check
          %p246 = pneg %p169
        $region34: #{grapher_forward.1} parent=11 // pred_check_branch
          %248 = sbr.rel (%p246) target = $region36
        $region35: #{grapher_forward.1} parent=11 // pred_region
          _
        $region36: #{grapher_forward.1} parent=11 // pred_fallthru
          _
        // Predicated region
        $region37: #{grapher_forward.1} parent=11 // pred_check
          %p249 = pneg %p190
        $region38: #{grapher_forward.1} parent=11 // pred_check_branch
          %251 = sbr.rel (%p249) target = $region40
        $region39: #{grapher_forward.1} parent=11 // pred_region
          _
        $region40: #{grapher_forward.1} parent=11 // pred_fallthru
          _
      $region12: #{grapher_forward.1} parent=5 // pred_fallthru
        _
      %p252 = scmp.lt.s32.totalorder %s17, 2
      // Predicated region
      $region41: #{grapher_forward.1} parent=5 // pred_check
        %p253 = pneg %p252
      $region42: #{grapher_forward.1} parent=5 // pred_check_branch
        %255 = sbr.rel (%p253) target = $region44
      $region43: #{grapher_forward.1} parent=5 // pred_region
        // Predicated region
        $region45: #{grapher_forward.1} parent=43 // pred_check
          %p256 = pneg %p37
        $region46: #{grapher_forward.1} parent=43 // pred_check_branch
          %258 = sbr.rel (%p256) target = $region48
        $region47: #{grapher_forward.1} parent=43 // pred_region
          %p259 = scmp.lt.s32.totalorder %s17, 1
          %s260 = scalar_select %p259, %s17, 1
          %s261 = smul.addr %s260, 8
          %s262 = smul.addr %s261, 8
          %s263 = scalar_lea.vmem %s0, %s262
        $region48: #{grapher_forward.1} parent=43 // pred_fallthru
          _
      $region44: #{grapher_forward.1} parent=5 // pred_fallthru
        _
      %p264 = scmp.le.s32.totalorder 1, %s17
      %p265 = scmp.lt.s32.totalorder %s17, 3
      %p266 = pnand %p264, %p265
      %p267 = pneg %p266
      // Predicated region
      $region49: #{grapher_forward.1} parent=5 // pred_check
        _
      $region50: #{grapher_forward.1} parent=5 // pred_check_branch
        %269 = sbr.rel (%p266) target = $region52
      $region51: #{grapher_forward.1} parent=5 // pred_region
        %s270 = ssub.s32 %s17, 1
        %p271 = scmp.lt.s32.totalorder %s22, 1
        %s272 = scalar_select %p271, %s22, 1
        %s273 = smul.addr %s272, 8
        %s274 = smul.addr %s273, 8
        %s275 = scalar_lea.vmem %s0, %s274
        %p276 = pneg %p43
        %p277 = pneg %p40
        %p278 = pneg %p64
        %p279 = pneg %p61
        %p280 = pneg %p85
        %p281 = pneg %p82
        %p282 = pneg %p106
        %p283 = pneg %p103
        %p284 = pneg %p127
        %p285 = pneg %p124
        %p286 = pneg %p148
        %p287 = pneg %p145
        %p288 = pneg %p169
        %p289 = pneg %p166
        %p290 = pneg %p190
        %p291 = pneg %p187
        %p292 = pneg %p216
        %p293 = pneg %p213
        %s294 = sand.u32 %s203, 1
        %s295 = scalar_lea.sflag [#allocation3], %s294
        %s296 = sand.u32 %s203, 1
        %s297 = smul.addr %s296, 64
        %s298 = scalar_lea.vmem [#allocation2], %s297
        %p299 = scmp.lt.s32.totalorder %s22, 1
        %s300 = scalar_select %p299, %s22, 1
        %s301 = smul.addr %s300, 8
        %s302 = smul.addr %s301, 8
        %s303 = scalar_lea.vmem %s0, %s302
        %v304 = vld [vmem:[%s303] sm:$0xff]
        %v305 = vld [vmem:[%s303 + $0x8] sm:$0xff]
        %v306 = vld [vmem:[%s303 + $0x10] sm:$0xff]
        %v307 = vld [vmem:[%s303 + $0x18] sm:$0xff]
        %v308 = vld [vmem:[%s303 + $0x20] sm:$0xff]
        %v309 = vld [vmem:[%s303 + $0x28] sm:$0xff]
        %v310 = vld [vmem:[%s303 + $0x30] sm:$0xff]
        %v311 = vld [vmem:[%s303 + $0x38] sm:$0xff]
        %v312 = vld [vmem:[%s1] sm:$0xff]
        %v313 = vld [vmem:[%s1 + $0x8] sm:$0xff]
        %v314 = vld [vmem:[%s1 + $0x10] sm:$0xff]
        %v315 = vld [vmem:[%s1 + $0x18] sm:$0xff]
        %v316 = vld [vmem:[%s1 + $0x20] sm:$0xff]
        %v317 = vld [vmem:[%s1 + $0x28] sm:$0xff]
        %v318 = vld [vmem:[%s1 + $0x30] sm:$0xff]
        %v319 = vld [vmem:[%s1 + $0x38] sm:$0xff]
        %v320 = vld [vmem:[%s1 + $0x40] sm:$0xff]
        %v321 = vld [vmem:[%s1 + $0x48] sm:$0xff]
        %v322 = vld [vmem:[%s1 + $0x50] sm:$0xff]
        %v323 = vld [vmem:[%s1 + $0x58] sm:$0xff]
        %v324 = vld [vmem:[%s1 + $0x60] sm:$0xff]
        %v325 = vld [vmem:[%s1 + $0x68] sm:$0xff]
        %v326 = vld [vmem:[%s1 + $0x70] sm:$0xff]
        %v327 = vld [vmem:[%s1 + $0x78] sm:$0xff]
        %v328 = vld [vmem:[%s2] sm:$0x1]
        %v330 = vlaneseq
        %v331 = vshrl.u32 %v330, 7
        %v332 = vsub.s32 0, %v331
        %v333 = vrot.slane %v328, %v332
        %335 = vmatprep.subr.mxu0 0.0
        %336 = vmatpush1.msra.mxu0 %v327
        %337 = vmatprep.subr.mxu0 0.0
        %338 = vmatpush1.msra.mxu0 %v326
        %339 = vmatprep.subr.mxu0 0.0
        %340 = vmatpush1.msra.mxu0 %v325
        %341 = vmatprep.subr.mxu0 0.0
        %342 = vmatpush1.msra.mxu0 %v324
        %343 = vmatprep.subr.mxu0 0.0
        %344 = vmatpush1.msra.mxu0 %v323
        %345 = vmatprep.subr.mxu0 0.0
        %346 = vmatpush1.msra.mxu0 %v322
        %347 = vmatprep.subr.mxu0 0.0
        %348 = vmatpush1.msra.mxu0 %v321
        %349 = vmatprep.subr.mxu0 0.0
        %350 = vmatpush1.msra.mxu0 %v320
        %351 = vmatprep.subr.mxu0 0.0
        %352 = vmatpush1.msra.mxu0 %v319
        %353 = vmatprep.subr.mxu0 0.0
        %354 = vmatpush1.msra.mxu0 %v318
        %355 = vmatprep.subr.mxu0 0.0
        %356 = vmatpush1.msra.mxu0 %v317
        %357 = vmatprep.subr.mxu0 0.0
        %358 = vmatpush1.msra.mxu0 %v316
        %359 = vmatprep.subr.mxu0 0.0
        %360 = vmatpush1.msra.mxu0 %v315
        %361 = vmatprep.subr.mxu0 0.0
        %362 = vmatpush1.msra.mxu0 %v314
        %363 = vmatprep.subr.mxu0 0.0
        %364 = vmatpush1.msra.mxu0 %v313
        %365 = vmatprep.subr.mxu0 0.0
        %366 = vmatpush1.msra.mxu0 %v312
        %367 = vmatprep.subr.mxu0 0.0
        %368 = vmatpush2.msra.mxu0 0.0
        %369 = vmatprep.subr.mxu0 0.0
        %370 = vmatpush2.msra.mxu0 0.0
        %371 = vmatprep.subr.mxu0 0.0
        %372 = vmatpush2.msra.mxu0 0.0
        %373 = vmatprep.subr.mxu0 0.0
        %374 = vmatpush2.msra.mxu0 0.0
        %375 = vmatprep.subr.mxu0 0.0
        %376 = vmatpush2.msra.mxu0 0.0
        %377 = vmatprep.subr.mxu0 0.0
        %378 = vmatpush2.msra.mxu0 0.0
        %379 = vmatprep.subr.mxu0 0.0
        %380 = vmatpush2.msra.mxu0 0.0
        %381 = vmatprep.subr.mxu0 0.0
        %382 = vmatpush2.msra.mxu0 0.0
        %383 = vmatprep.subr.mxu0 0.0
        %384 = vmatpush2.msra.mxu0 0.0
        %385 = vmatprep.subr.mxu0 0.0
        %386 = vmatpush2.msra.mxu0 0.0
        %387 = vmatprep.subr.mxu0 0.0
        %388 = vmatpush2.msra.mxu0 0.0
        %389 = vmatprep.subr.mxu0 0.0
        %390 = vmatpush2.msra.mxu0 0.0
        %391 = vmatprep.subr.mxu0 0.0
        %392 = vmatpush2.msra.mxu0 0.0
        %393 = vmatprep.subr.mxu0 0.0
        %394 = vmatpush2.msra.mxu0 0.0
        %395 = vmatprep.subr.mxu0 0.0
        %396 = vmatpush2.msra.mxu0 0.0
        %397 = vmatprep.subr.mxu0 0.0
        %398 = vmatpush2.msra.mxu0 0.0
        %399 = vmatprep.mubr.f32.mxu0 0.0
        %400 = vmatmul.mubr.f32.gmra.mxu0 %v304
        %v401 = vpop.f32.mrf.mxu0
        %v402 = vadd.f32 %v333, %v401
        %v403 = vpop.f32.mrf.mxu0
        %404 = vmatprep.mubr.f32.mxu0 0.0
        %405 = vmatmul.mubr.f32.gmra.mxu0 %v305
        %v406 = vpop.f32.mrf.mxu0
        %v407 = vadd.f32 %v333, %v406
        %v408 = vpop.f32.mrf.mxu0
        %409 = vmatprep.mubr.f32.mxu0 0.0
        %410 = vmatmul.mubr.f32.gmra.mxu0 %v306
        %v411 = vpop.f32.mrf.mxu0
        %v412 = vadd.f32 %v333, %v411
        %v413 = vpop.f32.mrf.mxu0
        %414 = vmatprep.mubr.f32.mxu0 0.0
        %415 = vmatmul.mubr.f32.gmra.mxu0 %v307
        %v416 = vpop.f32.mrf.mxu0
        %v417 = vadd.f32 %v333, %v416
        %v418 = vpop.f32.mrf.mxu0
        %419 = vmatprep.mubr.f32.mxu0 0.0
        %420 = vmatmul.mubr.f32.gmra.mxu0 %v308
        %v421 = vpop.f32.mrf.mxu0
        %v422 = vadd.f32 %v333, %v421
        %v423 = vpop.f32.mrf.mxu0
        %424 = vmatprep.mubr.f32.mxu0 0.0
        %425 = vmatmul.mubr.f32.gmra.mxu0 %v309
        %v426 = vpop.f32.mrf.mxu0
        %v427 = vadd.f32 %v333, %v426
        %v428 = vpop.f32.mrf.mxu0
        %429 = vmatprep.mubr.f32.mxu0 0.0
        %430 = vmatmul.mubr.f32.gmra.mxu0 %v310
        %v431 = vpop.f32.mrf.mxu0
        %v432 = vadd.f32 %v333, %v431
        %v433 = vpop.f32.mrf.mxu0
        %434 = vmatprep.mubr.f32.mxu0 0.0
        %435 = vmatmul.mubr.f32.gmra.mxu0 %v311
        %v436 = vpop.f32.mrf.mxu0
        %v437 = vadd.f32 %v333, %v436
        %v438 = vpop.f32.mrf.mxu0
        %439 = vdwg.mxu0
        %v440 = vmul.f32 %v402, %v402
        %v441 = vmul.f32 %v407, %v407
        %v442 = vmul.f32 %v412, %v412
        %v443 = vmul.f32 %v417, %v417
        %v444 = vmul.f32 %v422, %v422
        %v445 = vmul.f32 %v427, %v427
        %v446 = vmul.f32 %v432, %v432
        %v447 = vmul.f32 %v437, %v437
        %448 = vadd.xlane.f32.xlu0 %v440
        %v449 = vpop.xlane.xlu0 %448
        %450 = vadd.xlane.f32.xlu0 %v441
        %v451 = vpop.xlane.xlu0 %450
        %452 = vadd.xlane.f32.xlu0 %v442
        %v453 = vpop.xlane.xlu0 %452
        %454 = vadd.xlane.f32.xlu0 %v443
        %v455 = vpop.xlane.xlu0 %454
        %456 = vadd.xlane.f32.xlu0 %v444
        %v457 = vpop.xlane.xlu0 %456
        %458 = vadd.xlane.f32.xlu0 %v445
        %v459 = vpop.xlane.xlu0 %458
        %460 = vadd.xlane.f32.xlu0 %v446
        %v461 = vpop.xlane.xlu0 %460
        %462 = vadd.xlane.f32.xlu0 %v447
        %v463 = vpop.xlane.xlu0 %462
        %v464 = vmax.f32 %v449, 1e-24
        %v465 = vmax.f32 %v451, 1e-24
        %v466 = vmax.f32 %v453, 1e-24
        %v467 = vmax.f32 %v455, 1e-24
        %v468 = vmax.f32 %v457, 1e-24
        %v469 = vmax.f32 %v459, 1e-24
        %v470 = vmax.f32 %v461, 1e-24
        %v471 = vmax.f32 %v463, 1e-24
        %v472 = vrsqrt.pop %v464
        %v473 = vrsqrt.pop %v465
        %v474 = vrsqrt.pop %v466
        %v475 = vrsqrt.pop %v467
        %v476 = vrsqrt.pop %v468
        %v477 = vrsqrt.pop %v469
        %v478 = vrsqrt.pop %v470
        %v479 = vrsqrt.pop %v471
        %v480 = vmul.f32 %v402, %v472
        %v481 = vmul.f32 %v407, %v473
        %v482 = vmul.f32 %v412, %v474
        %v483 = vmul.f32 %v417, %v475
        %v484 = vmul.f32 %v422, %v476
        %v485 = vmul.f32 %v427, %v477
        %v486 = vmul.f32 %v432, %v478
        %v487 = vmul.f32 %v437, %v479
        %488 = vmatprep.subr.mxu0 0.0
        %489 = vmatpush1.xpose.msra.mxu0 0.0
        %490 = vmatprep.subr.mxu0 0.0
        %491 = vmatpush1.xpose.msra.mxu0 0.0
        %492 = vmatprep.subr.mxu0 0.0
        %493 = vmatpush1.xpose.msra.mxu0 0.0
        %494 = vmatprep.subr.mxu0 0.0
        %495 = vmatpush1.xpose.msra.mxu0 0.0
        %496 = vmatprep.subr.mxu0 0.0
        %497 = vmatpush1.xpose.msra.mxu0 0.0
        %498 = vmatprep.subr.mxu0 0.0
        %499 = vmatpush1.xpose.msra.mxu0 0.0
        %500 = vmatprep.subr.mxu0 0.0
        %501 = vmatpush1.xpose.msra.mxu0 0.0
        %502 = vmatprep.subr.mxu0 0.0
        %503 = vmatpush1.xpose.msra.mxu0 0.0
        %504 = vmatprep.subr.mxu0 0.0
        %505 = vmatpush1.xpose.msra.mxu0 %v487
        %506 = vmatprep.subr.mxu0 0.0
        %507 = vmatpush1.xpose.msra.mxu0 %v486
        %508 = vmatprep.subr.mxu0 0.0
        %509 = vmatpush1.xpose.msra.mxu0 %v485
        %510 = vmatprep.subr.mxu0 0.0
        %511 = vmatpush1.xpose.msra.mxu0 %v484
        %512 = vmatprep.subr.mxu0 0.0
        %513 = vmatpush1.xpose.msra.mxu0 %v483
        %514 = vmatprep.subr.mxu0 0.0
        %515 = vmatpush1.xpose.msra.mxu0 %v482
        %516 = vmatprep.subr.mxu0 0.0
        %517 = vmatpush1.xpose.msra.mxu0 %v481
        %518 = vmatprep.subr.mxu0 0.0
        %519 = vmatpush1.xpose.msra.mxu0 %v480
        %520 = vmatprep.subr.mxu0 0.0
        %521 = vmatpush2.xpose.msra.mxu0 0.0
        %522 = vmatprep.subr.mxu0 0.0
        %523 = vmatpush2.xpose.msra.mxu0 0.0
        %524 = vmatprep.subr.mxu0 0.0
        %525 = vmatpush2.xpose.msra.mxu0 0.0
        %526 = vmatprep.subr.mxu0 0.0
        %527 = vmatpush2.xpose.msra.mxu0 0.0
        %528 = vmatprep.subr.mxu0 0.0
        %529 = vmatpush2.xpose.msra.mxu0 0.0
        %530 = vmatprep.subr.mxu0 0.0
        %531 = vmatpush2.xpose.msra.mxu0 0.0
        %532 = vmatprep.subr.mxu0 0.0
        %533 = vmatpush2.xpose.msra.mxu0 0.0
        %534 = vmatprep.subr.mxu0 0.0
        %535 = vmatpush2.xpose.msra.mxu0 0.0
        %536 = vmatprep.subr.mxu0 0.0
        %537 = vmatpush2.xpose.msra.mxu0 0.0
        %538 = vmatprep.subr.mxu0 0.0
        %539 = vmatpush2.xpose.msra.mxu0 0.0
        %540 = vmatprep.subr.mxu0 0.0
        %541 = vmatpush2.xpose.msra.mxu0 0.0
        %542 = vmatprep.subr.mxu0 0.0
        %543 = vmatpush2.xpose.msra.mxu0 0.0
        %544 = vmatprep.subr.mxu0 0.0
        %545 = vmatpush2.xpose.msra.mxu0 0.0
        %546 = vmatprep.subr.mxu0 0.0
        %547 = vmatpush2.xpose.msra.mxu0 0.0
        %548 = vmatprep.subr.mxu0 0.0
        %549 = vmatpush2.xpose.msra.mxu0 0.0
        %550 = vmatprep.subr.mxu0 0.0
        %551 = vmatpush2.xpose.msra.mxu0 0.0
        %552 = vmatprep.mubr.f32.mxu0 0.0
        %553 = vmatmul.mubr.f32.gmra.mxu0 %v480
        %v554 = vpop.f32.mrf.mxu0
        %v555 = vadd.f32 0.0, %v554
        %v556 = vpop.f32.mrf.mxu0
        %557 = vmatprep.mubr.f32.mxu0 0.0
        %558 = vmatmul.mubr.f32.gmra.mxu0 %v481
        %v559 = vpop.f32.mrf.mxu0
        %v560 = vadd.f32 0.0, %v559
        %v561 = vpop.f32.mrf.mxu0
        %562 = vmatprep.mubr.f32.mxu0 0.0
        %563 = vmatmul.mubr.f32.gmra.mxu0 %v482
        %v564 = vpop.f32.mrf.mxu0
        %v565 = vadd.f32 0.0, %v564
        %v566 = vpop.f32.mrf.mxu0
        %567 = vmatprep.mubr.f32.mxu0 0.0
        %568 = vmatmul.mubr.f32.gmra.mxu0 %v483
        %v569 = vpop.f32.mrf.mxu0
        %v570 = vadd.f32 0.0, %v569
        %v571 = vpop.f32.mrf.mxu0
        %572 = vmatprep.mubr.f32.mxu0 0.0
        %573 = vmatmul.mubr.f32.gmra.mxu0 %v484
        %v574 = vpop.f32.mrf.mxu0
        %v575 = vadd.f32 0.0, %v574
        %v576 = vpop.f32.mrf.mxu0
        %577 = vmatprep.mubr.f32.mxu0 0.0
        %578 = vmatmul.mubr.f32.gmra.mxu0 %v485
        %v579 = vpop.f32.mrf.mxu0
        %v580 = vadd.f32 0.0, %v579
        %v581 = vpop.f32.mrf.mxu0
        %582 = vmatprep.mubr.f32.mxu0 0.0
        %583 = vmatmul.mubr.f32.gmra.mxu0 %v486
        %v584 = vpop.f32.mrf.mxu0
        %v585 = vadd.f32 0.0, %v584
        %v586 = vpop.f32.mrf.mxu0
        %587 = vmatprep.mubr.f32.mxu0 0.0
        %588 = vmatmul.mubr.f32.gmra.mxu0 %v487
        %v589 = vpop.f32.mrf.mxu0
        %v590 = vadd.f32 0.0, %v589
        %v591 = vpop.f32.mrf.mxu0
        %592 = vdwg.mxu0
        %v593 = vmul.f32 %v480, %v480
        %v594 = vmul.f32 %v481, %v481
        %v595 = vmul.f32 %v482, %v482
        %v596 = vmul.f32 %v483, %v483
        %v597 = vmul.f32 %v484, %v484
        %v598 = vmul.f32 %v485, %v485
        %v599 = vmul.f32 %v486, %v486
        %v600 = vmul.f32 %v487, %v487
        %601 = vadd.xlane.f32.xlu0 %v593
        %v602 = vpop.xlane.xlu0 %601
        %603 = vadd.xlane.f32.xlu0 %v594
        %v604 = vpop.xlane.xlu0 %603
        %605 = vadd.xlane.f32.xlu0 %v595
        %v606 = vpop.xlane.xlu0 %605
        %607 = vadd.xlane.f32.xlu0 %v596
        %v608 = vpop.xlane.xlu0 %607
        %609 = vadd.xlane.f32.xlu0 %v597
        %v610 = vpop.xlane.xlu0 %609
        %611 = vadd.xlane.f32.xlu0 %v598
        %v612 = vpop.xlane.xlu0 %611
        %613 = vadd.xlane.f32.xlu0 %v599
        %v614 = vpop.xlane.xlu0 %613
        %615 = vadd.xlane.f32.xlu0 %v600
        %v616 = vpop.xlane.xlu0 %615
        %v617 = vlaneseq
        %v618 = vshrl.u32 %v617, 7
        %v619 = vadd.s32 %v618, 8
        %v620 = vadd.s32 %v618, 16
        %v621 = vadd.s32 %v618, 24
        %v622 = vadd.s32 %v618, 32
        %v623 = vadd.s32 %v618, 40
        %v624 = vadd.s32 %v618, 48
        %v625 = vadd.s32 %v618, 56
        %v626 = vlaneseq
        %v627 = vand.u32 %v626, 127
        %vm628 = vcmp.eq.s32.totalorder %v618, %v627
        %vm629 = vcmp.eq.s32.totalorder %v619, %v627
        %vm630 = vcmp.eq.s32.totalorder %v620, %v627
        %vm631 = vcmp.eq.s32.totalorder %v621, %v627
        %vm632 = vcmp.eq.s32.totalorder %v622, %v627
        %vm633 = vcmp.eq.s32.totalorder %v623, %v627
        %vm634 = vcmp.eq.s32.totalorder %v624, %v627
        %vm635 = vcmp.eq.s32.totalorder %v625, %v627
        %v636 = vsel %vm628, %v555, 0.0
        %v637 = vsel %vm629, %v560, 0.0
        %v638 = vsel %vm630, %v565, 0.0
        %v639 = vsel %vm631, %v570, 0.0
        %v640 = vsel %vm632, %v575, 0.0
        %v641 = vsel %vm633, %v580, 0.0
        %v642 = vsel %vm634, %v585, 0.0
        %v643 = vsel %vm635, %v590, 0.0
        %vm644 = vcmask 523264
        %v645 = vsel %vm644, %v636, 0.0
        %v646 = vsel %vm644, %v637, 0.0
        %v647 = vadd.f32 %v645, %v646
        %v648 = vsel %vm644, %v638, 0.0
        %v649 = vadd.f32 %v647, %v648
        %v650 = vsel %vm644, %v639, 0.0
        %v651 = vadd.f32 %v649, %v650
        %v652 = vsel %vm644, %v640, 0.0
        %v653 = vadd.f32 %v651, %v652
        %v654 = vsel %vm644, %v641, 0.0
        %v655 = vadd.f32 %v653, %v654
        %v656 = vsel %vm644, %v642, 0.0
        %v657 = vadd.f32 %v655, %v656
        %v658 = vsel %vm644, %v643, 0.0
        %v659 = vadd.f32 %v657, %v658
        %v660 = vrot.slane %v659, 4
        %v661 = vadd.f32 %v659, %v660
        %v662 = vrot.slane %v661, 2
        %v663 = vadd.f32 %v661, %v662
        %v664 = vrot.slane %v663, 1
        %v665 = vadd.f32 %v663, %v664
        %v666 = vadd.f32 %v602, %v665
        %v667 = vadd.f32 %v604, %v665
        %v668 = vadd.f32 %v606, %v665
        %v669 = vadd.f32 %v608, %v665
        %v670 = vadd.f32 %v610, %v665
        %v671 = vadd.f32 %v612, %v665
        %v672 = vadd.f32 %v614, %v665
        %v673 = vadd.f32 %v616, %v665
        %v674 = vmul.f32 %v555, 2.0
        %v675 = vmul.f32 %v560, 2.0
        %v676 = vmul.f32 %v565, 2.0
        %v677 = vmul.f32 %v570, 2.0
        %v678 = vmul.f32 %v575, 2.0
        %v679 = vmul.f32 %v580, 2.0
        %v680 = vmul.f32 %v585, 2.0
        %v681 = vmul.f32 %v590, 2.0
        %v682 = vsub.f32 %v666, %v674
        %v683 = vsub.f32 %v667, %v675
        %v684 = vsub.f32 %v668, %v676
        %v685 = vsub.f32 %v669, %v677
        %v686 = vsub.f32 %v670, %v678
        %v687 = vsub.f32 %v671, %v679
        %v688 = vsub.f32 %v672, %v680
        %v689 = vsub.f32 %v673, %v681
        %v690 = vsel %vm644, %v682, inf
        %691 = vmin.xlane.f32.xlu0 %v690
        %v692 = vpop.xlane.xlu0 %691
        %v693 = vsel %vm644, %v683, inf
        %694 = vmin.xlane.f32.xlu0 %v693
        %v695 = vpop.xlane.xlu0 %694
        %v696 = vsel %vm644, %v684, inf
        %697 = vmin.xlane.f32.xlu0 %v696
        %v698 = vpop.xlane.xlu0 %697
        %v699 = vsel %vm644, %v685, inf
        %700 = vmin.xlane.f32.xlu0 %v699
        %v701 = vpop.xlane.xlu0 %700
        %v702 = vsel %vm644, %v686, inf
        %703 = vmin.xlane.f32.xlu0 %v702
        %v704 = vpop.xlane.xlu0 %703
        %v705 = vsel %vm644, %v687, inf
        %706 = vmin.xlane.f32.xlu0 %v705
        %v707 = vpop.xlane.xlu0 %706
        %v708 = vsel %vm644, %v688, inf
        %709 = vmin.xlane.f32.xlu0 %v708
        %v710 = vpop.xlane.xlu0 %709
        %v711 = vsel %vm644, %v689, inf
        %712 = vmin.xlane.f32.xlu0 %v711
        %v713 = vpop.xlane.xlu0 %712
        %vm714 = vcmp.le.f32.partialorder %v682, %v692
        %vm715 = vcmp.le.f32.partialorder %v683, %v695
        %vm716 = vcmp.le.f32.partialorder %v684, %v698
        %vm717 = vcmp.le.f32.partialorder %v685, %v701
        %vm718 = vcmp.le.f32.partialorder %v686, %v704
        %vm719 = vcmp.le.f32.partialorder %v687, %v707
        %vm720 = vcmp.le.f32.partialorder %v688, %v710
        %vm721 = vcmp.le.f32.partialorder %v689, %v713
        %v722 = vsel %vm714, 1, 0
        %v723 = vsel %vm715, 1, 0
        %v724 = vsel %vm716, 1, 0
        %v725 = vsel %vm717, 1, 0
        %v726 = vsel %vm718, 1, 0
        %v727 = vsel %vm719, 1, 0
        %v728 = vsel %vm720, 1, 0
        %v729 = vsel %vm721, 1, 0
        %v730 = vcvt.s32.f32 %v722
        %v731 = vcvt.s32.f32 %v723
        %v732 = vcvt.s32.f32 %v724
        %v733 = vcvt.s32.f32 %v725
        %v734 = vcvt.s32.f32 %v726
        %v735 = vcvt.s32.f32 %v727
        %v736 = vcvt.s32.f32 %v728
        %v737 = vcvt.s32.f32 %v729
        %v738 = vsel %vm644, %v730, 0.0
        %739 = vadd.xlane.f32.xlu0 %v738
        %v740 = vpop.xlane.xlu0 %739
        %v741 = vsel %vm644, %v731, 0.0
        %742 = vadd.xlane.f32.xlu0 %v741
        %v743 = vpop.xlane.xlu0 %742
        %v744 = vsel %vm644, %v732, 0.0
        %745 = vadd.xlane.f32.xlu0 %v744
        %v746 = vpop.xlane.xlu0 %745
        %v747 = vsel %vm644, %v733, 0.0
        %748 = vadd.xlane.f32.xlu0 %v747
        %v749 = vpop.xlane.xlu0 %748
        %v750 = vsel %vm644, %v734, 0.0
        %751 = vadd.xlane.f32.xlu0 %v750
        %v752 = vpop.xlane.xlu0 %751
        %v753 = vsel %vm644, %v735, 0.0
        %754 = vadd.xlane.f32.xlu0 %v753
        %v755 = vpop.xlane.xlu0 %754
        %v756 = vsel %vm644, %v736, 0.0
        %757 = vadd.xlane.f32.xlu0 %v756
        %v758 = vpop.xlane.xlu0 %757
        %v759 = vsel %vm644, %v737, 0.0
        %760 = vadd.xlane.f32.xlu0 %v759
        %v761 = vpop.xlane.xlu0 %760
        %v762 = vmax.f32 %v740, 1.0
        %v763 = vmax.f32 %v743, 1.0
        %v764 = vmax.f32 %v746, 1.0
        %v765 = vmax.f32 %v749, 1.0
        %v766 = vmax.f32 %v752, 1.0
        %v767 = vmax.f32 %v755, 1.0
        %v768 = vmax.f32 %v758, 1.0
        %v769 = vmax.f32 %v761, 1.0
        %v770 = vrcp.pop %v762
        %v771 = vmul.f32 %v730, %v770
        %v772 = vrcp.pop %v763
        %v773 = vmul.f32 %v731, %v772
        %v774 = vrcp.pop %v764
        %v775 = vmul.f32 %v732, %v774
        %v776 = vrcp.pop %v765
        %v777 = vmul.f32 %v733, %v776
        %v778 = vrcp.pop %v766
        %v779 = vmul.f32 %v734, %v778
        %v780 = vrcp.pop %v767
        %v781 = vmul.f32 %v735, %v780
        %v782 = vrcp.pop %v768
        %v783 = vmul.f32 %v736, %v782
        %v784 = vrcp.pop %v769
        %v785 = vmul.f32 %v737, %v784
        %v787 = vsel %vm644, %v771, 0
        %v790 = vsel %vm644, %v773, 0
        %v793 = vsel %vm644, %v775, 0
        %v796 = vsel %vm644, %v777, 0
        %v799 = vsel %vm644, %v779, 0
        %v802 = vsel %vm644, %v781, 0
        %v805 = vsel %vm644, %v783, 0
        %v808 = vsel %vm644, %v785, 0
        %810 = vmatprep.subr.mxu0 0.0
        %811 = vmatpush1.msra.mxu0 0.0
        %812 = vmatprep.subr.mxu0 0.0
        %813 = vmatpush1.msra.mxu0 0.0
        %814 = vmatprep.subr.mxu0 0.0
        %815 = vmatpush1.msra.mxu0 0.0
        %816 = vmatprep.subr.mxu0 0.0
        %817 = vmatpush1.msra.mxu0 0.0
        %818 = vmatprep.subr.mxu0 0.0
        %819 = vmatpush1.msra.mxu0 0.0
        %820 = vmatprep.subr.mxu0 0.0
        %821 = vmatpush1.msra.mxu0 0.0
        %822 = vmatprep.subr.mxu0 0.0
        %823 = vmatpush1.msra.mxu0 0.0
        %824 = vmatprep.subr.mxu0 0.0
        %825 = vmatpush1.msra.mxu0 0.0
        %826 = vmatprep.subr.mxu0 0.0
        %827 = vmatpush1.msra.mxu0 %v437
        %828 = vmatprep.subr.mxu0 0.0
        %829 = vmatpush1.msra.mxu0 %v432
        %830 = vmatprep.subr.mxu0 0.0
        %831 = vmatpush1.msra.mxu0 %v427
        %832 = vmatprep.subr.mxu0 0.0
        %833 = vmatpush1.msra.mxu0 %v422
        %834 = vmatprep.subr.mxu0 0.0
        %835 = vmatpush1.msra.mxu0 %v417
        %836 = vmatprep.subr.mxu0 0.0
        %837 = vmatpush1.msra.mxu0 %v412
        %838 = vmatprep.subr.mxu0 0.0
        %839 = vmatpush1.msra.mxu0 %v407
        %840 = vmatprep.subr.mxu0 0.0
        %841 = vmatpush1.msra.mxu0 %v402
        %842 = vmatprep.subr.mxu0 0.0
        %843 = vmatpush2.msra.mxu0 0.0
        %844 = vmatprep.subr.mxu0 0.0
        %845 = vmatpush2.msra.mxu0 0.0
        %846 = vmatprep.subr.mxu0 0.0
        %847 = vmatpush2.msra.mxu0 0.0
        %848 = vmatprep.subr.mxu0 0.0
        %849 = vmatpush2.msra.mxu0 0.0
        %850 = vmatprep.subr.mxu0 0.0
        %851 = vmatpush2.msra.mxu0 0.0
        %852 = vmatprep.subr.mxu0 0.0
        %853 = vmatpush2.msra.mxu0 0.0
        %854 = vmatprep.subr.mxu0 0.0
        %855 = vmatpush2.msra.mxu0 0.0
        %856 = vmatprep.subr.mxu0 0.0
        %857 = vmatpush2.msra.mxu0 0.0
        %858 = vmatprep.subr.mxu0 0.0
        %859 = vmatpush2.msra.mxu0 0.0
        %860 = vmatprep.subr.mxu0 0.0
        %861 = vmatpush2.msra.mxu0 0.0
        %862 = vmatprep.subr.mxu0 0.0
        %863 = vmatpush2.msra.mxu0 0.0
        %864 = vmatprep.subr.mxu0 0.0
        %865 = vmatpush2.msra.mxu0 0.0
        %866 = vmatprep.subr.mxu0 0.0
        %867 = vmatpush2.msra.mxu0 0.0
        %868 = vmatprep.subr.mxu0 0.0
        %869 = vmatpush2.msra.mxu0 0.0
        %870 = vmatprep.subr.mxu0 0.0
        %871 = vmatpush2.msra.mxu0 0.0
        %872 = vmatprep.subr.mxu0 0.0
        %873 = vmatpush2.msra.mxu0 0.0
        %874 = vmatprep.mubr.f32.mxu0 0.0
        %875 = vmatmul.mubr.f32.gmra.mxu0 %v787
        %v876 = vpop.f32.mrf.mxu0
        %v877 = vadd.f32 0.0, %v876
        %v878 = vpop.f32.mrf.mxu0
        %879 = vmatprep.mubr.f32.mxu0 0.0
        %880 = vmatmul.mubr.f32.gmra.mxu0 %v790
        %v881 = vpop.f32.mrf.mxu0
        %v882 = vadd.f32 0.0, %v881
        %v883 = vpop.f32.mrf.mxu0
        %884 = vmatprep.mubr.f32.mxu0 0.0
        %885 = vmatmul.mubr.f32.gmra.mxu0 %v793
        %v886 = vpop.f32.mrf.mxu0
        %v887 = vadd.f32 0.0, %v886
        %v888 = vpop.f32.mrf.mxu0
        %889 = vmatprep.mubr.f32.mxu0 0.0
        %890 = vmatmul.mubr.f32.gmra.mxu0 %v796
        %v891 = vpop.f32.mrf.mxu0
        %v892 = vadd.f32 0.0, %v891
        %v893 = vpop.f32.mrf.mxu0
        %894 = vmatprep.mubr.f32.mxu0 0.0
        %895 = vmatmul.mubr.f32.gmra.mxu0 %v799
        %v896 = vpop.f32.mrf.mxu0
        %v897 = vadd.f32 0.0, %v896
        %v898 = vpop.f32.mrf.mxu0
        %899 = vmatprep.mubr.f32.mxu0 0.0
        %900 = vmatmul.mubr.f32.gmra.mxu0 %v802
        %v901 = vpop.f32.mrf.mxu0
        %v902 = vadd.f32 0.0, %v901
        %v903 = vpop.f32.mrf.mxu0
        %904 = vmatprep.mubr.f32.mxu0 0.0
        %905 = vmatmul.mubr.f32.gmra.mxu0 %v805
        %v906 = vpop.f32.mrf.mxu0
        %v907 = vadd.f32 0.0, %v906
        %v908 = vpop.f32.mrf.mxu0
        %909 = vmatprep.mubr.f32.mxu0 0.0
        %910 = vmatmul.mubr.f32.gmra.mxu0 %v808
        %v911 = vpop.f32.mrf.mxu0
        %v912 = vadd.f32 0.0, %v911
        %v913 = vpop.f32.mrf.mxu0
        %914 = vdwg.mxu0
        %v915 = vmax.f32 %v877, -1e+30
        %v916 = vmax.f32 %v882, -1e+30
        %v917 = vmax.f32 %v887, -1e+30
        %v918 = vmax.f32 %v892, -1e+30
        %v919 = vmax.f32 %v897, -1e+30
        %v920 = vmax.f32 %v902, -1e+30
        %v921 = vmax.f32 %v907, -1e+30
        %v922 = vmax.f32 %v912, -1e+30
        %v923 = vsel %vm714, 1e+30, %v682
        %v924 = vsel %vm715, 1e+30, %v683
        %v925 = vsel %vm716, 1e+30, %v684
        %v926 = vsel %vm717, 1e+30, %v685
        %v927 = vsel %vm718, 1e+30, %v686
        %v928 = vsel %vm719, 1e+30, %v687
        %v929 = vsel %vm720, 1e+30, %v688
        %v930 = vsel %vm721, 1e+30, %v689
        %v931 = vsel %vm644, %v923, inf
        %932 = vmin.xlane.f32.xlu0 %v931
        %v933 = vpop.xlane.xlu0 %932
        %v934 = vsel %vm644, %v924, inf
        %935 = vmin.xlane.f32.xlu0 %v934
        %v936 = vpop.xlane.xlu0 %935
        %v937 = vsel %vm644, %v925, inf
        %938 = vmin.xlane.f32.xlu0 %v937
        %v939 = vpop.xlane.xlu0 %938
        %v940 = vsel %vm644, %v926, inf
        %941 = vmin.xlane.f32.xlu0 %v940
        %v942 = vpop.xlane.xlu0 %941
        %v943 = vsel %vm644, %v927, inf
        %944 = vmin.xlane.f32.xlu0 %v943
        %v945 = vpop.xlane.xlu0 %944
        %v946 = vsel %vm644, %v928, inf
        %947 = vmin.xlane.f32.xlu0 %v946
        %v948 = vpop.xlane.xlu0 %947
        %v949 = vsel %vm644, %v929, inf
        %950 = vmin.xlane.f32.xlu0 %v949
        %v951 = vpop.xlane.xlu0 %950
        %v952 = vsel %vm644, %v930, inf
        %953 = vmin.xlane.f32.xlu0 %v952
        %v954 = vpop.xlane.xlu0 %953
        %vm955 = vcmp.le.f32.partialorder %v923, %v933
        %vm956 = vcmp.le.f32.partialorder %v924, %v936
        %vm957 = vcmp.le.f32.partialorder %v925, %v939
        %vm958 = vcmp.le.f32.partialorder %v926, %v942
        %vm959 = vcmp.le.f32.partialorder %v927, %v945
        %vm960 = vcmp.le.f32.partialorder %v928, %v948
        %vm961 = vcmp.le.f32.partialorder %v929, %v951
        %vm962 = vcmp.le.f32.partialorder %v930, %v954
        %v963 = vsel %vm955, 1, 0
        %v964 = vsel %vm956, 1, 0
        %v965 = vsel %vm957, 1, 0
        %v966 = vsel %vm958, 1, 0
        %v967 = vsel %vm959, 1, 0
        %v968 = vsel %vm960, 1, 0
        %v969 = vsel %vm961, 1, 0
        %v970 = vsel %vm962, 1, 0
        %v971 = vcvt.s32.f32 %v963
        %v972 = vcvt.s32.f32 %v964
        %v973 = vcvt.s32.f32 %v965
        %v974 = vcvt.s32.f32 %v966
        %v975 = vcvt.s32.f32 %v967
        %v976 = vcvt.s32.f32 %v968
        %v977 = vcvt.s32.f32 %v969
        %v978 = vcvt.s32.f32 %v970
        %v979 = vsel %vm644, %v971, 0.0
        %980 = vadd.xlane.f32.xlu0 %v979
        %v981 = vpop.xlane.xlu0 %980
        %v982 = vsel %vm644, %v972, 0.0
        %983 = vadd.xlane.f32.xlu0 %v982
        %v984 = vpop.xlane.xlu0 %983
        %v985 = vsel %vm644, %v973, 0.0
        %986 = vadd.xlane.f32.xlu0 %v985
        %v987 = vpop.xlane.xlu0 %986
        %v988 = vsel %vm644, %v974, 0.0
        %989 = vadd.xlane.f32.xlu0 %v988
        %v990 = vpop.xlane.xlu0 %989
        %v991 = vsel %vm644, %v975, 0.0
        %992 = vadd.xlane.f32.xlu0 %v991
        %v993 = vpop.xlane.xlu0 %992
        %v994 = vsel %vm644, %v976, 0.0
        %995 = vadd.xlane.f32.xlu0 %v994
        %v996 = vpop.xlane.xlu0 %995
        %v997 = vsel %vm644, %v977, 0.0
        %998 = vadd.xlane.f32.xlu0 %v997
        %v999 = vpop.xlane.xlu0 %998
        %v1000 = vsel %vm644, %v978, 0.0
        %1001 = vadd.xlane.f32.xlu0 %v1000
        %v1002 = vpop.xlane.xlu0 %1001
        %v1003 = vmax.f32 %v981, 1.0
        %v1004 = vmax.f32 %v984, 1.0
        %v1005 = vmax.f32 %v987, 1.0
        %v1006 = vmax.f32 %v990, 1.0
        %v1007 = vmax.f32 %v993, 1.0
        %v1008 = vmax.f32 %v996, 1.0
        %v1009 = vmax.f32 %v999, 1.0
        %v1010 = vmax.f32 %v1002, 1.0
        %v1011 = vrcp.pop %v1003
        %v1012 = vmul.f32 %v971, %v1011
        %v1013 = vrcp.pop %v1004
        %v1014 = vmul.f32 %v972, %v1013
        %v1015 = vrcp.pop %v1005
        %v1016 = vmul.f32 %v973, %v1015
        %v1017 = vrcp.pop %v1006
        %v1018 = vmul.f32 %v974, %v1017
        %v1019 = vrcp.pop %v1007
        %v1020 = vmul.f32 %v975, %v1019
        %v1021 = vrcp.pop %v1008
        %v1022 = vmul.f32 %v976, %v1021
        %v1023 = vrcp.pop %v1009
        %v1024 = vmul.f32 %v977, %v1023
        %v1025 = vrcp.pop %v1010
        %v1026 = vmul.f32 %v978, %v1025
        %v1028 = vsel %vm644, %v1012, 0
        %v1031 = vsel %vm644, %v1014, 0
        %v1034 = vsel %vm644, %v1016, 0
        %v1037 = vsel %vm644, %v1018, 0
        %v1040 = vsel %vm644, %v1020, 0
        %v1043 = vsel %vm644, %v1022, 0
        %v1046 = vsel %vm644, %v1024, 0
        %v1049 = vsel %vm644, %v1026, 0
        %1051 = vmatprep.subr.mxu0 0.0
        %1052 = vmatpush1.msra.mxu0 0.0
        %1053 = vmatprep.subr.mxu0 0.0
        %1054 = vmatpush1.msra.mxu0 0.0
        %1055 = vmatprep.subr.mxu0 0.0
        %1056 = vmatpush1.msra.mxu0 0.0
        %1057 = vmatprep.subr.mxu0 0.0
        %1058 = vmatpush1.msra.mxu0 0.0
        %1059 = vmatprep.subr.mxu0 0.0
        %1060 = vmatpush1.msra.mxu0 0.0
        %1061 = vmatprep.subr.mxu0 0.0
        %1062 = vmatpush1.msra.mxu0 0.0
        %1063 = vmatprep.subr.mxu0 0.0
        %1064 = vmatpush1.msra.mxu0 0.0
        %1065 = vmatprep.subr.mxu0 0.0
        %1066 = vmatpush1.msra.mxu0 0.0
        %1067 = vmatprep.subr.mxu0 0.0
        %1068 = vmatpush1.msra.mxu0 %v437
        %1069 = vmatprep.subr.mxu0 0.0
        %1070 = vmatpush1.msra.mxu0 %v432
        %1071 = vmatprep.subr.mxu0 0.0
        %1072 = vmatpush1.msra.mxu0 %v427
        %1073 = vmatprep.subr.mxu0 0.0
        %1074 = vmatpush1.msra.mxu0 %v422
        %1075 = vmatprep.subr.mxu0 0.0
        %1076 = vmatpush1.msra.mxu0 %v417
        %1077 = vmatprep.subr.mxu0 0.0
        %1078 = vmatpush1.msra.mxu0 %v412
        %1079 = vmatprep.subr.mxu0 0.0
        %1080 = vmatpush1.msra.mxu0 %v407
        %1081 = vmatprep.subr.mxu0 0.0
        %1082 = vmatpush1.msra.mxu0 %v402
        %1083 = vmatprep.subr.mxu0 0.0
        %1084 = vmatpush2.msra.mxu0 0.0
        %1085 = vmatprep.subr.mxu0 0.0
        %1086 = vmatpush2.msra.mxu0 0.0
        %1087 = vmatprep.subr.mxu0 0.0
        %1088 = vmatpush2.msra.mxu0 0.0
        %1089 = vmatprep.subr.mxu0 0.0
        %1090 = vmatpush2.msra.mxu0 0.0
        %1091 = vmatprep.subr.mxu0 0.0
        %1092 = vmatpush2.msra.mxu0 0.0
        %1093 = vmatprep.subr.mxu0 0.0
        %1094 = vmatpush2.msra.mxu0 0.0
        %1095 = vmatprep.subr.mxu0 0.0
        %1096 = vmatpush2.msra.mxu0 0.0
        %1097 = vmatprep.subr.mxu0 0.0
        %1098 = vmatpush2.msra.mxu0 0.0
        %1099 = vmatprep.subr.mxu0 0.0
        %1100 = vmatpush2.msra.mxu0 0.0
        %1101 = vmatprep.subr.mxu0 0.0
        %1102 = vmatpush2.msra.mxu0 0.0
        %1103 = vmatprep.subr.mxu0 0.0
        %1104 = vmatpush2.msra.mxu0 0.0
        %1105 = vmatprep.subr.mxu0 0.0
        %1106 = vmatpush2.msra.mxu0 0.0
        %1107 = vmatprep.subr.mxu0 0.0
        %1108 = vmatpush2.msra.mxu0 0.0
        %1109 = vmatprep.subr.mxu0 0.0
        %1110 = vmatpush2.msra.mxu0 0.0
        %1111 = vmatprep.subr.mxu0 0.0
        %1112 = vmatpush2.msra.mxu0 0.0
        %1113 = vmatprep.subr.mxu0 0.0
        %1114 = vmatpush2.msra.mxu0 0.0
        %1115 = vmatprep.mubr.f32.mxu0 0.0
        %1116 = vmatmul.mubr.f32.gmra.mxu0 %v1028
        %v1117 = vpop.f32.mrf.mxu0
        %v1118 = vadd.f32 0.0, %v1117
        %v1119 = vpop.f32.mrf.mxu0
        %1120 = vmatprep.mubr.f32.mxu0 0.0
        %1121 = vmatmul.mubr.f32.gmra.mxu0 %v1031
        %v1122 = vpop.f32.mrf.mxu0
        %v1123 = vadd.f32 0.0, %v1122
        %v1124 = vpop.f32.mrf.mxu0
        %1125 = vmatprep.mubr.f32.mxu0 0.0
        %1126 = vmatmul.mubr.f32.gmra.mxu0 %v1034
        %v1127 = vpop.f32.mrf.mxu0
        %v1128 = vadd.f32 0.0, %v1127
        %v1129 = vpop.f32.mrf.mxu0
        %1130 = vmatprep.mubr.f32.mxu0 0.0
        %1131 = vmatmul.mubr.f32.gmra.mxu0 %v1037
        %v1132 = vpop.f32.mrf.mxu0
        %v1133 = vadd.f32 0.0, %v1132
        %v1134 = vpop.f32.mrf.mxu0
        %1135 = vmatprep.mubr.f32.mxu0 0.0
        %1136 = vmatmul.mubr.f32.gmra.mxu0 %v1040
        %v1137 = vpop.f32.mrf.mxu0
        %v1138 = vadd.f32 0.0, %v1137
        %v1139 = vpop.f32.mrf.mxu0
        %1140 = vmatprep.mubr.f32.mxu0 0.0
        %1141 = vmatmul.mubr.f32.gmra.mxu0 %v1043
        %v1142 = vpop.f32.mrf.mxu0
        %v1143 = vadd.f32 0.0, %v1142
        %v1144 = vpop.f32.mrf.mxu0
        %1145 = vmatprep.mubr.f32.mxu0 0.0
        %1146 = vmatmul.mubr.f32.gmra.mxu0 %v1046
        %v1147 = vpop.f32.mrf.mxu0
        %v1148 = vadd.f32 0.0, %v1147
        %v1149 = vpop.f32.mrf.mxu0
        %1150 = vmatprep.mubr.f32.mxu0 0.0
        %1151 = vmatmul.mubr.f32.gmra.mxu0 %v1049
        %v1152 = vpop.f32.mrf.mxu0
        %v1153 = vadd.f32 0.0, %v1152
        %v1154 = vpop.f32.mrf.mxu0
        %1155 = vdwg.mxu0
        %v1156 = vmax.f32 %v915, %v1118
        %v1157 = vmax.f32 %v916, %v1123
        %v1158 = vmax.f32 %v917, %v1128
        %v1159 = vmax.f32 %v918, %v1133
        %v1160 = vmax.f32 %v919, %v1138
        %v1161 = vmax.f32 %v920, %v1143
        %v1162 = vmax.f32 %v921, %v1148
        %v1163 = vmax.f32 %v922, %v1153
        %v1164 = vsel %vm955, 1e+30, %v923
        %v1165 = vsel %vm956, 1e+30, %v924
        %v1166 = vsel %vm957, 1e+30, %v925
        %v1167 = vsel %vm958, 1e+30, %v926
        %v1168 = vsel %vm959, 1e+30, %v927
        %v1169 = vsel %vm960, 1e+30, %v928
        %v1170 = vsel %vm961, 1e+30, %v929
        %v1171 = vsel %vm962, 1e+30, %v930
        %v1172 = vsel %vm644, %v1164, inf
        %1173 = vmin.xlane.f32.xlu0 %v1172
        %v1174 = vpop.xlane.xlu0 %1173
        %v1175 = vsel %vm644, %v1165, inf
        %1176 = vmin.xlane.f32.xlu0 %v1175
        %v1177 = vpop.xlane.xlu0 %1176
        %v1178 = vsel %vm644, %v1166, inf
        %1179 = vmin.xlane.f32.xlu0 %v1178
        %v1180 = vpop.xlane.xlu0 %1179
        %v1181 = vsel %vm644, %v1167, inf
        %1182 = vmin.xlane.f32.xlu0 %v1181
        %v1183 = vpop.xlane.xlu0 %1182
        %v1184 = vsel %vm644, %v1168, inf
        %1185 = vmin.xlane.f32.xlu0 %v1184
        %v1186 = vpop.xlane.xlu0 %1185
        %v1187 = vsel %vm644, %v1169, inf
        %1188 = vmin.xlane.f32.xlu0 %v1187
        %v1189 = vpop.xlane.xlu0 %1188
        %v1190 = vsel %vm644, %v1170, inf
        %1191 = vmin.xlane.f32.xlu0 %v1190
        %v1192 = vpop.xlane.xlu0 %1191
        %v1193 = vsel %vm644, %v1171, inf
        %1194 = vmin.xlane.f32.xlu0 %v1193
        %v1195 = vpop.xlane.xlu0 %1194
        %vm1196 = vcmp.le.f32.partialorder %v1164, %v1174
        %vm1197 = vcmp.le.f32.partialorder %v1165, %v1177
        %vm1198 = vcmp.le.f32.partialorder %v1166, %v1180
        %vm1199 = vcmp.le.f32.partialorder %v1167, %v1183
        %vm1200 = vcmp.le.f32.partialorder %v1168, %v1186
        %vm1201 = vcmp.le.f32.partialorder %v1169, %v1189
        %vm1202 = vcmp.le.f32.partialorder %v1170, %v1192
        %vm1203 = vcmp.le.f32.partialorder %v1171, %v1195
        %v1204 = vsel %vm1196, 1, 0
        %v1205 = vsel %vm1197, 1, 0
        %v1206 = vsel %vm1198, 1, 0
        %v1207 = vsel %vm1199, 1, 0
        %v1208 = vsel %vm1200, 1, 0
        %v1209 = vsel %vm1201, 1, 0
        %v1210 = vsel %vm1202, 1, 0
        %v1211 = vsel %vm1203, 1, 0
        %v1212 = vcvt.s32.f32 %v1204
        %v1213 = vcvt.s32.f32 %v1205
        %v1214 = vcvt.s32.f32 %v1206
        %v1215 = vcvt.s32.f32 %v1207
        %v1216 = vcvt.s32.f32 %v1208
        %v1217 = vcvt.s32.f32 %v1209
        %v1218 = vcvt.s32.f32 %v1210
        %v1219 = vcvt.s32.f32 %v1211
        %v1220 = vsel %vm644, %v1212, 0.0
        %1221 = vadd.xlane.f32.xlu0 %v1220
        %v1222 = vpop.xlane.xlu0 %1221
        %v1223 = vsel %vm644, %v1213, 0.0
        %1224 = vadd.xlane.f32.xlu0 %v1223
        %v1225 = vpop.xlane.xlu0 %1224
        %v1226 = vsel %vm644, %v1214, 0.0
        %1227 = vadd.xlane.f32.xlu0 %v1226
        %v1228 = vpop.xlane.xlu0 %1227
        %v1229 = vsel %vm644, %v1215, 0.0
        %1230 = vadd.xlane.f32.xlu0 %v1229
        %v1231 = vpop.xlane.xlu0 %1230
        %v1232 = vsel %vm644, %v1216, 0.0
        %1233 = vadd.xlane.f32.xlu0 %v1232
        %v1234 = vpop.xlane.xlu0 %1233
        %v1235 = vsel %vm644, %v1217, 0.0
        %1236 = vadd.xlane.f32.xlu0 %v1235
        %v1237 = vpop.xlane.xlu0 %1236
        %v1238 = vsel %vm644, %v1218, 0.0
        %1239 = vadd.xlane.f32.xlu0 %v1238
        %v1240 = vpop.xlane.xlu0 %1239
        %v1241 = vsel %vm644, %v1219, 0.0
        %1242 = vadd.xlane.f32.xlu0 %v1241
        %v1243 = vpop.xlane.xlu0 %1242
        %v1244 = vmax.f32 %v1222, 1.0
        %v1245 = vmax.f32 %v1225, 1.0
        %v1246 = vmax.f32 %v1228, 1.0
        %v1247 = vmax.f32 %v1231, 1.0
        %v1248 = vmax.f32 %v1234, 1.0
        %v1249 = vmax.f32 %v1237, 1.0
        %v1250 = vmax.f32 %v1240, 1.0
        %v1251 = vmax.f32 %v1243, 1.0
        %v1252 = vrcp.pop %v1244
        %v1253 = vmul.f32 %v1212, %v1252
        %v1254 = vrcp.pop %v1245
        %v1255 = vmul.f32 %v1213, %v1254
        %v1256 = vrcp.pop %v1246
        %v1257 = vmul.f32 %v1214, %v1256
        %v1258 = vrcp.pop %v1247
        %v1259 = vmul.f32 %v1215, %v1258
        %v1260 = vrcp.pop %v1248
        %v1261 = vmul.f32 %v1216, %v1260
        %v1262 = vrcp.pop %v1249
        %v1263 = vmul.f32 %v1217, %v1262
        %v1264 = vrcp.pop %v1250
        %v1265 = vmul.f32 %v1218, %v1264
        %v1266 = vrcp.pop %v1251
        %v1267 = vmul.f32 %v1219, %v1266
        %v1269 = vsel %vm644, %v1253, 0
        %v1272 = vsel %vm644, %v1255, 0
        %v1275 = vsel %vm644, %v1257, 0
        %v1278 = vsel %vm644, %v1259, 0
        %v1281 = vsel %vm644, %v1261, 0
        %v1284 = vsel %vm644, %v1263, 0
        %v1287 = vsel %vm644, %v1265, 0
        %v1290 = vsel %vm644, %v1267, 0
        %1292 = vmatprep.subr.mxu0 0.0
        %1293 = vmatpush1.msra.mxu0 0.0
        %1294 = vmatprep.subr.mxu0 0.0
        %1295 = vmatpush1.msra.mxu0 0.0
        %1296 = vmatprep.subr.mxu0 0.0
        %1297 = vmatpush1.msra.mxu0 0.0
        %1298 = vmatprep.subr.mxu0 0.0
        %1299 = vmatpush1.msra.mxu0 0.0
        %1300 = vmatprep.subr.mxu0 0.0
        %1301 = vmatpush1.msra.mxu0 0.0
        %1302 = vmatprep.subr.mxu0 0.0
        %1303 = vmatpush1.msra.mxu0 0.0
        %1304 = vmatprep.subr.mxu0 0.0
        %1305 = vmatpush1.msra.mxu0 0.0
        %1306 = vmatprep.subr.mxu0 0.0
        %1307 = vmatpush1.msra.mxu0 0.0
        %1308 = vmatprep.subr.mxu0 0.0
        %1309 = vmatpush1.msra.mxu0 %v437
        %1310 = vmatprep.subr.mxu0 0.0
        %1311 = vmatpush1.msra.mxu0 %v432
        %1312 = vmatprep.subr.mxu0 0.0
        %1313 = vmatpush1.msra.mxu0 %v427
        %1314 = vmatprep.subr.mxu0 0.0
        %1315 = vmatpush1.msra.mxu0 %v422
        %1316 = vmatprep.subr.mxu0 0.0
        %1317 = vmatpush1.msra.mxu0 %v417
        %1318 = vmatprep.subr.mxu0 0.0
        %1319 = vmatpush1.msra.mxu0 %v412
        %1320 = vmatprep.subr.mxu0 0.0
        %1321 = vmatpush1.msra.mxu0 %v407
        %1322 = vmatprep.subr.mxu0 0.0
        %1323 = vmatpush1.msra.mxu0 %v402
        %1324 = vmatprep.subr.mxu0 0.0
        %1325 = vmatpush2.msra.mxu0 0.0
        %1326 = vmatprep.subr.mxu0 0.0
        %1327 = vmatpush2.msra.mxu0 0.0
        %1328 = vmatprep.subr.mxu0 0.0
        %1329 = vmatpush2.msra.mxu0 0.0
        %1330 = vmatprep.subr.mxu0 0.0
        %1331 = vmatpush2.msra.mxu0 0.0
        %1332 = vmatprep.subr.mxu0 0.0
        %1333 = vmatpush2.msra.mxu0 0.0
        %1334 = vmatprep.subr.mxu0 0.0
        %1335 = vmatpush2.msra.mxu0 0.0
        %1336 = vmatprep.subr.mxu0 0.0
        %1337 = vmatpush2.msra.mxu0 0.0
        %1338 = vmatprep.subr.mxu0 0.0
        %1339 = vmatpush2.msra.mxu0 0.0
        %1340 = vmatprep.subr.mxu0 0.0
        %1341 = vmatpush2.msra.mxu0 0.0
        %1342 = vmatprep.subr.mxu0 0.0
        %1343 = vmatpush2.msra.mxu0 0.0
        %1344 = vmatprep.subr.mxu0 0.0
        %1345 = vmatpush2.msra.mxu0 0.0
        %1346 = vmatprep.subr.mxu0 0.0
        %1347 = vmatpush2.msra.mxu0 0.0
        %1348 = vmatprep.subr.mxu0 0.0
        %1349 = vmatpush2.msra.mxu0 0.0
        %1350 = vmatprep.subr.mxu0 0.0
        %1351 = vmatpush2.msra.mxu0 0.0
        %1352 = vmatprep.subr.mxu0 0.0
        %1353 = vmatpush2.msra.mxu0 0.0
        %1354 = vmatprep.subr.mxu0 0.0
        %1355 = vmatpush2.msra.mxu0 0.0
        %1356 = vmatprep.mubr.f32.mxu0 0.0
        %1357 = vmatmul.mubr.f32.gmra.mxu0 %v1269
        %v1358 = vpop.f32.mrf.mxu0
        %v1359 = vadd.f32 0.0, %v1358
        %v1360 = vpop.f32.mrf.mxu0
        %1361 = vmatprep.mubr.f32.mxu0 0.0
        %1362 = vmatmul.mubr.f32.gmra.mxu0 %v1272
        %v1363 = vpop.f32.mrf.mxu0
        %v1364 = vadd.f32 0.0, %v1363
        %v1365 = vpop.f32.mrf.mxu0
        %1366 = vmatprep.mubr.f32.mxu0 0.0
        %1367 = vmatmul.mubr.f32.gmra.mxu0 %v1275
        %v1368 = vpop.f32.mrf.mxu0
        %v1369 = vadd.f32 0.0, %v1368
        %v1370 = vpop.f32.mrf.mxu0
        %1371 = vmatprep.mubr.f32.mxu0 0.0
        %1372 = vmatmul.mubr.f32.gmra.mxu0 %v1278
        %v1373 = vpop.f32.mrf.mxu0
        %v1374 = vadd.f32 0.0, %v1373
        %v1375 = vpop.f32.mrf.mxu0
        %1376 = vmatprep.mubr.f32.mxu0 0.0
        %1377 = vmatmul.mubr.f32.gmra.mxu0 %v1281
        %v1378 = vpop.f32.mrf.mxu0
        %v1379 = vadd.f32 0.0, %v1378
        %v1380 = vpop.f32.mrf.mxu0
        %1381 = vmatprep.mubr.f32.mxu0 0.0
        %1382 = vmatmul.mubr.f32.gmra.mxu0 %v1284
        %v1383 = vpop.f32.mrf.mxu0
        %v1384 = vadd.f32 0.0, %v1383
        %v1385 = vpop.f32.mrf.mxu0
        %1386 = vmatprep.mubr.f32.mxu0 0.0
        %1387 = vmatmul.mubr.f32.gmra.mxu0 %v1287
        %v1388 = vpop.f32.mrf.mxu0
        %v1389 = vadd.f32 0.0, %v1388
        %v1390 = vpop.f32.mrf.mxu0
        %1391 = vmatprep.mubr.f32.mxu0 0.0
        %1392 = vmatmul.mubr.f32.gmra.mxu0 %v1290
        %v1393 = vpop.f32.mrf.mxu0
        %v1394 = vadd.f32 0.0, %v1393
        %v1395 = vpop.f32.mrf.mxu0
        %1396 = vdwg.mxu0
        %v1397 = vmax.f32 %v1156, %v1359
        %v1398 = vmax.f32 %v1157, %v1364
        %v1399 = vmax.f32 %v1158, %v1369
        %v1400 = vmax.f32 %v1159, %v1374
        %v1401 = vmax.f32 %v1160, %v1379
        %v1402 = vmax.f32 %v1161, %v1384
        %v1403 = vmax.f32 %v1162, %v1389
        %v1404 = vmax.f32 %v1163, %v1394
        %v1405 = vsel %vm1196, 1e+30, %v1164
        %v1406 = vsel %vm1197, 1e+30, %v1165
        %v1407 = vsel %vm1198, 1e+30, %v1166
        %v1408 = vsel %vm1199, 1e+30, %v1167
        %v1409 = vsel %vm1200, 1e+30, %v1168
        %v1410 = vsel %vm1201, 1e+30, %v1169
        %v1411 = vsel %vm1202, 1e+30, %v1170
        %v1412 = vsel %vm1203, 1e+30, %v1171
        %v1413 = vsel %vm644, %v1405, inf
        %1414 = vmin.xlane.f32.xlu0 %v1413
        %v1415 = vpop.xlane.xlu0 %1414
        %v1416 = vsel %vm644, %v1406, inf
        %1417 = vmin.xlane.f32.xlu0 %v1416
        %v1418 = vpop.xlane.xlu0 %1417
        %v1419 = vsel %vm644, %v1407, inf
        %1420 = vmin.xlane.f32.xlu0 %v1419
        %v1421 = vpop.xlane.xlu0 %1420
        %v1422 = vsel %vm644, %v1408, inf
        %1423 = vmin.xlane.f32.xlu0 %v1422
        %v1424 = vpop.xlane.xlu0 %1423
        %v1425 = vsel %vm644, %v1409, inf
        %1426 = vmin.xlane.f32.xlu0 %v1425
        %v1427 = vpop.xlane.xlu0 %1426
        %v1428 = vsel %vm644, %v1410, inf
        %1429 = vmin.xlane.f32.xlu0 %v1428
        %v1430 = vpop.xlane.xlu0 %1429
        %v1431 = vsel %vm644, %v1411, inf
        %1432 = vmin.xlane.f32.xlu0 %v1431
        %v1433 = vpop.xlane.xlu0 %1432
        %v1434 = vsel %vm644, %v1412, inf
        %1435 = vmin.xlane.f32.xlu0 %v1434
        %v1436 = vpop.xlane.xlu0 %1435
        %vm1437 = vcmp.le.f32.partialorder %v1405, %v1415
        %vm1438 = vcmp.le.f32.partialorder %v1406, %v1418
        %vm1439 = vcmp.le.f32.partialorder %v1407, %v1421
        %vm1440 = vcmp.le.f32.partialorder %v1408, %v1424
        %vm1441 = vcmp.le.f32.partialorder %v1409, %v1427
        %vm1442 = vcmp.le.f32.partialorder %v1410, %v1430
        %vm1443 = vcmp.le.f32.partialorder %v1411, %v1433
        %vm1444 = vcmp.le.f32.partialorder %v1412, %v1436
        %v1445 = vsel %vm1437, 1, 0
        %v1446 = vsel %vm1438, 1, 0
        %v1447 = vsel %vm1439, 1, 0
        %v1448 = vsel %vm1440, 1, 0
        %v1449 = vsel %vm1441, 1, 0
        %v1450 = vsel %vm1442, 1, 0
        %v1451 = vsel %vm1443, 1, 0
        %v1452 = vsel %vm1444, 1, 0
        %v1453 = vcvt.s32.f32 %v1445
        %v1454 = vcvt.s32.f32 %v1446
        %v1455 = vcvt.s32.f32 %v1447
        %v1456 = vcvt.s32.f32 %v1448
        %v1457 = vcvt.s32.f32 %v1449
        %v1458 = vcvt.s32.f32 %v1450
        %v1459 = vcvt.s32.f32 %v1451
        %v1460 = vcvt.s32.f32 %v1452
        %v1461 = vsel %vm644, %v1453, 0.0
        %1462 = vadd.xlane.f32.xlu0 %v1461
        %v1463 = vpop.xlane.xlu0 %1462
        %v1464 = vsel %vm644, %v1454, 0.0
        %1465 = vadd.xlane.f32.xlu0 %v1464
        %v1466 = vpop.xlane.xlu0 %1465
        %v1467 = vsel %vm644, %v1455, 0.0
        %1468 = vadd.xlane.f32.xlu0 %v1467
        %v1469 = vpop.xlane.xlu0 %1468
        %v1470 = vsel %vm644, %v1456, 0.0
        %1471 = vadd.xlane.f32.xlu0 %v1470
        %v1472 = vpop.xlane.xlu0 %1471
        %v1473 = vsel %vm644, %v1457, 0.0
        %1474 = vadd.xlane.f32.xlu0 %v1473
        %v1475 = vpop.xlane.xlu0 %1474
        %v1476 = vsel %vm644, %v1458, 0.0
        %1477 = vadd.xlane.f32.xlu0 %v1476
        %v1478 = vpop.xlane.xlu0 %1477
        %v1479 = vsel %vm644, %v1459, 0.0
        %1480 = vadd.xlane.f32.xlu0 %v1479
        %v1481 = vpop.xlane.xlu0 %1480
        %v1482 = vsel %vm644, %v1460, 0.0
        %1483 = vadd.xlane.f32.xlu0 %v1482
        %v1484 = vpop.xlane.xlu0 %1483
        %v1485 = vmax.f32 %v1463, 1.0
        %v1486 = vmax.f32 %v1466, 1.0
        %v1487 = vmax.f32 %v1469, 1.0
        %v1488 = vmax.f32 %v1472, 1.0
        %v1489 = vmax.f32 %v1475, 1.0
        %v1490 = vmax.f32 %v1478, 1.0
        %v1491 = vmax.f32 %v1481, 1.0
        %v1492 = vmax.f32 %v1484, 1.0
        %v1493 = vrcp.pop %v1485
        %v1494 = vmul.f32 %v1453, %v1493
        %v1495 = vrcp.pop %v1486
        %v1496 = vmul.f32 %v1454, %v1495
        %v1497 = vrcp.pop %v1487
        %v1498 = vmul.f32 %v1455, %v1497
        %v1499 = vrcp.pop %v1488
        %v1500 = vmul.f32 %v1456, %v1499
        %v1501 = vrcp.pop %v1489
        %v1502 = vmul.f32 %v1457, %v1501
        %v1503 = vrcp.pop %v1490
        %v1504 = vmul.f32 %v1458, %v1503
        %v1505 = vrcp.pop %v1491
        %v1506 = vmul.f32 %v1459, %v1505
        %v1507 = vrcp.pop %v1492
        %v1508 = vmul.f32 %v1460, %v1507
        %v1510 = vsel %vm644, %v1494, 0
        %v1513 = vsel %vm644, %v1496, 0
        %v1516 = vsel %vm644, %v1498, 0
        %v1519 = vsel %vm644, %v1500, 0
        %v1522 = vsel %vm644, %v1502, 0
        %v1525 = vsel %vm644, %v1504, 0
        %v1528 = vsel %vm644, %v1506, 0
        %v1531 = vsel %vm644, %v1508, 0
        %1533 = vmatprep.subr.mxu0 0.0
        %1534 = vmatpush1.msra.mxu0 0.0
        %1535 = vmatprep.subr.mxu0 0.0
        %1536 = vmatpush1.msra.mxu0 0.0
        %1537 = vmatprep.subr.mxu0 0.0
        %1538 = vmatpush1.msra.mxu0 0.0
        %1539 = vmatprep.subr.mxu0 0.0
        %1540 = vmatpush1.msra.mxu0 0.0
        %1541 = vmatprep.subr.mxu0 0.0
        %1542 = vmatpush1.msra.mxu0 0.0
        %1543 = vmatprep.subr.mxu0 0.0
        %1544 = vmatpush1.msra.mxu0 0.0
        %1545 = vmatprep.subr.mxu0 0.0
        %1546 = vmatpush1.msra.mxu0 0.0
        %1547 = vmatprep.subr.mxu0 0.0
        %1548 = vmatpush1.msra.mxu0 0.0
        %1549 = vmatprep.subr.mxu0 0.0
        %1550 = vmatpush1.msra.mxu0 %v437
        %1551 = vmatprep.subr.mxu0 0.0
        %1552 = vmatpush1.msra.mxu0 %v432
        %1553 = vmatprep.subr.mxu0 0.0
        %1554 = vmatpush1.msra.mxu0 %v427
        %1555 = vmatprep.subr.mxu0 0.0
        %1556 = vmatpush1.msra.mxu0 %v422
        %1557 = vmatprep.subr.mxu0 0.0
        %1558 = vmatpush1.msra.mxu0 %v417
        %1559 = vmatprep.subr.mxu0 0.0
        %1560 = vmatpush1.msra.mxu0 %v412
        %1561 = vmatprep.subr.mxu0 0.0
        %1562 = vmatpush1.msra.mxu0 %v407
        %1563 = vmatprep.subr.mxu0 0.0
        %1564 = vmatpush1.msra.mxu0 %v402
        %1565 = vmatprep.subr.mxu0 0.0
        %1566 = vmatpush2.msra.mxu0 0.0
        %1567 = vmatprep.subr.mxu0 0.0
        %1568 = vmatpush2.msra.mxu0 0.0
        %1569 = vmatprep.subr.mxu0 0.0
        %1570 = vmatpush2.msra.mxu0 0.0
        %1571 = vmatprep.subr.mxu0 0.0
        %1572 = vmatpush2.msra.mxu0 0.0
        %1573 = vmatprep.subr.mxu0 0.0
        %1574 = vmatpush2.msra.mxu0 0.0
        %1575 = vmatprep.subr.mxu0 0.0
        %1576 = vmatpush2.msra.mxu0 0.0
        %1577 = vmatprep.subr.mxu0 0.0
        %1578 = vmatpush2.msra.mxu0 0.0
        %1579 = vmatprep.subr.mxu0 0.0
        %1580 = vmatpush2.msra.mxu0 0.0
        %1581 = vmatprep.subr.mxu0 0.0
        %1582 = vmatpush2.msra.mxu0 0.0
        %1583 = vmatprep.subr.mxu0 0.0
        %1584 = vmatpush2.msra.mxu0 0.0
        %1585 = vmatprep.subr.mxu0 0.0
        %1586 = vmatpush2.msra.mxu0 0.0
        %1587 = vmatprep.subr.mxu0 0.0
        %1588 = vmatpush2.msra.mxu0 0.0
        %1589 = vmatprep.subr.mxu0 0.0
        %1590 = vmatpush2.msra.mxu0 0.0
        %1591 = vmatprep.subr.mxu0 0.0
        %1592 = vmatpush2.msra.mxu0 0.0
        %1593 = vmatprep.subr.mxu0 0.0
        %1594 = vmatpush2.msra.mxu0 0.0
        %1595 = vmatprep.subr.mxu0 0.0
        %1596 = vmatpush2.msra.mxu0 0.0
        %1597 = vmatprep.mubr.f32.mxu0 0.0
        %1598 = vmatmul.mubr.f32.gmra.mxu0 %v1510
        %v1599 = vpop.f32.mrf.mxu0
        %v1600 = vadd.f32 0.0, %v1599
        %v1601 = vpop.f32.mrf.mxu0
        %1602 = vmatprep.mubr.f32.mxu0 0.0
        %1603 = vmatmul.mubr.f32.gmra.mxu0 %v1513
        %v1604 = vpop.f32.mrf.mxu0
        %v1605 = vadd.f32 0.0, %v1604
        %v1606 = vpop.f32.mrf.mxu0
        %1607 = vmatprep.mubr.f32.mxu0 0.0
        %1608 = vmatmul.mubr.f32.gmra.mxu0 %v1516
        %v1609 = vpop.f32.mrf.mxu0
        %v1610 = vadd.f32 0.0, %v1609
        %v1611 = vpop.f32.mrf.mxu0
        %1612 = vmatprep.mubr.f32.mxu0 0.0
        %1613 = vmatmul.mubr.f32.gmra.mxu0 %v1519
        %v1614 = vpop.f32.mrf.mxu0
        %v1615 = vadd.f32 0.0, %v1614
        %v1616 = vpop.f32.mrf.mxu0
        %1617 = vmatprep.mubr.f32.mxu0 0.0
        %1618 = vmatmul.mubr.f32.gmra.mxu0 %v1522
        %v1619 = vpop.f32.mrf.mxu0
        %v1620 = vadd.f32 0.0, %v1619
        %v1621 = vpop.f32.mrf.mxu0
        %1622 = vmatprep.mubr.f32.mxu0 0.0
        %1623 = vmatmul.mubr.f32.gmra.mxu0 %v1525
        %v1624 = vpop.f32.mrf.mxu0
        %v1625 = vadd.f32 0.0, %v1624
        %v1626 = vpop.f32.mrf.mxu0
        %1627 = vmatprep.mubr.f32.mxu0 0.0
        %1628 = vmatmul.mubr.f32.gmra.mxu0 %v1528
        %v1629 = vpop.f32.mrf.mxu0
        %v1630 = vadd.f32 0.0, %v1629
        %v1631 = vpop.f32.mrf.mxu0
        %1632 = vmatprep.mubr.f32.mxu0 0.0
        %1633 = vmatmul.mubr.f32.gmra.mxu0 %v1531
        %v1634 = vpop.f32.mrf.mxu0
        %v1635 = vadd.f32 0.0, %v1634
        %v1636 = vpop.f32.mrf.mxu0
        %1637 = vdwg.mxu0
        %v1638 = vmax.f32 %v1397, %v1600
        %v1639 = vmax.f32 %v1398, %v1605
        %v1640 = vmax.f32 %v1399, %v1610
        %v1641 = vmax.f32 %v1400, %v1615
        %v1642 = vmax.f32 %v1401, %v1620
        %v1643 = vmax.f32 %v1402, %v1625
        %v1644 = vmax.f32 %v1403, %v1630
        %v1645 = vmax.f32 %v1404, %v1635
        %v1646 = vsel %vm1437, 1e+30, %v1405
        %v1647 = vsel %vm1438, 1e+30, %v1406
        %v1648 = vsel %vm1439, 1e+30, %v1407
        %v1649 = vsel %vm1440, 1e+30, %v1408
        %v1650 = vsel %vm1441, 1e+30, %v1409
        %v1651 = vsel %vm1442, 1e+30, %v1410
        %v1652 = vsel %vm1443, 1e+30, %v1411
        %v1653 = vsel %vm1444, 1e+30, %v1412
        %v1654 = vsel %vm644, %v1646, inf
        %1655 = vmin.xlane.f32.xlu0 %v1654
        %v1656 = vpop.xlane.xlu0 %1655
        %v1657 = vsel %vm644, %v1647, inf
        %1658 = vmin.xlane.f32.xlu0 %v1657
        %v1659 = vpop.xlane.xlu0 %1658
        %v1660 = vsel %vm644, %v1648, inf
        %1661 = vmin.xlane.f32.xlu0 %v1660
        %v1662 = vpop.xlane.xlu0 %1661
        %v1663 = vsel %vm644, %v1649, inf
        %1664 = vmin.xlane.f32.xlu0 %v1663
        %v1665 = vpop.xlane.xlu0 %1664
        %v1666 = vsel %vm644, %v1650, inf
        %1667 = vmin.xlane.f32.xlu0 %v1666
        %v1668 = vpop.xlane.xlu0 %1667
        %v1669 = vsel %vm644, %v1651, inf
        %1670 = vmin.xlane.f32.xlu0 %v1669
        %v1671 = vpop.xlane.xlu0 %1670
        %v1672 = vsel %vm644, %v1652, inf
        %1673 = vmin.xlane.f32.xlu0 %v1672
        %v1674 = vpop.xlane.xlu0 %1673
        %v1675 = vsel %vm644, %v1653, inf
        %1676 = vmin.xlane.f32.xlu0 %v1675
        %v1677 = vpop.xlane.xlu0 %1676
        %vm1678 = vcmp.le.f32.partialorder %v1646, %v1656
        %vm1679 = vcmp.le.f32.partialorder %v1647, %v1659
        %vm1680 = vcmp.le.f32.partialorder %v1648, %v1662
        %vm1681 = vcmp.le.f32.partialorder %v1649, %v1665
        %vm1682 = vcmp.le.f32.partialorder %v1650, %v1668
        %vm1683 = vcmp.le.f32.partialorder %v1651, %v1671
        %vm1684 = vcmp.le.f32.partialorder %v1652, %v1674
        %vm1685 = vcmp.le.f32.partialorder %v1653, %v1677
        %v1686 = vsel %vm1678, 1, 0
        %v1687 = vsel %vm1679, 1, 0
        %v1688 = vsel %vm1680, 1, 0
        %v1689 = vsel %vm1681, 1, 0
        %v1690 = vsel %vm1682, 1, 0
        %v1691 = vsel %vm1683, 1, 0
        %v1692 = vsel %vm1684, 1, 0
        %v1693 = vsel %vm1685, 1, 0
        %v1694 = vcvt.s32.f32 %v1686
        %v1695 = vcvt.s32.f32 %v1687
        %v1696 = vcvt.s32.f32 %v1688
        %v1697 = vcvt.s32.f32 %v1689
        %v1698 = vcvt.s32.f32 %v1690
        %v1699 = vcvt.s32.f32 %v1691
        %v1700 = vcvt.s32.f32 %v1692
        %v1701 = vcvt.s32.f32 %v1693
        %v1702 = vsel %vm644, %v1694, 0.0
        %1703 = vadd.xlane.f32.xlu0 %v1702
        %v1704 = vpop.xlane.xlu0 %1703
        %v1705 = vsel %vm644, %v1695, 0.0
        %1706 = vadd.xlane.f32.xlu0 %v1705
        %v1707 = vpop.xlane.xlu0 %1706
        %v1708 = vsel %vm644, %v1696, 0.0
        %1709 = vadd.xlane.f32.xlu0 %v1708
        %v1710 = vpop.xlane.xlu0 %1709
        %v1711 = vsel %vm644, %v1697, 0.0
        %1712 = vadd.xlane.f32.xlu0 %v1711
        %v1713 = vpop.xlane.xlu0 %1712
        %v1714 = vsel %vm644, %v1698, 0.0
        %1715 = vadd.xlane.f32.xlu0 %v1714
        %v1716 = vpop.xlane.xlu0 %1715
        %v1717 = vsel %vm644, %v1699, 0.0
        %1718 = vadd.xlane.f32.xlu0 %v1717
        %v1719 = vpop.xlane.xlu0 %1718
        %v1720 = vsel %vm644, %v1700, 0.0
        %1721 = vadd.xlane.f32.xlu0 %v1720
        %v1722 = vpop.xlane.xlu0 %1721
        %v1723 = vsel %vm644, %v1701, 0.0
        %1724 = vadd.xlane.f32.xlu0 %v1723
        %v1725 = vpop.xlane.xlu0 %1724
        %v1726 = vmax.f32 %v1704, 1.0
        %v1727 = vmax.f32 %v1707, 1.0
        %v1728 = vmax.f32 %v1710, 1.0
        %v1729 = vmax.f32 %v1713, 1.0
        %v1730 = vmax.f32 %v1716, 1.0
        %v1731 = vmax.f32 %v1719, 1.0
        %v1732 = vmax.f32 %v1722, 1.0
        %v1733 = vmax.f32 %v1725, 1.0
        %v1734 = vrcp.pop %v1726
        %v1735 = vmul.f32 %v1694, %v1734
        %v1736 = vrcp.pop %v1727
        %v1737 = vmul.f32 %v1695, %v1736
        %v1738 = vrcp.pop %v1728
        %v1739 = vmul.f32 %v1696, %v1738
        %v1740 = vrcp.pop %v1729
        %v1741 = vmul.f32 %v1697, %v1740
        %v1742 = vrcp.pop %v1730
        %v1743 = vmul.f32 %v1698, %v1742
        %v1744 = vrcp.pop %v1731
        %v1745 = vmul.f32 %v1699, %v1744
        %v1746 = vrcp.pop %v1732
        %v1747 = vmul.f32 %v1700, %v1746
        %v1748 = vrcp.pop %v1733
        %v1749 = vmul.f32 %v1701, %v1748
        %v1751 = vsel %vm644, %v1735, 0
        %v1754 = vsel %vm644, %v1737, 0
        %v1757 = vsel %vm644, %v1739, 0
        %v1760 = vsel %vm644, %v1741, 0
        %v1763 = vsel %vm644, %v1743, 0
        %v1766 = vsel %vm644, %v1745, 0
        %v1769 = vsel %vm644, %v1747, 0
        %v1772 = vsel %vm644, %v1749, 0
        %1774 = vmatprep.subr.mxu0 0.0
        %1775 = vmatpush1.msra.mxu0 0.0
        %1776 = vmatprep.subr.mxu0 0.0
        %1777 = vmatpush1.msra.mxu0 0.0
        %1778 = vmatprep.subr.mxu0 0.0
        %1779 = vmatpush1.msra.mxu0 0.0
        %1780 = vmatprep.subr.mxu0 0.0
        %1781 = vmatpush1.msra.mxu0 0.0
        %1782 = vmatprep.subr.mxu0 0.0
        %1783 = vmatpush1.msra.mxu0 0.0
        %1784 = vmatprep.subr.mxu0 0.0
        %1785 = vmatpush1.msra.mxu0 0.0
        %1786 = vmatprep.subr.mxu0 0.0
        %1787 = vmatpush1.msra.mxu0 0.0
        %1788 = vmatprep.subr.mxu0 0.0
        %1789 = vmatpush1.msra.mxu0 0.0
        %1790 = vmatprep.subr.mxu0 0.0
        %1791 = vmatpush1.msra.mxu0 %v437
        %1792 = vmatprep.subr.mxu0 0.0
        %1793 = vmatpush1.msra.mxu0 %v432
        %1794 = vmatprep.subr.mxu0 0.0
        %1795 = vmatpush1.msra.mxu0 %v427
        %1796 = vmatprep.subr.mxu0 0.0
        %1797 = vmatpush1.msra.mxu0 %v422
        %1798 = vmatprep.subr.mxu0 0.0
        %1799 = vmatpush1.msra.mxu0 %v417
        %1800 = vmatprep.subr.mxu0 0.0
        %1801 = vmatpush1.msra.mxu0 %v412
        %1802 = vmatprep.subr.mxu0 0.0
        %1803 = vmatpush1.msra.mxu0 %v407
        %1804 = vmatprep.subr.mxu0 0.0
        %1805 = vmatpush1.msra.mxu0 %v402
        %1806 = vmatprep.subr.mxu0 0.0
        %1807 = vmatpush2.msra.mxu0 0.0
        %1808 = vmatprep.subr.mxu0 0.0
        %1809 = vmatpush2.msra.mxu0 0.0
        %1810 = vmatprep.subr.mxu0 0.0
        %1811 = vmatpush2.msra.mxu0 0.0
        %1812 = vmatprep.subr.mxu0 0.0
        %1813 = vmatpush2.msra.mxu0 0.0
        %1814 = vmatprep.subr.mxu0 0.0
        %1815 = vmatpush2.msra.mxu0 0.0
        %1816 = vmatprep.subr.mxu0 0.0
        %1817 = vmatpush2.msra.mxu0 0.0
        %1818 = vmatprep.subr.mxu0 0.0
        %1819 = vmatpush2.msra.mxu0 0.0
        %1820 = vmatprep.subr.mxu0 0.0
        %1821 = vmatpush2.msra.mxu0 0.0
        %1822 = vmatprep.subr.mxu0 0.0
        %1823 = vmatpush2.msra.mxu0 0.0
        %1824 = vmatprep.subr.mxu0 0.0
        %1825 = vmatpush2.msra.mxu0 0.0
        %1826 = vmatprep.subr.mxu0 0.0
        %1827 = vmatpush2.msra.mxu0 0.0
        %1828 = vmatprep.subr.mxu0 0.0
        %1829 = vmatpush2.msra.mxu0 0.0
        %1830 = vmatprep.subr.mxu0 0.0
        %1831 = vmatpush2.msra.mxu0 0.0
        %1832 = vmatprep.subr.mxu0 0.0
        %1833 = vmatpush2.msra.mxu0 0.0
        %1834 = vmatprep.subr.mxu0 0.0
        %1835 = vmatpush2.msra.mxu0 0.0
        %1836 = vmatprep.subr.mxu0 0.0
        %1837 = vmatpush2.msra.mxu0 0.0
        %1838 = vmatprep.mubr.f32.mxu0 0.0
        %1839 = vmatmul.mubr.f32.gmra.mxu0 %v1751
        %v1840 = vpop.f32.mrf.mxu0
        %v1841 = vadd.f32 0.0, %v1840
        %v1842 = vpop.f32.mrf.mxu0
        %1843 = vmatprep.mubr.f32.mxu0 0.0
        %1844 = vmatmul.mubr.f32.gmra.mxu0 %v1754
        %v1845 = vpop.f32.mrf.mxu0
        %v1846 = vadd.f32 0.0, %v1845
        %v1847 = vpop.f32.mrf.mxu0
        %1848 = vmatprep.mubr.f32.mxu0 0.0
        %1849 = vmatmul.mubr.f32.gmra.mxu0 %v1757
        %v1850 = vpop.f32.mrf.mxu0
        %v1851 = vadd.f32 0.0, %v1850
        %v1852 = vpop.f32.mrf.mxu0
        %1853 = vmatprep.mubr.f32.mxu0 0.0
        %1854 = vmatmul.mubr.f32.gmra.mxu0 %v1760
        %v1855 = vpop.f32.mrf.mxu0
        %v1856 = vadd.f32 0.0, %v1855
        %v1857 = vpop.f32.mrf.mxu0
        %1858 = vmatprep.mubr.f32.mxu0 0.0
        %1859 = vmatmul.mubr.f32.gmra.mxu0 %v1763
        %v1860 = vpop.f32.mrf.mxu0
        %v1861 = vadd.f32 0.0, %v1860
        %v1862 = vpop.f32.mrf.mxu0
        %1863 = vmatprep.mubr.f32.mxu0 0.0
        %1864 = vmatmul.mubr.f32.gmra.mxu0 %v1766
        %v1865 = vpop.f32.mrf.mxu0
        %v1866 = vadd.f32 0.0, %v1865
        %v1867 = vpop.f32.mrf.mxu0
        %1868 = vmatprep.mubr.f32.mxu0 0.0
        %1869 = vmatmul.mubr.f32.gmra.mxu0 %v1769
        %v1870 = vpop.f32.mrf.mxu0
        %v1871 = vadd.f32 0.0, %v1870
        %v1872 = vpop.f32.mrf.mxu0
        %1873 = vmatprep.mubr.f32.mxu0 0.0
        %1874 = vmatmul.mubr.f32.gmra.mxu0 %v1772
        %v1875 = vpop.f32.mrf.mxu0
        %v1876 = vadd.f32 0.0, %v1875
        %v1877 = vpop.f32.mrf.mxu0
        %1878 = vdwg.mxu0
        %v1879 = vmax.f32 %v1638, %v1841
        %v1880 = vmax.f32 %v1639, %v1846
        %v1881 = vmax.f32 %v1640, %v1851
        %v1882 = vmax.f32 %v1641, %v1856
        %v1883 = vmax.f32 %v1642, %v1861
        %v1884 = vmax.f32 %v1643, %v1866
        %v1885 = vmax.f32 %v1644, %v1871
        %v1886 = vmax.f32 %v1645, %v1876
        %v1887 = vsel %vm1678, 1e+30, %v1646
        %v1888 = vsel %vm1679, 1e+30, %v1647
        %v1889 = vsel %vm1680, 1e+30, %v1648
        %v1890 = vsel %vm1681, 1e+30, %v1649
        %v1891 = vsel %vm1682, 1e+30, %v1650
        %v1892 = vsel %vm1683, 1e+30, %v1651
        %v1893 = vsel %vm1684, 1e+30, %v1652
        %v1894 = vsel %vm1685, 1e+30, %v1653
        %v1895 = vsel %vm644, %v1887, inf
        %1896 = vmin.xlane.f32.xlu0 %v1895
        %v1897 = vpop.xlane.xlu0 %1896
        %v1898 = vsel %vm644, %v1888, inf
        %1899 = vmin.xlane.f32.xlu0 %v1898
        %v1900 = vpop.xlane.xlu0 %1899
        %v1901 = vsel %vm644, %v1889, inf
        %1902 = vmin.xlane.f32.xlu0 %v1901
        %v1903 = vpop.xlane.xlu0 %1902
        %v1904 = vsel %vm644, %v1890, inf
        %1905 = vmin.xlane.f32.xlu0 %v1904
        %v1906 = vpop.xlane.xlu0 %1905
        %v1907 = vsel %vm644, %v1891, inf
        %1908 = vmin.xlane.f32.xlu0 %v1907
        %v1909 = vpop.xlane.xlu0 %1908
        %v1910 = vsel %vm644, %v1892, inf
        %1911 = vmin.xlane.f32.xlu0 %v1910
        %v1912 = vpop.xlane.xlu0 %1911
        %v1913 = vsel %vm644, %v1893, inf
        %1914 = vmin.xlane.f32.xlu0 %v1913
        %v1915 = vpop.xlane.xlu0 %1914
        %v1916 = vsel %vm644, %v1894, inf
        %1917 = vmin.xlane.f32.xlu0 %v1916
        %v1918 = vpop.xlane.xlu0 %1917
        %vm1919 = vcmp.le.f32.partialorder %v1887, %v1897
        %vm1920 = vcmp.le.f32.partialorder %v1888, %v1900
        %vm1921 = vcmp.le.f32.partialorder %v1889, %v1903
        %vm1922 = vcmp.le.f32.partialorder %v1890, %v1906
        %vm1923 = vcmp.le.f32.partialorder %v1891, %v1909
        %vm1924 = vcmp.le.f32.partialorder %v1892, %v1912
        %vm1925 = vcmp.le.f32.partialorder %v1893, %v1915
        %vm1926 = vcmp.le.f32.partialorder %v1894, %v1918
        %v1927 = vsel %vm1919, 1, 0
        %v1928 = vsel %vm1920, 1, 0
        %v1929 = vsel %vm1921, 1, 0
        %v1930 = vsel %vm1922, 1, 0
        %v1931 = vsel %vm1923, 1, 0
        %v1932 = vsel %vm1924, 1, 0
        %v1933 = vsel %vm1925, 1, 0
        %v1934 = vsel %vm1926, 1, 0
        %v1935 = vcvt.s32.f32 %v1927
        %v1936 = vcvt.s32.f32 %v1928
        %v1937 = vcvt.s32.f32 %v1929
        %v1938 = vcvt.s32.f32 %v1930
        %v1939 = vcvt.s32.f32 %v1931
        %v1940 = vcvt.s32.f32 %v1932
        %v1941 = vcvt.s32.f32 %v1933
        %v1942 = vcvt.s32.f32 %v1934
        %v1943 = vsel %vm644, %v1935, 0.0
        %1944 = vadd.xlane.f32.xlu0 %v1943
        %v1945 = vpop.xlane.xlu0 %1944
        %v1946 = vsel %vm644, %v1936, 0.0
        %1947 = vadd.xlane.f32.xlu0 %v1946
        %v1948 = vpop.xlane.xlu0 %1947
        %v1949 = vsel %vm644, %v1937, 0.0
        %1950 = vadd.xlane.f32.xlu0 %v1949
        %v1951 = vpop.xlane.xlu0 %1950
        %v1952 = vsel %vm644, %v1938, 0.0
        %1953 = vadd.xlane.f32.xlu0 %v1952
        %v1954 = vpop.xlane.xlu0 %1953
        %v1955 = vsel %vm644, %v1939, 0.0
        %1956 = vadd.xlane.f32.xlu0 %v1955
        %v1957 = vpop.xlane.xlu0 %1956
        %v1958 = vsel %vm644, %v1940, 0.0
        %1959 = vadd.xlane.f32.xlu0 %v1958
        %v1960 = vpop.xlane.xlu0 %1959
        %v1961 = vsel %vm644, %v1941, 0.0
        %1962 = vadd.xlane.f32.xlu0 %v1961
        %v1963 = vpop.xlane.xlu0 %1962
        %v1964 = vsel %vm644, %v1942, 0.0
        %1965 = vadd.xlane.f32.xlu0 %v1964
        %v1966 = vpop.xlane.xlu0 %1965
        %v1967 = vmax.f32 %v1945, 1.0
        %v1968 = vmax.f32 %v1948, 1.0
        %v1969 = vmax.f32 %v1951, 1.0
        %v1970 = vmax.f32 %v1954, 1.0
        %v1971 = vmax.f32 %v1957, 1.0
        %v1972 = vmax.f32 %v1960, 1.0
        %v1973 = vmax.f32 %v1963, 1.0
        %v1974 = vmax.f32 %v1966, 1.0
        %v1975 = vrcp.pop %v1967
        %v1976 = vmul.f32 %v1935, %v1975
        %v1977 = vrcp.pop %v1968
        %v1978 = vmul.f32 %v1936, %v1977
        %v1979 = vrcp.pop %v1969
        %v1980 = vmul.f32 %v1937, %v1979
        %v1981 = vrcp.pop %v1970
        %v1982 = vmul.f32 %v1938, %v1981
        %v1983 = vrcp.pop %v1971
        %v1984 = vmul.f32 %v1939, %v1983
        %v1985 = vrcp.pop %v1972
        %v1986 = vmul.f32 %v1940, %v1985
        %v1987 = vrcp.pop %v1973
        %v1988 = vmul.f32 %v1941, %v1987
        %v1989 = vrcp.pop %v1974
        %v1990 = vmul.f32 %v1942, %v1989
        %v1992 = vsel %vm644, %v1976, 0
        %v1995 = vsel %vm644, %v1978, 0
        %v1998 = vsel %vm644, %v1980, 0
        %v2001 = vsel %vm644, %v1982, 0
        %v2004 = vsel %vm644, %v1984, 0
        %v2007 = vsel %vm644, %v1986, 0
        %v2010 = vsel %vm644, %v1988, 0
        %v2013 = vsel %vm644, %v1990, 0
        %2015 = vmatprep.subr.mxu0 0.0
        %2016 = vmatpush1.msra.mxu0 0.0
        %2017 = vmatprep.subr.mxu0 0.0
        %2018 = vmatpush1.msra.mxu0 0.0
        %2019 = vmatprep.subr.mxu0 0.0
        %2020 = vmatpush1.msra.mxu0 0.0
        %2021 = vmatprep.subr.mxu0 0.0
        %2022 = vmatpush1.msra.mxu0 0.0
        %2023 = vmatprep.subr.mxu0 0.0
        %2024 = vmatpush1.msra.mxu0 0.0
        %2025 = vmatprep.subr.mxu0 0.0
        %2026 = vmatpush1.msra.mxu0 0.0
        %2027 = vmatprep.subr.mxu0 0.0
        %2028 = vmatpush1.msra.mxu0 0.0
        %2029 = vmatprep.subr.mxu0 0.0
        %2030 = vmatpush1.msra.mxu0 0.0
        %2031 = vmatprep.subr.mxu0 0.0
        %2032 = vmatpush1.msra.mxu0 %v437
        %2033 = vmatprep.subr.mxu0 0.0
        %2034 = vmatpush1.msra.mxu0 %v432
        %2035 = vmatprep.subr.mxu0 0.0
        %2036 = vmatpush1.msra.mxu0 %v427
        %2037 = vmatprep.subr.mxu0 0.0
        %2038 = vmatpush1.msra.mxu0 %v422
        %2039 = vmatprep.subr.mxu0 0.0
        %2040 = vmatpush1.msra.mxu0 %v417
        %2041 = vmatprep.subr.mxu0 0.0
        %2042 = vmatpush1.msra.mxu0 %v412
        %2043 = vmatprep.subr.mxu0 0.0
        %2044 = vmatpush1.msra.mxu0 %v407
        %2045 = vmatprep.subr.mxu0 0.0
        %2046 = vmatpush1.msra.mxu0 %v402
        %2047 = vmatprep.subr.mxu0 0.0
        %2048 = vmatpush2.msra.mxu0 0.0
        %2049 = vmatprep.subr.mxu0 0.0
        %2050 = vmatpush2.msra.mxu0 0.0
        %2051 = vmatprep.subr.mxu0 0.0
        %2052 = vmatpush2.msra.mxu0 0.0
        %2053 = vmatprep.subr.mxu0 0.0
        %2054 = vmatpush2.msra.mxu0 0.0
        %2055 = vmatprep.subr.mxu0 0.0
        %2056 = vmatpush2.msra.mxu0 0.0
        %2057 = vmatprep.subr.mxu0 0.0
        %2058 = vmatpush2.msra.mxu0 0.0
        %2059 = vmatprep.subr.mxu0 0.0
        %2060 = vmatpush2.msra.mxu0 0.0
        %2061 = vmatprep.subr.mxu0 0.0
        %2062 = vmatpush2.msra.mxu0 0.0
        %2063 = vmatprep.subr.mxu0 0.0
        %2064 = vmatpush2.msra.mxu0 0.0
        %2065 = vmatprep.subr.mxu0 0.0
        %2066 = vmatpush2.msra.mxu0 0.0
        %2067 = vmatprep.subr.mxu0 0.0
        %2068 = vmatpush2.msra.mxu0 0.0
        %2069 = vmatprep.subr.mxu0 0.0
        %2070 = vmatpush2.msra.mxu0 0.0
        %2071 = vmatprep.subr.mxu0 0.0
        %2072 = vmatpush2.msra.mxu0 0.0
        %2073 = vmatprep.subr.mxu0 0.0
        %2074 = vmatpush2.msra.mxu0 0.0
        %2075 = vmatprep.subr.mxu0 0.0
        %2076 = vmatpush2.msra.mxu0 0.0
        %2077 = vmatprep.subr.mxu0 0.0
        %2078 = vmatpush2.msra.mxu0 0.0
        %2079 = vmatprep.mubr.f32.mxu0 0.0
        %2080 = vmatmul.mubr.f32.gmra.mxu0 %v1992
        %v2081 = vpop.f32.mrf.mxu0
        %v2082 = vadd.f32 0.0, %v2081
        %v2083 = vpop.f32.mrf.mxu0
        %2084 = vmatprep.mubr.f32.mxu0 0.0
        %2085 = vmatmul.mubr.f32.gmra.mxu0 %v1995
        %v2086 = vpop.f32.mrf.mxu0
        %v2087 = vadd.f32 0.0, %v2086
        %v2088 = vpop.f32.mrf.mxu0
        %2089 = vmatprep.mubr.f32.mxu0 0.0
        %2090 = vmatmul.mubr.f32.gmra.mxu0 %v1998
        %v2091 = vpop.f32.mrf.mxu0
        %v2092 = vadd.f32 0.0, %v2091
        %v2093 = vpop.f32.mrf.mxu0
        %2094 = vmatprep.mubr.f32.mxu0 0.0
        %2095 = vmatmul.mubr.f32.gmra.mxu0 %v2001
        %v2096 = vpop.f32.mrf.mxu0
        %v2097 = vadd.f32 0.0, %v2096
        %v2098 = vpop.f32.mrf.mxu0
        %2099 = vmatprep.mubr.f32.mxu0 0.0
        %2100 = vmatmul.mubr.f32.gmra.mxu0 %v2004
        %v2101 = vpop.f32.mrf.mxu0
        %v2102 = vadd.f32 0.0, %v2101
        %v2103 = vpop.f32.mrf.mxu0
        %2104 = vmatprep.mubr.f32.mxu0 0.0
        %2105 = vmatmul.mubr.f32.gmra.mxu0 %v2007
        %v2106 = vpop.f32.mrf.mxu0
        %v2107 = vadd.f32 0.0, %v2106
        %v2108 = vpop.f32.mrf.mxu0
        %2109 = vmatprep.mubr.f32.mxu0 0.0
        %2110 = vmatmul.mubr.f32.gmra.mxu0 %v2010
        %v2111 = vpop.f32.mrf.mxu0
        %v2112 = vadd.f32 0.0, %v2111
        %v2113 = vpop.f32.mrf.mxu0
        %2114 = vmatprep.mubr.f32.mxu0 0.0
        %2115 = vmatmul.mubr.f32.gmra.mxu0 %v2013
        %v2116 = vpop.f32.mrf.mxu0
        %v2117 = vadd.f32 0.0, %v2116
        %v2118 = vpop.f32.mrf.mxu0
        %2119 = vdwg.mxu0
        %v2120 = vmax.f32 %v1879, %v2082
        %v2121 = vmax.f32 %v1880, %v2087
        %v2122 = vmax.f32 %v1881, %v2092
        %v2123 = vmax.f32 %v1882, %v2097
        %v2124 = vmax.f32 %v1883, %v2102
        %v2125 = vmax.f32 %v1884, %v2107
        %v2126 = vmax.f32 %v1885, %v2112
        %v2127 = vmax.f32 %v1886, %v2117
        %v2128 = vsel %vm1919, 1e+30, %v1887
        %v2129 = vsel %vm1920, 1e+30, %v1888
        %v2130 = vsel %vm1921, 1e+30, %v1889
        %v2131 = vsel %vm1922, 1e+30, %v1890
        %v2132 = vsel %vm1923, 1e+30, %v1891
        %v2133 = vsel %vm1924, 1e+30, %v1892
        %v2134 = vsel %vm1925, 1e+30, %v1893
        %v2135 = vsel %vm1926, 1e+30, %v1894
        %v2136 = vsel %vm644, %v2128, inf
        %2137 = vmin.xlane.f32.xlu0 %v2136
        %v2138 = vpop.xlane.xlu0 %2137
        %v2139 = vsel %vm644, %v2129, inf
        %2140 = vmin.xlane.f32.xlu0 %v2139
        %v2141 = vpop.xlane.xlu0 %2140
        %v2142 = vsel %vm644, %v2130, inf
        %2143 = vmin.xlane.f32.xlu0 %v2142
        %v2144 = vpop.xlane.xlu0 %2143
        %v2145 = vsel %vm644, %v2131, inf
        %2146 = vmin.xlane.f32.xlu0 %v2145
        %v2147 = vpop.xlane.xlu0 %2146
        %v2148 = vsel %vm644, %v2132, inf
        %2149 = vmin.xlane.f32.xlu0 %v2148
        %v2150 = vpop.xlane.xlu0 %2149
        %v2151 = vsel %vm644, %v2133, inf
        %2152 = vmin.xlane.f32.xlu0 %v2151
        %v2153 = vpop.xlane.xlu0 %2152
        %v2154 = vsel %vm644, %v2134, inf
        %2155 = vmin.xlane.f32.xlu0 %v2154
        %v2156 = vpop.xlane.xlu0 %2155
        %v2157 = vsel %vm644, %v2135, inf
        %2158 = vmin.xlane.f32.xlu0 %v2157
        %v2159 = vpop.xlane.xlu0 %2158
        %vm2160 = vcmp.le.f32.partialorder %v2128, %v2138
        %vm2161 = vcmp.le.f32.partialorder %v2129, %v2141
        %vm2162 = vcmp.le.f32.partialorder %v2130, %v2144
        %vm2163 = vcmp.le.f32.partialorder %v2131, %v2147
        %vm2164 = vcmp.le.f32.partialorder %v2132, %v2150
        %vm2165 = vcmp.le.f32.partialorder %v2133, %v2153
        %vm2166 = vcmp.le.f32.partialorder %v2134, %v2156
        %vm2167 = vcmp.le.f32.partialorder %v2135, %v2159
        %v2168 = vsel %vm2160, 1, 0
        %v2169 = vsel %vm2161, 1, 0
        %v2170 = vsel %vm2162, 1, 0
        %v2171 = vsel %vm2163, 1, 0
        %v2172 = vsel %vm2164, 1, 0
        %v2173 = vsel %vm2165, 1, 0
        %v2174 = vsel %vm2166, 1, 0
        %v2175 = vsel %vm2167, 1, 0
        %v2176 = vcvt.s32.f32 %v2168
        %v2177 = vcvt.s32.f32 %v2169
        %v2178 = vcvt.s32.f32 %v2170
        %v2179 = vcvt.s32.f32 %v2171
        %v2180 = vcvt.s32.f32 %v2172
        %v2181 = vcvt.s32.f32 %v2173
        %v2182 = vcvt.s32.f32 %v2174
        %v2183 = vcvt.s32.f32 %v2175
        %v2184 = vsel %vm644, %v2176, 0.0
        %2185 = vadd.xlane.f32.xlu0 %v2184
        %v2186 = vpop.xlane.xlu0 %2185
        %v2187 = vsel %vm644, %v2177, 0.0
        %2188 = vadd.xlane.f32.xlu0 %v2187
        %v2189 = vpop.xlane.xlu0 %2188
        %v2190 = vsel %vm644, %v2178, 0.0
        %2191 = vadd.xlane.f32.xlu0 %v2190
        %v2192 = vpop.xlane.xlu0 %2191
        %v2193 = vsel %vm644, %v2179, 0.0
        %2194 = vadd.xlane.f32.xlu0 %v2193
        %v2195 = vpop.xlane.xlu0 %2194
        %v2196 = vsel %vm644, %v2180, 0.0
        %2197 = vadd.xlane.f32.xlu0 %v2196
        %v2198 = vpop.xlane.xlu0 %2197
        %v2199 = vsel %vm644, %v2181, 0.0
        %2200 = vadd.xlane.f32.xlu0 %v2199
        %v2201 = vpop.xlane.xlu0 %2200
        %v2202 = vsel %vm644, %v2182, 0.0
        %2203 = vadd.xlane.f32.xlu0 %v2202
        %v2204 = vpop.xlane.xlu0 %2203
        %v2205 = vsel %vm644, %v2183, 0.0
        %2206 = vadd.xlane.f32.xlu0 %v2205
        %v2207 = vpop.xlane.xlu0 %2206
        %v2208 = vmax.f32 %v2186, 1.0
        %v2209 = vmax.f32 %v2189, 1.0
        %v2210 = vmax.f32 %v2192, 1.0
        %v2211 = vmax.f32 %v2195, 1.0
        %v2212 = vmax.f32 %v2198, 1.0
        %v2213 = vmax.f32 %v2201, 1.0
        %v2214 = vmax.f32 %v2204, 1.0
        %v2215 = vmax.f32 %v2207, 1.0
        %v2216 = vrcp.pop %v2208
        %v2217 = vmul.f32 %v2176, %v2216
        %v2218 = vrcp.pop %v2209
        %v2219 = vmul.f32 %v2177, %v2218
        %v2220 = vrcp.pop %v2210
        %v2221 = vmul.f32 %v2178, %v2220
        %v2222 = vrcp.pop %v2211
        %v2223 = vmul.f32 %v2179, %v2222
        %v2224 = vrcp.pop %v2212
        %v2225 = vmul.f32 %v2180, %v2224
        %v2226 = vrcp.pop %v2213
        %v2227 = vmul.f32 %v2181, %v2226
        %v2228 = vrcp.pop %v2214
        %v2229 = vmul.f32 %v2182, %v2228
        %v2230 = vrcp.pop %v2215
        %v2231 = vmul.f32 %v2183, %v2230
        %v2233 = vsel %vm644, %v2217, 0
        %v2236 = vsel %vm644, %v2219, 0
        %v2239 = vsel %vm644, %v2221, 0
        %v2242 = vsel %vm644, %v2223, 0
        %v2245 = vsel %vm644, %v2225, 0
        %v2248 = vsel %vm644, %v2227, 0
        %v2251 = vsel %vm644, %v2229, 0
        %v2254 = vsel %vm644, %v2231, 0
        %2256 = vmatprep.subr.mxu0 0.0
        %2257 = vmatpush1.msra.mxu0 0.0
        %2258 = vmatprep.subr.mxu0 0.0
        %2259 = vmatpush1.msra.mxu0 0.0
        %2260 = vmatprep.subr.mxu0 0.0
        %2261 = vmatpush1.msra.mxu0 0.0
        %2262 = vmatprep.subr.mxu0 0.0
        %2263 = vmatpush1.msra.mxu0 0.0
        %2264 = vmatprep.subr.mxu0 0.0
        %2265 = vmatpush1.msra.mxu0 0.0
        %2266 = vmatprep.subr.mxu0 0.0
        %2267 = vmatpush1.msra.mxu0 0.0
        %2268 = vmatprep.subr.mxu0 0.0
        %2269 = vmatpush1.msra.mxu0 0.0
        %2270 = vmatprep.subr.mxu0 0.0
        %2271 = vmatpush1.msra.mxu0 0.0
        %2272 = vmatprep.subr.mxu0 0.0
        %2273 = vmatpush1.msra.mxu0 %v437
        %2274 = vmatprep.subr.mxu0 0.0
        %2275 = vmatpush1.msra.mxu0 %v432
        %2276 = vmatprep.subr.mxu0 0.0
        %2277 = vmatpush1.msra.mxu0 %v427
        %2278 = vmatprep.subr.mxu0 0.0
        %2279 = vmatpush1.msra.mxu0 %v422
        %2280 = vmatprep.subr.mxu0 0.0
        %2281 = vmatpush1.msra.mxu0 %v417
        %2282 = vmatprep.subr.mxu0 0.0
        %2283 = vmatpush1.msra.mxu0 %v412
        %2284 = vmatprep.subr.mxu0 0.0
        %2285 = vmatpush1.msra.mxu0 %v407
        %2286 = vmatprep.subr.mxu0 0.0
        %2287 = vmatpush1.msra.mxu0 %v402
        %2288 = vmatprep.subr.mxu0 0.0
        %2289 = vmatpush2.msra.mxu0 0.0
        %2290 = vmatprep.subr.mxu0 0.0
        %2291 = vmatpush2.msra.mxu0 0.0
        %2292 = vmatprep.subr.mxu0 0.0
        %2293 = vmatpush2.msra.mxu0 0.0
        %2294 = vmatprep.subr.mxu0 0.0
        %2295 = vmatpush2.msra.mxu0 0.0
        %2296 = vmatprep.subr.mxu0 0.0
        %2297 = vmatpush2.msra.mxu0 0.0
        %2298 = vmatprep.subr.mxu0 0.0
        %2299 = vmatpush2.msra.mxu0 0.0
        %2300 = vmatprep.subr.mxu0 0.0
        %2301 = vmatpush2.msra.mxu0 0.0
        %2302 = vmatprep.subr.mxu0 0.0
        %2303 = vmatpush2.msra.mxu0 0.0
        %2304 = vmatprep.subr.mxu0 0.0
        %2305 = vmatpush2.msra.mxu0 0.0
        %2306 = vmatprep.subr.mxu0 0.0
        %2307 = vmatpush2.msra.mxu0 0.0
        %2308 = vmatprep.subr.mxu0 0.0
        %2309 = vmatpush2.msra.mxu0 0.0
        %2310 = vmatprep.subr.mxu0 0.0
        %2311 = vmatpush2.msra.mxu0 0.0
        %2312 = vmatprep.subr.mxu0 0.0
        %2313 = vmatpush2.msra.mxu0 0.0
        %2314 = vmatprep.subr.mxu0 0.0
        %2315 = vmatpush2.msra.mxu0 0.0
        %2316 = vmatprep.subr.mxu0 0.0
        %2317 = vmatpush2.msra.mxu0 0.0
        %2318 = vmatprep.subr.mxu0 0.0
        %2319 = vmatpush2.msra.mxu0 0.0
        %2320 = vmatprep.mubr.f32.mxu0 0.0
        %2321 = vmatmul.mubr.f32.gmra.mxu0 %v2233
        %v2322 = vpop.f32.mrf.mxu0
        %v2323 = vadd.f32 0.0, %v2322
        %v2324 = vpop.f32.mrf.mxu0
        %2325 = vmatprep.mubr.f32.mxu0 0.0
        %2326 = vmatmul.mubr.f32.gmra.mxu0 %v2236
        %v2327 = vpop.f32.mrf.mxu0
        %v2328 = vadd.f32 0.0, %v2327
        %v2329 = vpop.f32.mrf.mxu0
        %2330 = vmatprep.mubr.f32.mxu0 0.0
        %2331 = vmatmul.mubr.f32.gmra.mxu0 %v2239
        %v2332 = vpop.f32.mrf.mxu0
        %v2333 = vadd.f32 0.0, %v2332
        %v2334 = vpop.f32.mrf.mxu0
        %2335 = vmatprep.mubr.f32.mxu0 0.0
        %2336 = vmatmul.mubr.f32.gmra.mxu0 %v2242
        %v2337 = vpop.f32.mrf.mxu0
        %v2338 = vadd.f32 0.0, %v2337
        %v2339 = vpop.f32.mrf.mxu0
        %2340 = vmatprep.mubr.f32.mxu0 0.0
        %2341 = vmatmul.mubr.f32.gmra.mxu0 %v2245
        %v2342 = vpop.f32.mrf.mxu0
        %v2343 = vadd.f32 0.0, %v2342
        %v2344 = vpop.f32.mrf.mxu0
        %2345 = vmatprep.mubr.f32.mxu0 0.0
        %2346 = vmatmul.mubr.f32.gmra.mxu0 %v2248
        %v2347 = vpop.f32.mrf.mxu0
        %v2348 = vadd.f32 0.0, %v2347
        %v2349 = vpop.f32.mrf.mxu0
        %2350 = vmatprep.mubr.f32.mxu0 0.0
        %2351 = vmatmul.mubr.f32.gmra.mxu0 %v2251
        %v2352 = vpop.f32.mrf.mxu0
        %v2353 = vadd.f32 0.0, %v2352
        %v2354 = vpop.f32.mrf.mxu0
        %2355 = vmatprep.mubr.f32.mxu0 0.0
        %2356 = vmatmul.mubr.f32.gmra.mxu0 %v2254
        %v2357 = vpop.f32.mrf.mxu0
        %v2358 = vadd.f32 0.0, %v2357
        %v2359 = vpop.f32.mrf.mxu0
        %2360 = vdwg.mxu0
        %v2361 = vmax.f32 %v2120, %v2323
        %v2362 = vmax.f32 %v2121, %v2328
        %v2363 = vmax.f32 %v2122, %v2333
        %v2364 = vmax.f32 %v2123, %v2338
        %v2365 = vmax.f32 %v2124, %v2343
        %v2366 = vmax.f32 %v2125, %v2348
        %v2367 = vmax.f32 %v2126, %v2353
        %v2368 = vmax.f32 %v2127, %v2358
        %v2369 = vsel %vm2160, 1e+30, %v2128
        %v2370 = vsel %vm2161, 1e+30, %v2129
        %v2371 = vsel %vm2162, 1e+30, %v2130
        %v2372 = vsel %vm2163, 1e+30, %v2131
        %v2373 = vsel %vm2164, 1e+30, %v2132
        %v2374 = vsel %vm2165, 1e+30, %v2133
        %v2375 = vsel %vm2166, 1e+30, %v2134
        %v2376 = vsel %vm2167, 1e+30, %v2135
        %v2377 = vsel %vm644, %v2369, inf
        %2378 = vmin.xlane.f32.xlu0 %v2377
        %v2379 = vpop.xlane.xlu0 %2378
        %v2380 = vsel %vm644, %v2370, inf
        %2381 = vmin.xlane.f32.xlu0 %v2380
        %v2382 = vpop.xlane.xlu0 %2381
        %v2383 = vsel %vm644, %v2371, inf
        %2384 = vmin.xlane.f32.xlu0 %v2383
        %v2385 = vpop.xlane.xlu0 %2384
        %v2386 = vsel %vm644, %v2372, inf
        %2387 = vmin.xlane.f32.xlu0 %v2386
        %v2388 = vpop.xlane.xlu0 %2387
        %v2389 = vsel %vm644, %v2373, inf
        %2390 = vmin.xlane.f32.xlu0 %v2389
        %v2391 = vpop.xlane.xlu0 %2390
        %v2392 = vsel %vm644, %v2374, inf
        %2393 = vmin.xlane.f32.xlu0 %v2392
        %v2394 = vpop.xlane.xlu0 %2393
        %v2395 = vsel %vm644, %v2375, inf
        %2396 = vmin.xlane.f32.xlu0 %v2395
        %v2397 = vpop.xlane.xlu0 %2396
        %v2398 = vsel %vm644, %v2376, inf
        %2399 = vmin.xlane.f32.xlu0 %v2398
        %v2400 = vpop.xlane.xlu0 %2399
        %vm2401 = vcmp.le.f32.partialorder %v2369, %v2379
        %vm2402 = vcmp.le.f32.partialorder %v2370, %v2382
        %vm2403 = vcmp.le.f32.partialorder %v2371, %v2385
        %vm2404 = vcmp.le.f32.partialorder %v2372, %v2388
        %vm2405 = vcmp.le.f32.partialorder %v2373, %v2391
        %vm2406 = vcmp.le.f32.partialorder %v2374, %v2394
        %vm2407 = vcmp.le.f32.partialorder %v2375, %v2397
        %vm2408 = vcmp.le.f32.partialorder %v2376, %v2400
        %v2409 = vsel %vm2401, 1, 0
        %v2410 = vsel %vm2402, 1, 0
        %v2411 = vsel %vm2403, 1, 0
        %v2412 = vsel %vm2404, 1, 0
        %v2413 = vsel %vm2405, 1, 0
        %v2414 = vsel %vm2406, 1, 0
        %v2415 = vsel %vm2407, 1, 0
        %v2416 = vsel %vm2408, 1, 0
        %v2417 = vcvt.s32.f32 %v2409
        %v2418 = vcvt.s32.f32 %v2410
        %v2419 = vcvt.s32.f32 %v2411
        %v2420 = vcvt.s32.f32 %v2412
        %v2421 = vcvt.s32.f32 %v2413
        %v2422 = vcvt.s32.f32 %v2414
        %v2423 = vcvt.s32.f32 %v2415
        %v2424 = vcvt.s32.f32 %v2416
        %v2425 = vsel %vm644, %v2417, 0.0
        %2426 = vadd.xlane.f32.xlu0 %v2425
        %v2427 = vpop.xlane.xlu0 %2426
        %v2428 = vsel %vm644, %v2418, 0.0
        %2429 = vadd.xlane.f32.xlu0 %v2428
        %v2430 = vpop.xlane.xlu0 %2429
        %v2431 = vsel %vm644, %v2419, 0.0
        %2432 = vadd.xlane.f32.xlu0 %v2431
        %v2433 = vpop.xlane.xlu0 %2432
        %v2434 = vsel %vm644, %v2420, 0.0
        %2435 = vadd.xlane.f32.xlu0 %v2434
        %v2436 = vpop.xlane.xlu0 %2435
        %v2437 = vsel %vm644, %v2421, 0.0
        %2438 = vadd.xlane.f32.xlu0 %v2437
        %v2439 = vpop.xlane.xlu0 %2438
        %v2440 = vsel %vm644, %v2422, 0.0
        %2441 = vadd.xlane.f32.xlu0 %v2440
        %v2442 = vpop.xlane.xlu0 %2441
        %v2443 = vsel %vm644, %v2423, 0.0
        %2444 = vadd.xlane.f32.xlu0 %v2443
        %v2445 = vpop.xlane.xlu0 %2444
        %v2446 = vsel %vm644, %v2424, 0.0
        %2447 = vadd.xlane.f32.xlu0 %v2446
        %v2448 = vpop.xlane.xlu0 %2447
        %v2449 = vmax.f32 %v2427, 1.0
        %v2450 = vmax.f32 %v2430, 1.0
        %v2451 = vmax.f32 %v2433, 1.0
        %v2452 = vmax.f32 %v2436, 1.0
        %v2453 = vmax.f32 %v2439, 1.0
        %v2454 = vmax.f32 %v2442, 1.0
        %v2455 = vmax.f32 %v2445, 1.0
        %v2456 = vmax.f32 %v2448, 1.0
        %v2457 = vrcp.pop %v2449
        %v2458 = vmul.f32 %v2417, %v2457
        %v2459 = vrcp.pop %v2450
        %v2460 = vmul.f32 %v2418, %v2459
        %v2461 = vrcp.pop %v2451
        %v2462 = vmul.f32 %v2419, %v2461
        %v2463 = vrcp.pop %v2452
        %v2464 = vmul.f32 %v2420, %v2463
        %v2465 = vrcp.pop %v2453
        %v2466 = vmul.f32 %v2421, %v2465
        %v2467 = vrcp.pop %v2454
        %v2468 = vmul.f32 %v2422, %v2467
        %v2469 = vrcp.pop %v2455
        %v2470 = vmul.f32 %v2423, %v2469
        %v2471 = vrcp.pop %v2456
        %v2472 = vmul.f32 %v2424, %v2471
        %v2474 = vsel %vm644, %v2458, 0
        %v2477 = vsel %vm644, %v2460, 0
        %v2480 = vsel %vm644, %v2462, 0
        %v2483 = vsel %vm644, %v2464, 0
        %v2486 = vsel %vm644, %v2466, 0
        %v2489 = vsel %vm644, %v2468, 0
        %v2492 = vsel %vm644, %v2470, 0
        %v2495 = vsel %vm644, %v2472, 0
        %2497 = vmatprep.subr.mxu0 0.0
        %2498 = vmatpush1.msra.mxu0 0.0
        %2499 = vmatprep.subr.mxu0 0.0
        %2500 = vmatpush1.msra.mxu0 0.0
        %2501 = vmatprep.subr.mxu0 0.0
        %2502 = vmatpush1.msra.mxu0 0.0
        %2503 = vmatprep.subr.mxu0 0.0
        %2504 = vmatpush1.msra.mxu0 0.0
        %2505 = vmatprep.subr.mxu0 0.0
        %2506 = vmatpush1.msra.mxu0 0.0
        %2507 = vmatprep.subr.mxu0 0.0
        %2508 = vmatpush1.msra.mxu0 0.0
        %2509 = vmatprep.subr.mxu0 0.0
        %2510 = vmatpush1.msra.mxu0 0.0
        %2511 = vmatprep.subr.mxu0 0.0
        %2512 = vmatpush1.msra.mxu0 0.0
        %2513 = vmatprep.subr.mxu0 0.0
        %2514 = vmatpush1.msra.mxu0 %v437
        %2515 = vmatprep.subr.mxu0 0.0
        %2516 = vmatpush1.msra.mxu0 %v432
        %2517 = vmatprep.subr.mxu0 0.0
        %2518 = vmatpush1.msra.mxu0 %v427
        %2519 = vmatprep.subr.mxu0 0.0
        %2520 = vmatpush1.msra.mxu0 %v422
        %2521 = vmatprep.subr.mxu0 0.0
        %2522 = vmatpush1.msra.mxu0 %v417
        %2523 = vmatprep.subr.mxu0 0.0
        %2524 = vmatpush1.msra.mxu0 %v412
        %2525 = vmatprep.subr.mxu0 0.0
        %2526 = vmatpush1.msra.mxu0 %v407
        %2527 = vmatprep.subr.mxu0 0.0
        %2528 = vmatpush1.msra.mxu0 %v402
        %2529 = vmatprep.subr.mxu0 0.0
        %2530 = vmatpush2.msra.mxu0 0.0
        %2531 = vmatprep.subr.mxu0 0.0
        %2532 = vmatpush2.msra.mxu0 0.0
        %2533 = vmatprep.subr.mxu0 0.0
        %2534 = vmatpush2.msra.mxu0 0.0
        %2535 = vmatprep.subr.mxu0 0.0
        %2536 = vmatpush2.msra.mxu0 0.0
        %2537 = vmatprep.subr.mxu0 0.0
        %2538 = vmatpush2.msra.mxu0 0.0
        %2539 = vmatprep.subr.mxu0 0.0
        %2540 = vmatpush2.msra.mxu0 0.0
        %2541 = vmatprep.subr.mxu0 0.0
        %2542 = vmatpush2.msra.mxu0 0.0
        %2543 = vmatprep.subr.mxu0 0.0
        %2544 = vmatpush2.msra.mxu0 0.0
        %2545 = vmatprep.subr.mxu0 0.0
        %2546 = vmatpush2.msra.mxu0 0.0
        %2547 = vmatprep.subr.mxu0 0.0
        %2548 = vmatpush2.msra.mxu0 0.0
        %2549 = vmatprep.subr.mxu0 0.0
        %2550 = vmatpush2.msra.mxu0 0.0
        %2551 = vmatprep.subr.mxu0 0.0
        %2552 = vmatpush2.msra.mxu0 0.0
        %2553 = vmatprep.subr.mxu0 0.0
        %2554 = vmatpush2.msra.mxu0 0.0
        %2555 = vmatprep.subr.mxu0 0.0
        %2556 = vmatpush2.msra.mxu0 0.0
        %2557 = vmatprep.subr.mxu0 0.0
        %2558 = vmatpush2.msra.mxu0 0.0
        %2559 = vmatprep.subr.mxu0 0.0
        %2560 = vmatpush2.msra.mxu0 0.0
        %2561 = vmatprep.mubr.f32.mxu0 0.0
        %2562 = vmatmul.mubr.f32.gmra.mxu0 %v2474
        %v2563 = vpop.f32.mrf.mxu0
        %v2564 = vadd.f32 0.0, %v2563
        %v2565 = vpop.f32.mrf.mxu0
        %2566 = vmatprep.mubr.f32.mxu0 0.0
        %2567 = vmatmul.mubr.f32.gmra.mxu0 %v2477
        %v2568 = vpop.f32.mrf.mxu0
        %v2569 = vadd.f32 0.0, %v2568
        %v2570 = vpop.f32.mrf.mxu0
        %2571 = vmatprep.mubr.f32.mxu0 0.0
        %2572 = vmatmul.mubr.f32.gmra.mxu0 %v2480
        %v2573 = vpop.f32.mrf.mxu0
        %v2574 = vadd.f32 0.0, %v2573
        %v2575 = vpop.f32.mrf.mxu0
        %2576 = vmatprep.mubr.f32.mxu0 0.0
        %2577 = vmatmul.mubr.f32.gmra.mxu0 %v2483
        %v2578 = vpop.f32.mrf.mxu0
        %v2579 = vadd.f32 0.0, %v2578
        %v2580 = vpop.f32.mrf.mxu0
        %2581 = vmatprep.mubr.f32.mxu0 0.0
        %2582 = vmatmul.mubr.f32.gmra.mxu0 %v2486
        %v2583 = vpop.f32.mrf.mxu0
        %v2584 = vadd.f32 0.0, %v2583
        %v2585 = vpop.f32.mrf.mxu0
        %2586 = vmatprep.mubr.f32.mxu0 0.0
        %2587 = vmatmul.mubr.f32.gmra.mxu0 %v2489
        %v2588 = vpop.f32.mrf.mxu0
        %v2589 = vadd.f32 0.0, %v2588
        %v2590 = vpop.f32.mrf.mxu0
        %2591 = vmatprep.mubr.f32.mxu0 0.0
        %2592 = vmatmul.mubr.f32.gmra.mxu0 %v2492
        %v2593 = vpop.f32.mrf.mxu0
        %v2594 = vadd.f32 0.0, %v2593
        %v2595 = vpop.f32.mrf.mxu0
        %2596 = vmatprep.mubr.f32.mxu0 0.0
        %2597 = vmatmul.mubr.f32.gmra.mxu0 %v2495
        %v2598 = vpop.f32.mrf.mxu0
        %v2599 = vadd.f32 0.0, %v2598
        %v2600 = vpop.f32.mrf.mxu0
        %2601 = vdwg.mxu0
        %v2602 = vmax.f32 %v2361, %v2564
        %v2603 = vmax.f32 %v2362, %v2569
        %v2604 = vmax.f32 %v2363, %v2574
        %v2605 = vmax.f32 %v2364, %v2579
        %v2606 = vmax.f32 %v2365, %v2584
        %v2607 = vmax.f32 %v2366, %v2589
        %v2608 = vmax.f32 %v2367, %v2594
        %v2609 = vmax.f32 %v2368, %v2599
        %v2610 = vsel %vm2401, 1e+30, %v2369
        %v2611 = vsel %vm2402, 1e+30, %v2370
        %v2612 = vsel %vm2403, 1e+30, %v2371
        %v2613 = vsel %vm2404, 1e+30, %v2372
        %v2614 = vsel %vm2405, 1e+30, %v2373
        %v2615 = vsel %vm2406, 1e+30, %v2374
        %v2616 = vsel %vm2407, 1e+30, %v2375
        %v2617 = vsel %vm2408, 1e+30, %v2376
        %v2618 = vsel %vm644, %v2610, inf
        %2619 = vmin.xlane.f32.xlu0 %v2618
        %v2620 = vpop.xlane.xlu0 %2619
        %v2621 = vsel %vm644, %v2611, inf
        %2622 = vmin.xlane.f32.xlu0 %v2621
        %v2623 = vpop.xlane.xlu0 %2622
        %v2624 = vsel %vm644, %v2612, inf
        %2625 = vmin.xlane.f32.xlu0 %v2624
        %v2626 = vpop.xlane.xlu0 %2625
        %v2627 = vsel %vm644, %v2613, inf
        %2628 = vmin.xlane.f32.xlu0 %v2627
        %v2629 = vpop.xlane.xlu0 %2628
        %v2630 = vsel %vm644, %v2614, inf
        %2631 = vmin.xlane.f32.xlu0 %v2630
        %v2632 = vpop.xlane.xlu0 %2631
        %v2633 = vsel %vm644, %v2615, inf
        %2634 = vmin.xlane.f32.xlu0 %v2633
        %v2635 = vpop.xlane.xlu0 %2634
        %v2636 = vsel %vm644, %v2616, inf
        %2637 = vmin.xlane.f32.xlu0 %v2636
        %v2638 = vpop.xlane.xlu0 %2637
        %v2639 = vsel %vm644, %v2617, inf
        %2640 = vmin.xlane.f32.xlu0 %v2639
        %v2641 = vpop.xlane.xlu0 %2640
        %vm2642 = vcmp.le.f32.partialorder %v2610, %v2620
        %vm2643 = vcmp.le.f32.partialorder %v2611, %v2623
        %vm2644 = vcmp.le.f32.partialorder %v2612, %v2626
        %vm2645 = vcmp.le.f32.partialorder %v2613, %v2629
        %vm2646 = vcmp.le.f32.partialorder %v2614, %v2632
        %vm2647 = vcmp.le.f32.partialorder %v2615, %v2635
        %vm2648 = vcmp.le.f32.partialorder %v2616, %v2638
        %vm2649 = vcmp.le.f32.partialorder %v2617, %v2641
        %v2650 = vsel %vm2642, 1, 0
        %v2651 = vsel %vm2643, 1, 0
        %v2652 = vsel %vm2644, 1, 0
        %v2653 = vsel %vm2645, 1, 0
        %v2654 = vsel %vm2646, 1, 0
        %v2655 = vsel %vm2647, 1, 0
        %v2656 = vsel %vm2648, 1, 0
        %v2657 = vsel %vm2649, 1, 0
        %v2658 = vcvt.s32.f32 %v2650
        %v2659 = vcvt.s32.f32 %v2651
        %v2660 = vcvt.s32.f32 %v2652
        %v2661 = vcvt.s32.f32 %v2653
        %v2662 = vcvt.s32.f32 %v2654
        %v2663 = vcvt.s32.f32 %v2655
        %v2664 = vcvt.s32.f32 %v2656
        %v2665 = vcvt.s32.f32 %v2657
        %v2666 = vsel %vm644, %v2658, 0.0
        %2667 = vadd.xlane.f32.xlu0 %v2666
        %v2668 = vpop.xlane.xlu0 %2667
        %v2669 = vsel %vm644, %v2659, 0.0
        %2670 = vadd.xlane.f32.xlu0 %v2669
        %v2671 = vpop.xlane.xlu0 %2670
        %v2672 = vsel %vm644, %v2660, 0.0
        %2673 = vadd.xlane.f32.xlu0 %v2672
        %v2674 = vpop.xlane.xlu0 %2673
        %v2675 = vsel %vm644, %v2661, 0.0
        %2676 = vadd.xlane.f32.xlu0 %v2675
        %v2677 = vpop.xlane.xlu0 %2676
        %v2678 = vsel %vm644, %v2662, 0.0
        %2679 = vadd.xlane.f32.xlu0 %v2678
        %v2680 = vpop.xlane.xlu0 %2679
        %v2681 = vsel %vm644, %v2663, 0.0
        %2682 = vadd.xlane.f32.xlu0 %v2681
        %v2683 = vpop.xlane.xlu0 %2682
        %v2684 = vsel %vm644, %v2664, 0.0
        %2685 = vadd.xlane.f32.xlu0 %v2684
        %v2686 = vpop.xlane.xlu0 %2685
        %v2687 = vsel %vm644, %v2665, 0.0
        %2688 = vadd.xlane.f32.xlu0 %v2687
        %v2689 = vpop.xlane.xlu0 %2688
        %v2690 = vmax.f32 %v2668, 1.0
        %v2691 = vmax.f32 %v2671, 1.0
        %v2692 = vmax.f32 %v2674, 1.0
        %v2693 = vmax.f32 %v2677, 1.0
        %v2694 = vmax.f32 %v2680, 1.0
        %v2695 = vmax.f32 %v2683, 1.0
        %v2696 = vmax.f32 %v2686, 1.0
        %v2697 = vmax.f32 %v2689, 1.0
        %v2698 = vrcp.pop %v2690
        %v2699 = vmul.f32 %v2658, %v2698
        %v2700 = vrcp.pop %v2691
        %v2701 = vmul.f32 %v2659, %v2700
        %v2702 = vrcp.pop %v2692
        %v2703 = vmul.f32 %v2660, %v2702
        %v2704 = vrcp.pop %v2693
        %v2705 = vmul.f32 %v2661, %v2704
        %v2706 = vrcp.pop %v2694
        %v2707 = vmul.f32 %v2662, %v2706
        %v2708 = vrcp.pop %v2695
        %v2709 = vmul.f32 %v2663, %v2708
        %v2710 = vrcp.pop %v2696
        %v2711 = vmul.f32 %v2664, %v2710
        %v2712 = vrcp.pop %v2697
        %v2713 = vmul.f32 %v2665, %v2712
        %v2715 = vsel %vm644, %v2699, 0
        %v2718 = vsel %vm644, %v2701, 0
        %v2721 = vsel %vm644, %v2703, 0
        %v2724 = vsel %vm644, %v2705, 0
        %v2727 = vsel %vm644, %v2707, 0
        %v2730 = vsel %vm644, %v2709, 0
        %v2733 = vsel %vm644, %v2711, 0
        %v2736 = vsel %vm644, %v2713, 0
        %2738 = vmatprep.subr.mxu0 0.0
        %2739 = vmatpush1.msra.mxu0 0.0
        %2740 = vmatprep.subr.mxu0 0.0
        %2741 = vmatpush1.msra.mxu0 0.0
        %2742 = vmatprep.subr.mxu0 0.0
        %2743 = vmatpush1.msra.mxu0 0.0
        %2744 = vmatprep.subr.mxu0 0.0
        %2745 = vmatpush1.msra.mxu0 0.0
        %2746 = vmatprep.subr.mxu0 0.0
        %2747 = vmatpush1.msra.mxu0 0.0
        %2748 = vmatprep.subr.mxu0 0.0
        %2749 = vmatpush1.msra.mxu0 0.0
        %2750 = vmatprep.subr.mxu0 0.0
        %2751 = vmatpush1.msra.mxu0 0.0
        %2752 = vmatprep.subr.mxu0 0.0
        %2753 = vmatpush1.msra.mxu0 0.0
        %2754 = vmatprep.subr.mxu0 0.0
        %2755 = vmatpush1.msra.mxu0 %v437
        %2756 = vmatprep.subr.mxu0 0.0
        %2757 = vmatpush1.msra.mxu0 %v432
        %2758 = vmatprep.subr.mxu0 0.0
        %2759 = vmatpush1.msra.mxu0 %v427
        %2760 = vmatprep.subr.mxu0 0.0
        %2761 = vmatpush1.msra.mxu0 %v422
        %2762 = vmatprep.subr.mxu0 0.0
        %2763 = vmatpush1.msra.mxu0 %v417
        %2764 = vmatprep.subr.mxu0 0.0
        %2765 = vmatpush1.msra.mxu0 %v412
        %2766 = vmatprep.subr.mxu0 0.0
        %2767 = vmatpush1.msra.mxu0 %v407
        %2768 = vmatprep.subr.mxu0 0.0
        %2769 = vmatpush1.msra.mxu0 %v402
        %2770 = vmatprep.subr.mxu0 0.0
        %2771 = vmatpush2.msra.mxu0 0.0
        %2772 = vmatprep.subr.mxu0 0.0
        %2773 = vmatpush2.msra.mxu0 0.0
        %2774 = vmatprep.subr.mxu0 0.0
        %2775 = vmatpush2.msra.mxu0 0.0
        %2776 = vmatprep.subr.mxu0 0.0
        %2777 = vmatpush2.msra.mxu0 0.0
        %2778 = vmatprep.subr.mxu0 0.0
        %2779 = vmatpush2.msra.mxu0 0.0
        %2780 = vmatprep.subr.mxu0 0.0
        %2781 = vmatpush2.msra.mxu0 0.0
        %2782 = vmatprep.subr.mxu0 0.0
        %2783 = vmatpush2.msra.mxu0 0.0
        %2784 = vmatprep.subr.mxu0 0.0
        %2785 = vmatpush2.msra.mxu0 0.0
        %2786 = vmatprep.subr.mxu0 0.0
        %2787 = vmatpush2.msra.mxu0 0.0
        %2788 = vmatprep.subr.mxu0 0.0
        %2789 = vmatpush2.msra.mxu0 0.0
        %2790 = vmatprep.subr.mxu0 0.0
        %2791 = vmatpush2.msra.mxu0 0.0
        %2792 = vmatprep.subr.mxu0 0.0
        %2793 = vmatpush2.msra.mxu0 0.0
        %2794 = vmatprep.subr.mxu0 0.0
        %2795 = vmatpush2.msra.mxu0 0.0
        %2796 = vmatprep.subr.mxu0 0.0
        %2797 = vmatpush2.msra.mxu0 0.0
        %2798 = vmatprep.subr.mxu0 0.0
        %2799 = vmatpush2.msra.mxu0 0.0
        %2800 = vmatprep.subr.mxu0 0.0
        %2801 = vmatpush2.msra.mxu0 0.0
        %2802 = vmatprep.mubr.f32.mxu0 0.0
        %2803 = vmatmul.mubr.f32.gmra.mxu0 %v2715
        %v2804 = vpop.f32.mrf.mxu0
        %v2805 = vadd.f32 0.0, %v2804
        %v2806 = vpop.f32.mrf.mxu0
        %2807 = vmatprep.mubr.f32.mxu0 0.0
        %2808 = vmatmul.mubr.f32.gmra.mxu0 %v2718
        %v2809 = vpop.f32.mrf.mxu0
        %v2810 = vadd.f32 0.0, %v2809
        %v2811 = vpop.f32.mrf.mxu0
        %2812 = vmatprep.mubr.f32.mxu0 0.0
        %2813 = vmatmul.mubr.f32.gmra.mxu0 %v2721
        %v2814 = vpop.f32.mrf.mxu0
        %v2815 = vadd.f32 0.0, %v2814
        %v2816 = vpop.f32.mrf.mxu0
        %2817 = vmatprep.mubr.f32.mxu0 0.0
        %2818 = vmatmul.mubr.f32.gmra.mxu0 %v2724
        %v2819 = vpop.f32.mrf.mxu0
        %v2820 = vadd.f32 0.0, %v2819
        %v2821 = vpop.f32.mrf.mxu0
        %2822 = vmatprep.mubr.f32.mxu0 0.0
        %2823 = vmatmul.mubr.f32.gmra.mxu0 %v2727
        %v2824 = vpop.f32.mrf.mxu0
        %v2825 = vadd.f32 0.0, %v2824
        %v2826 = vpop.f32.mrf.mxu0
        %2827 = vmatprep.mubr.f32.mxu0 0.0
        %2828 = vmatmul.mubr.f32.gmra.mxu0 %v2730
        %v2829 = vpop.f32.mrf.mxu0
        %v2830 = vadd.f32 0.0, %v2829
        %v2831 = vpop.f32.mrf.mxu0
        %2832 = vmatprep.mubr.f32.mxu0 0.0
        %2833 = vmatmul.mubr.f32.gmra.mxu0 %v2733
        %v2834 = vpop.f32.mrf.mxu0
        %v2835 = vadd.f32 0.0, %v2834
        %v2836 = vpop.f32.mrf.mxu0
        %2837 = vmatprep.mubr.f32.mxu0 0.0
        %2838 = vmatmul.mubr.f32.gmra.mxu0 %v2736
        %v2839 = vpop.f32.mrf.mxu0
        %v2840 = vadd.f32 0.0, %v2839
        %v2841 = vpop.f32.mrf.mxu0
        %2842 = vdwg.mxu0
        %v2843 = vmax.f32 %v2602, %v2805
        %v2844 = vmax.f32 %v2603, %v2810
        %v2845 = vmax.f32 %v2604, %v2815
        %v2846 = vmax.f32 %v2605, %v2820
        %v2847 = vmax.f32 %v2606, %v2825
        %v2848 = vmax.f32 %v2607, %v2830
        %v2849 = vmax.f32 %v2608, %v2835
        %v2850 = vmax.f32 %v2609, %v2840
        %v2851 = vsub.f32 %v2843, %v402
        %v2852 = vsub.f32 %v2844, %v407
        %v2853 = vsub.f32 %v2845, %v412
        %v2854 = vsub.f32 %v2846, %v417
        %v2855 = vsub.f32 %v2847, %v422
        %v2856 = vsub.f32 %v2848, %v427
        %v2857 = vsub.f32 %v2849, %v432
        %v2858 = vsub.f32 %v2850, %v437
        %v2859 = vld [vmem:[%s3] sm:$0xff]
        %v2860 = vld [vmem:[%s3 + $0x8] sm:$0xff]
        %v2861 = vld [vmem:[%s3 + $0x10] sm:$0xff]
        %v2862 = vld [vmem:[%s3 + $0x18] sm:$0xff]
        %v2863 = vld [vmem:[%s3 + $0x20] sm:$0xff]
        %v2864 = vld [vmem:[%s3 + $0x28] sm:$0xff]
        %v2865 = vld [vmem:[%s3 + $0x30] sm:$0xff]
        %v2866 = vld [vmem:[%s3 + $0x38] sm:$0xff]
        %v2867 = vld [vmem:[%s3 + $0x40] sm:$0xff]
        %v2868 = vld [vmem:[%s3 + $0x48] sm:$0xff]
        %v2869 = vld [vmem:[%s3 + $0x50] sm:$0xff]
        %v2870 = vld [vmem:[%s3 + $0x58] sm:$0xff]
        %v2871 = vld [vmem:[%s3 + $0x60] sm:$0xff]
        %v2872 = vld [vmem:[%s3 + $0x68] sm:$0xff]
        %v2873 = vld [vmem:[%s3 + $0x70] sm:$0xff]
        %v2874 = vld [vmem:[%s3 + $0x78] sm:$0xff]
        %v2875 = vld [vmem:[%s4] sm:$0xff]
        %v2876 = vld [vmem:[%s4 + $0x8] sm:$0xff]
        %v2877 = vld [vmem:[%s4 + $0x10] sm:$0xff]
        %v2878 = vld [vmem:[%s4 + $0x18] sm:$0xff]
        %v2879 = vld [vmem:[%s4 + $0x20] sm:$0xff]
        %v2880 = vld [vmem:[%s4 + $0x28] sm:$0xff]
        %v2881 = vld [vmem:[%s4 + $0x30] sm:$0xff]
        %v2882 = vld [vmem:[%s4 + $0x38] sm:$0xff]
        %v2883 = vld [vmem:[%s4 + $0x40] sm:$0xff]
        %v2884 = vld [vmem:[%s4 + $0x48] sm:$0xff]
        %v2885 = vld [vmem:[%s4 + $0x50] sm:$0xff]
        %v2886 = vld [vmem:[%s4 + $0x58] sm:$0xff]
        %v2887 = vld [vmem:[%s4 + $0x60] sm:$0xff]
        %v2888 = vld [vmem:[%s4 + $0x68] sm:$0xff]
        %v2889 = vld [vmem:[%s4 + $0x70] sm:$0xff]
        %v2890 = vld [vmem:[%s4 + $0x78] sm:$0xff]
        %2891 = vmatprep.subr.mxu0 0.0
        %2892 = vmatpush1.msra.mxu0 %v2890
        %2893 = vmatprep.subr.mxu0 0.0
        %2894 = vmatpush1.msra.mxu0 %v2889
        %2895 = vmatprep.subr.mxu0 0.0
        %2896 = vmatpush1.msra.mxu0 %v2888
        %2897 = vmatprep.subr.mxu0 0.0
        %2898 = vmatpush1.msra.mxu0 %v2887
        %2899 = vmatprep.subr.mxu0 0.0
        %2900 = vmatpush1.msra.mxu0 %v2886
        %2901 = vmatprep.subr.mxu0 0.0
        %2902 = vmatpush1.msra.mxu0 %v2885
        %2903 = vmatprep.subr.mxu0 0.0
        %2904 = vmatpush1.msra.mxu0 %v2884
        %2905 = vmatprep.subr.mxu0 0.0
        %2906 = vmatpush1.msra.mxu0 %v2883
        %2907 = vmatprep.subr.mxu0 0.0
        %2908 = vmatpush1.msra.mxu0 %v2882
        %2909 = vmatprep.subr.mxu0 0.0
        %2910 = vmatpush1.msra.mxu0 %v2881
        %2911 = vmatprep.subr.mxu0 0.0
        %2912 = vmatpush1.msra.mxu0 %v2880
        %2913 = vmatprep.subr.mxu0 0.0
        %2914 = vmatpush1.msra.mxu0 %v2879
        %2915 = vmatprep.subr.mxu0 0.0
        %2916 = vmatpush1.msra.mxu0 %v2878
        %2917 = vmatprep.subr.mxu0 0.0
        %2918 = vmatpush1.msra.mxu0 %v2877
        %2919 = vmatprep.subr.mxu0 0.0
        %2920 = vmatpush1.msra.mxu0 %v2876
        %2921 = vmatprep.subr.mxu0 0.0
        %2922 = vmatpush1.msra.mxu0 %v2875
        %2923 = vmatprep.subr.mxu0 0.0
        %2924 = vmatpush2.msra.mxu0 0.0
        %2925 = vmatprep.subr.mxu0 0.0
        %2926 = vmatpush2.msra.mxu0 0.0
        %2927 = vmatprep.subr.mxu0 0.0
        %2928 = vmatpush2.msra.mxu0 0.0
        %2929 = vmatprep.subr.mxu0 0.0
        %2930 = vmatpush2.msra.mxu0 0.0
        %2931 = vmatprep.subr.mxu0 0.0
        %2932 = vmatpush2.msra.mxu0 0.0
        %2933 = vmatprep.subr.mxu0 0.0
        %2934 = vmatpush2.msra.mxu0 0.0
        %2935 = vmatprep.subr.mxu0 0.0
        %2936 = vmatpush2.msra.mxu0 0.0
        %2937 = vmatprep.subr.mxu0 0.0
        %2938 = vmatpush2.msra.mxu0 0.0
        %2939 = vmatprep.subr.mxu0 0.0
        %2940 = vmatpush2.msra.mxu0 0.0
        %2941 = vmatprep.subr.mxu0 0.0
        %2942 = vmatpush2.msra.mxu0 0.0
        %2943 = vmatprep.subr.mxu0 0.0
        %2944 = vmatpush2.msra.mxu0 0.0
        %2945 = vmatprep.subr.mxu0 0.0
        %2946 = vmatpush2.msra.mxu0 0.0
        %2947 = vmatprep.subr.mxu0 0.0
        %2948 = vmatpush2.msra.mxu0 0.0
        %2949 = vmatprep.subr.mxu0 0.0
        %2950 = vmatpush2.msra.mxu0 0.0
        %2951 = vmatprep.subr.mxu0 0.0
        %2952 = vmatpush2.msra.mxu0 0.0
        %2953 = vmatprep.subr.mxu0 0.0
        %2954 = vmatpush2.msra.mxu0 0.0
        %2955 = vmatprep.mubr.f32.mxu0 0.0
        %2956 = vmatmul.mubr.f32.gmra.mxu0 %v2851
        %v2957 = vpop.f32.mrf.mxu0
        %v2958 = vadd.f32 0.0, %v2957
        %v2959 = vpop.f32.mrf.mxu0
        %2960 = vmatprep.mubr.f32.mxu0 0.0
        %2961 = vmatmul.mubr.f32.gmra.mxu0 %v2852
        %v2962 = vpop.f32.mrf.mxu0
        %v2963 = vadd.f32 0.0, %v2962
        %v2964 = vpop.f32.mrf.mxu0
        %2965 = vmatprep.mubr.f32.mxu0 0.0
        %2966 = vmatmul.mubr.f32.gmra.mxu0 %v2853
        %v2967 = vpop.f32.mrf.mxu0
        %v2968 = vadd.f32 0.0, %v2967
        %v2969 = vpop.f32.mrf.mxu0
        %2970 = vmatprep.mubr.f32.mxu0 0.0
        %2971 = vmatmul.mubr.f32.gmra.mxu0 %v2854
        %v2972 = vpop.f32.mrf.mxu0
        %v2973 = vadd.f32 0.0, %v2972
        %v2974 = vpop.f32.mrf.mxu0
        %2975 = vmatprep.mubr.f32.mxu0 0.0
        %2976 = vmatmul.mubr.f32.gmra.mxu0 %v2855
        %v2977 = vpop.f32.mrf.mxu0
        %v2978 = vadd.f32 0.0, %v2977
        %v2979 = vpop.f32.mrf.mxu0
        %2980 = vmatprep.mubr.f32.mxu0 0.0
        %2981 = vmatmul.mubr.f32.gmra.mxu0 %v2856
        %v2982 = vpop.f32.mrf.mxu0
        %v2983 = vadd.f32 0.0, %v2982
        %v2984 = vpop.f32.mrf.mxu0
        %2985 = vmatprep.mubr.f32.mxu0 0.0
        %2986 = vmatmul.mubr.f32.gmra.mxu0 %v2857
        %v2987 = vpop.f32.mrf.mxu0
        %v2988 = vadd.f32 0.0, %v2987
        %v2989 = vpop.f32.mrf.mxu0
        %2990 = vmatprep.mubr.f32.mxu0 0.0
        %2991 = vmatmul.mubr.f32.gmra.mxu0 %v2858
        %v2992 = vpop.f32.mrf.mxu0
        %v2993 = vadd.f32 0.0, %v2992
        %v2994 = vpop.f32.mrf.mxu0
        %2995 = vdwg.mxu0
        %2996 = vmatprep.subr.mxu0 0.0
        %2997 = vmatpush1.msra.mxu0 %v2874
        %2998 = vmatprep.subr.mxu0 0.0
        %2999 = vmatpush1.msra.mxu0 %v2873
        %3000 = vmatprep.subr.mxu0 0.0
        %3001 = vmatpush1.msra.mxu0 %v2872
        %3002 = vmatprep.subr.mxu0 0.0
        %3003 = vmatpush1.msra.mxu0 %v2871
        %3004 = vmatprep.subr.mxu0 0.0
        %3005 = vmatpush1.msra.mxu0 %v2870
        %3006 = vmatprep.subr.mxu0 0.0
        %3007 = vmatpush1.msra.mxu0 %v2869
        %3008 = vmatprep.subr.mxu0 0.0
        %3009 = vmatpush1.msra.mxu0 %v2868
        %3010 = vmatprep.subr.mxu0 0.0
        %3011 = vmatpush1.msra.mxu0 %v2867
        %3012 = vmatprep.subr.mxu0 0.0
        %3013 = vmatpush1.msra.mxu0 %v2866
        %3014 = vmatprep.subr.mxu0 0.0
        %3015 = vmatpush1.msra.mxu0 %v2865
        %3016 = vmatprep.subr.mxu0 0.0
        %3017 = vmatpush1.msra.mxu0 %v2864
        %3018 = vmatprep.subr.mxu0 0.0
        %3019 = vmatpush1.msra.mxu0 %v2863
        %3020 = vmatprep.subr.mxu0 0.0
        %3021 = vmatpush1.msra.mxu0 %v2862
        %3022 = vmatprep.subr.mxu0 0.0
        %3023 = vmatpush1.msra.mxu0 %v2861
        %3024 = vmatprep.subr.mxu0 0.0
        %3025 = vmatpush1.msra.mxu0 %v2860
        %3026 = vmatprep.subr.mxu0 0.0
        %3027 = vmatpush1.msra.mxu0 %v2859
        %3028 = vmatprep.subr.mxu0 0.0
        %3029 = vmatpush2.msra.mxu0 0.0
        %3030 = vmatprep.subr.mxu0 0.0
        %3031 = vmatpush2.msra.mxu0 0.0
        %3032 = vmatprep.subr.mxu0 0.0
        %3033 = vmatpush2.msra.mxu0 0.0
        %3034 = vmatprep.subr.mxu0 0.0
        %3035 = vmatpush2.msra.mxu0 0.0
        %3036 = vmatprep.subr.mxu0 0.0
        %3037 = vmatpush2.msra.mxu0 0.0
        %3038 = vmatprep.subr.mxu0 0.0
        %3039 = vmatpush2.msra.mxu0 0.0
        %3040 = vmatprep.subr.mxu0 0.0
        %3041 = vmatpush2.msra.mxu0 0.0
        %3042 = vmatprep.subr.mxu0 0.0
        %3043 = vmatpush2.msra.mxu0 0.0
        %3044 = vmatprep.subr.mxu0 0.0
        %3045 = vmatpush2.msra.mxu0 0.0
        %3046 = vmatprep.subr.mxu0 0.0
        %3047 = vmatpush2.msra.mxu0 0.0
        %3048 = vmatprep.subr.mxu0 0.0
        %3049 = vmatpush2.msra.mxu0 0.0
        %3050 = vmatprep.subr.mxu0 0.0
        %3051 = vmatpush2.msra.mxu0 0.0
        %3052 = vmatprep.subr.mxu0 0.0
        %3053 = vmatpush2.msra.mxu0 0.0
        %3054 = vmatprep.subr.mxu0 0.0
        %3055 = vmatpush2.msra.mxu0 0.0
        %3056 = vmatprep.subr.mxu0 0.0
        %3057 = vmatpush2.msra.mxu0 0.0
        %3058 = vmatprep.subr.mxu0 0.0
        %3059 = vmatpush2.msra.mxu0 0.0
        %3060 = vmatprep.mubr.f32.mxu0 0.0
        %3061 = vmatmul.mubr.f32.gmra.mxu0 %v402
        %v3062 = vpop.f32.mrf.mxu0
        %v3063 = vadd.f32 %v2958, %v3062
        %v3064 = vpop.f32.mrf.mxu0
        %3065 = vmatprep.mubr.f32.mxu0 0.0
        %3066 = vmatmul.mubr.f32.gmra.mxu0 %v407
        %v3067 = vpop.f32.mrf.mxu0
        %v3068 = vadd.f32 %v2963, %v3067
        %v3069 = vpop.f32.mrf.mxu0
        %3070 = vmatprep.mubr.f32.mxu0 0.0
        %3071 = vmatmul.mubr.f32.gmra.mxu0 %v412
        %v3072 = vpop.f32.mrf.mxu0
        %v3073 = vadd.f32 %v2968, %v3072
        %v3074 = vpop.f32.mrf.mxu0
        %3075 = vmatprep.mubr.f32.mxu0 0.0
        %3076 = vmatmul.mubr.f32.gmra.mxu0 %v417
        %v3077 = vpop.f32.mrf.mxu0
        %v3078 = vadd.f32 %v2973, %v3077
        %v3079 = vpop.f32.mrf.mxu0
        %3080 = vmatprep.mubr.f32.mxu0 0.0
        %3081 = vmatmul.mubr.f32.gmra.mxu0 %v422
        %v3082 = vpop.f32.mrf.mxu0
        %v3083 = vadd.f32 %v2978, %v3082
        %v3084 = vpop.f32.mrf.mxu0
        %3085 = vmatprep.mubr.f32.mxu0 0.0
        %3086 = vmatmul.mubr.f32.gmra.mxu0 %v427
        %v3087 = vpop.f32.mrf.mxu0
        %v3088 = vadd.f32 %v2983, %v3087
        %v3089 = vpop.f32.mrf.mxu0
        %3090 = vmatprep.mubr.f32.mxu0 0.0
        %3091 = vmatmul.mubr.f32.gmra.mxu0 %v432
        %v3092 = vpop.f32.mrf.mxu0
        %v3093 = vadd.f32 %v2988, %v3092
        %v3094 = vpop.f32.mrf.mxu0
        %3095 = vmatprep.mubr.f32.mxu0 0.0
        %3096 = vmatmul.mubr.f32.gmra.mxu0 %v437
        %v3097 = vpop.f32.mrf.mxu0
        %v3098 = vadd.f32 %v2993, %v3097
        %v3099 = vpop.f32.mrf.mxu0
        %3100 = vdwg.mxu0
        %v3101 = vld [vmem:[%s5] sm:$0x1]
        %v3103 = vlaneseq
        %v3104 = vshrl.u32 %v3103, 7
        %v3105 = vsub.s32 0, %v3104
        %v3106 = vrot.slane %v3101, %v3105
        %v3108 = vadd.f32 %v3063, %v3106
        %v3109 = vadd.f32 %v3068, %v3106
        %v3110 = vadd.f32 %v3073, %v3106
        %v3111 = vadd.f32 %v3078, %v3106
        %v3112 = vadd.f32 %v3083, %v3106
        %v3113 = vadd.f32 %v3088, %v3106
        %v3114 = vadd.f32 %v3093, %v3106
        %v3115 = vadd.f32 %v3098, %v3106
        %v3116 = vmax.f32 %v3108, 0.0
        %v3117 = vmax.f32 %v3109, 0.0
        %v3118 = vmax.f32 %v3110, 0.0
        %v3119 = vmax.f32 %v3111, 0.0
        %v3120 = vmax.f32 %v3112, 0.0
        %v3121 = vmax.f32 %v3113, 0.0
        %v3122 = vmax.f32 %v3114, 0.0
        %v3123 = vmax.f32 %v3115, 0.0
        %v3124 = vld [vmem:[%s6] sm:$0xff]
        %v3125 = vld [vmem:[%s6 + $0x8] sm:$0xff]
        %v3126 = vld [vmem:[%s6 + $0x10] sm:$0xff]
        %v3127 = vld [vmem:[%s6 + $0x18] sm:$0xff]
        %v3128 = vld [vmem:[%s6 + $0x20] sm:$0xff]
        %v3129 = vld [vmem:[%s6 + $0x28] sm:$0xff]
        %v3130 = vld [vmem:[%s6 + $0x30] sm:$0xff]
        %v3131 = vld [vmem:[%s6 + $0x38] sm:$0xff]
        %v3132 = vld [vmem:[%s6 + $0x40] sm:$0xff]
        %v3133 = vld [vmem:[%s6 + $0x48] sm:$0xff]
        %v3134 = vld [vmem:[%s6 + $0x50] sm:$0xff]
        %v3135 = vld [vmem:[%s6 + $0x58] sm:$0xff]
        %v3136 = vld [vmem:[%s6 + $0x60] sm:$0xff]
        %v3137 = vld [vmem:[%s6 + $0x68] sm:$0xff]
        %v3138 = vld [vmem:[%s6 + $0x70] sm:$0xff]
        %v3139 = vld [vmem:[%s6 + $0x78] sm:$0xff]
        %v3140 = vld [vmem:[%s7] sm:$0x1]
        %v3142 = vlaneseq
        %v3143 = vshrl.u32 %v3142, 7
        %v3144 = vsub.s32 0, %v3143
        %v3145 = vrot.slane %v3140, %v3144
        %3147 = vmatprep.subr.mxu0 0.0
        %3148 = vmatpush1.msra.mxu0 %v3139
        %3149 = vmatprep.subr.mxu0 0.0
        %3150 = vmatpush1.msra.mxu0 %v3138
        %3151 = vmatprep.subr.mxu0 0.0
        %3152 = vmatpush1.msra.mxu0 %v3137
        %3153 = vmatprep.subr.mxu0 0.0
        %3154 = vmatpush1.msra.mxu0 %v3136
        %3155 = vmatprep.subr.mxu0 0.0
        %3156 = vmatpush1.msra.mxu0 %v3135
        %3157 = vmatprep.subr.mxu0 0.0
        %3158 = vmatpush1.msra.mxu0 %v3134
        %3159 = vmatprep.subr.mxu0 0.0
        %3160 = vmatpush1.msra.mxu0 %v3133
        %3161 = vmatprep.subr.mxu0 0.0
        %3162 = vmatpush1.msra.mxu0 %v3132
        %3163 = vmatprep.subr.mxu0 0.0
        %3164 = vmatpush1.msra.mxu0 %v3131
        %3165 = vmatprep.subr.mxu0 0.0
        %3166 = vmatpush1.msra.mxu0 %v3130
        %3167 = vmatprep.subr.mxu0 0.0
        %3168 = vmatpush1.msra.mxu0 %v3129
        %3169 = vmatprep.subr.mxu0 0.0
        %3170 = vmatpush1.msra.mxu0 %v3128
        %3171 = vmatprep.subr.mxu0 0.0
        %3172 = vmatpush1.msra.mxu0 %v3127
        %3173 = vmatprep.subr.mxu0 0.0
        %3174 = vmatpush1.msra.mxu0 %v3126
        %3175 = vmatprep.subr.mxu0 0.0
        %3176 = vmatpush1.msra.mxu0 %v3125
        %3177 = vmatprep.subr.mxu0 0.0
        %3178 = vmatpush1.msra.mxu0 %v3124
        %3179 = vmatprep.subr.mxu0 0.0
        %3180 = vmatpush2.msra.mxu0 0.0
        %3181 = vmatprep.subr.mxu0 0.0
        %3182 = vmatpush2.msra.mxu0 0.0
        %3183 = vmatprep.subr.mxu0 0.0
        %3184 = vmatpush2.msra.mxu0 0.0
        %3185 = vmatprep.subr.mxu0 0.0
        %3186 = vmatpush2.msra.mxu0 0.0
        %3187 = vmatprep.subr.mxu0 0.0
        %3188 = vmatpush2.msra.mxu0 0.0
        %3189 = vmatprep.subr.mxu0 0.0
        %3190 = vmatpush2.msra.mxu0 0.0
        %3191 = vmatprep.subr.mxu0 0.0
        %3192 = vmatpush2.msra.mxu0 0.0
        %3193 = vmatprep.subr.mxu0 0.0
        %3194 = vmatpush2.msra.mxu0 0.0
        %3195 = vmatprep.subr.mxu0 0.0
        %3196 = vmatpush2.msra.mxu0 0.0
        %3197 = vmatprep.subr.mxu0 0.0
        %3198 = vmatpush2.msra.mxu0 0.0
        %3199 = vmatprep.subr.mxu0 0.0
        %3200 = vmatpush2.msra.mxu0 0.0
        %3201 = vmatprep.subr.mxu0 0.0
        %3202 = vmatpush2.msra.mxu0 0.0
        %3203 = vmatprep.subr.mxu0 0.0
        %3204 = vmatpush2.msra.mxu0 0.0
        %3205 = vmatprep.subr.mxu0 0.0
        %3206 = vmatpush2.msra.mxu0 0.0
        %3207 = vmatprep.subr.mxu0 0.0
        %3208 = vmatpush2.msra.mxu0 0.0
        %3209 = vmatprep.subr.mxu0 0.0
        %3210 = vmatpush2.msra.mxu0 0.0
        %3211 = vmatprep.mubr.f32.mxu0 0.0
        %3212 = vmatmul.mubr.f32.gmra.mxu0 %v3116
        %v3213 = vpop.f32.mrf.mxu0
        %v3214 = vadd.f32 %v3145, %v3213
        %v3215 = vpop.f32.mrf.mxu0
        %3216 = vmatprep.mubr.f32.mxu0 0.0
        %3217 = vmatmul.mubr.f32.gmra.mxu0 %v3117
        %v3218 = vpop.f32.mrf.mxu0
        %v3219 = vadd.f32 %v3145, %v3218
        %v3220 = vpop.f32.mrf.mxu0
        %3221 = vmatprep.mubr.f32.mxu0 0.0
        %3222 = vmatmul.mubr.f32.gmra.mxu0 %v3118
        %v3223 = vpop.f32.mrf.mxu0
        %v3224 = vadd.f32 %v3145, %v3223
        %v3225 = vpop.f32.mrf.mxu0
        %3226 = vmatprep.mubr.f32.mxu0 0.0
        %3227 = vmatmul.mubr.f32.gmra.mxu0 %v3119
        %v3228 = vpop.f32.mrf.mxu0
        %v3229 = vadd.f32 %v3145, %v3228
        %v3230 = vpop.f32.mrf.mxu0
        %3231 = vmatprep.mubr.f32.mxu0 0.0
        %3232 = vmatmul.mubr.f32.gmra.mxu0 %v3120
        %v3233 = vpop.f32.mrf.mxu0
        %v3234 = vadd.f32 %v3145, %v3233
        %v3235 = vpop.f32.mrf.mxu0
        %3236 = vmatprep.mubr.f32.mxu0 0.0
        %3237 = vmatmul.mubr.f32.gmra.mxu0 %v3121
        %v3238 = vpop.f32.mrf.mxu0
        %v3239 = vadd.f32 %v3145, %v3238
        %v3240 = vpop.f32.mrf.mxu0
        %3241 = vmatprep.mubr.f32.mxu0 0.0
        %3242 = vmatmul.mubr.f32.gmra.mxu0 %v3122
        %v3243 = vpop.f32.mrf.mxu0
        %v3244 = vadd.f32 %v3145, %v3243
        %v3245 = vpop.f32.mrf.mxu0
        %3246 = vmatprep.mubr.f32.mxu0 0.0
        %3247 = vmatmul.mubr.f32.gmra.mxu0 %v3123
        %v3248 = vpop.f32.mrf.mxu0
        %v3249 = vadd.f32 %v3145, %v3248
        %v3250 = vpop.f32.mrf.mxu0
        %3251 = vdwg.mxu0
        %v3252 = vadd.f32 %v3214, %v304
        %v3253 = vadd.f32 %v3219, %v305
        %v3254 = vadd.f32 %v3224, %v306
        %v3255 = vadd.f32 %v3229, %v307
        %v3256 = vadd.f32 %v3234, %v308
        %v3257 = vadd.f32 %v3239, %v309
        %v3258 = vadd.f32 %v3244, %v310
        %v3259 = vadd.f32 %v3249, %v311
        %3260 = vst [vmem:[%s298] sm:$0xff] %v3252
        %3261 = vst [vmem:[%s298 + $0x8] sm:$0xff] %v3253
        %3262 = vst [vmem:[%s298 + $0x10] sm:$0xff] %v3254
        %3263 = vst [vmem:[%s298 + $0x18] sm:$0xff] %v3255
        %3264 = vst [vmem:[%s298 + $0x20] sm:$0xff] %v3256
        %3265 = vst [vmem:[%s298 + $0x28] sm:$0xff] %v3257
        %3266 = vst [vmem:[%s298 + $0x30] sm:$0xff] %v3258
        %3267 = vst [vmem:[%s298 + $0x38] sm:$0xff] %v3259
        %s3268 = sand.u32 %s203, 1
        %s3269 = scalar_lea.sflag [#allocation3], %s3268
        %s3270 = sand.u32 %s203, 1
        %s3271 = smul.addr %s3270, 64
        %s3272 = scalar_lea.vmem [#allocation2], %s3271
        // Predicated region
        $region53: #{grapher_forward.1} parent=51 // pred_check
          %p3273 = pneg %p213
        $region54: #{grapher_forward.1} parent=51 // pred_check_branch
          %3275 = sbr.rel (%p3273) target = $region56
        $region55: #{grapher_forward.1} parent=51 // pred_region
          %s3277 = ssub.s32 1024, 1024
          %3278 = vsyncadd %s3269, %s3277
          %s3279 = smul.addr %s22, 8
          %s3280 = smul.addr %s3279, 128
          %s3281 = scalar_lea.hbm %s8, %s3280
          %s3282 = sshll.u32 %s3272, 4
          %s3283 = int_to_ptr.vmem [resolvable:$true] %s3282
          %3288 = dma.vmem_to_hbm [thread:$0]  %s3283, 1024, %s3281, %s3269, 128, 128, 8
        $region56: #{grapher_forward.1} parent=51 // pred_fallthru
          _
      $region52: #{grapher_forward.1} parent=5 // pred_fallthru
        _
      %p3289 = scmp.le.s32.totalorder 2, %s17
      // Predicated region
      $region57: #{grapher_forward.1} parent=5 // pred_check
        %p3290 = pneg %p3289
      $region58: #{grapher_forward.1} parent=5 // pred_check_branch
        %3292 = sbr.rel (%p3290) target = $region60
      $region59: #{grapher_forward.1} parent=5 // pred_region
        %s3293 = ssub.s32 %s17, 2
        // Predicated region
        $region61: #{grapher_forward.1} parent=59 // pred_check
          %p3294 = pneg %p219
        $region62: #{grapher_forward.1} parent=59 // pred_check_branch
          %3296 = sbr.rel (%p3294) target = $region64
        $region63: #{grapher_forward.1} parent=59 // pred_region
          %s3297 = sand.u32 %s204, 1
          %s3298 = scalar_lea.sflag [#allocation3], %s3297
          %s3299 = sand.u32 %s204, 1
          %s3300 = smul.addr %s3299, 64
          %s3301 = scalar_lea.vmem [#allocation2], %s3300
          %3302 = dma.done %s3298, 1024
        $region64: #{grapher_forward.1} parent=59 // pred_fallthru
          _
      $region60: #{grapher_forward.1} parent=5 // pred_fallthru
        _
    $region6: #{grapher_forward.1} parent=1 // loop_footer
      %s21 = sadd.s32 1, %s17
    $region7: #{grapher_forward.1} parent=1 // loop_footer_branch
      %16 = sbr.rel target = $region3
    $region8: #{grapher_forward.1} parent=1 // loop_exit
      _
    %3303 = vsyncpa [#allocation3], 1
    %s3304 = scalar_lea.sflag [#allocation3], 1
    %3305 = vsyncpa %s3304, 1

</llo_original>
